<compile_context>
chip_gen: v6e
topology: v6e:2x2x1
jax: 0.10.0
libtpu: 0.0.40
codegen_flags: <defaults>
</compile_context>

<pallas_src>
import functools

import jax
import jax.numpy as jnp
from jax import lax
from jax.experimental import pallas as pl
from jax.experimental.pallas import tpu as pltpu

EPS = 1e-5


def _round_up(x, m):
    return (x + m - 1) // m * m


# ----------------------------- weight packing ---------------------------------
def _build_phase4_weights(w_pt):
    """(Cin, Cout, 3, 3) ConvTranspose2d weight -> (4*Cout, 4*Cin) phase matrix.

    Row block p = py*2+px is the output parity, column block t = dy*2+dx the input tap
    (+row/+col offset).  Entry [p*Cout+co, t*Cin+ci] = W[ci, co, ky, kx] with
    ky = py - 2*dy + 1, kx = px - 2*dx + 1 (zero if outside the 3x3 kernel).
    """
    Cin, Cout = w_pt.shape[0], w_pt.shape[1]
    rows = []
    for py in (0, 1):
        for px in (0, 1):
            cols = []
            for dy in (0, 1):
                for dx in (0, 1):
                    ky = py - 2 * dy + 1
                    kx = px - 2 * dx + 1
                    if 0 <= ky <= 2 and 0 <= kx <= 2:
                        cols.append(w_pt[:, :, ky, kx].T)            # (Cout, Cin)
                    else:
                        cols.append(jnp.zeros((Cout, Cin), w_pt.dtype))
            rows.append(jnp.concatenate(cols, axis=1))               # (Cout, 4*Cin)
    return jnp.concatenate(rows, axis=0)                             # (4*Cout, 4*Cin)


# tap selector s -> (input phase parity, +row/col offset) for the 2nd layer
_SEL = ((0, 0), (1, 0), (0, 1))


def _dy_for(q, s):
    """Given output parity q (of the intermediate grid) and tap selector s, return the
    transposed-conv tap index dy in {0,1}, or None if this selector does not contribute."""
    if q == 0:
        return {0: 0, 1: 1}.get(s)
    return {1: 0, 2: 1}.get(s)


def _build_phase16_weights(w_pt):
    """Layer-2 weight consumed directly from layer-1's phase-separated output.

    Shape (16*Cout, 9*Cin).  Output row = phase16*Cout + co with phase16 = ry*4 + rx and
    the final output pixel at (4m+ry, 4k+rx).  Column = (sy*3+sx)*Cin + ci, where (sy, sx)
    select the (input phase, +row/+col offset) tap per _SEL.
    """
    Cin, Cout = w_pt.shape[0], w_pt.shape[1]
    rows = []
    for qy in (0, 1):
        for py in (0, 1):
            for qx in (0, 1):
                for px in (0, 1):
                    cols = []
                    for sy in range(3):
                        for sx in range(3):
                            dy = _dy_for(qy, sy)
                            dx = _dy_for(qx, sx)
                            blk = jnp.zeros((Cout, Cin), w_pt.dtype)
                            if dy is not None and dx is not None:
                                ky = py - 2 * dy + 1
                                kx = px - 2 * dx + 1
                                if 0 <= ky <= 2 and 0 <= kx <= 2:
                                    blk = w_pt[:, :, ky, kx].T       # (Cout, Cin)
                            cols.append(blk)
                    rows.append(jnp.concatenate(cols, axis=1))       # (Cout, 9*Cin)
    return jnp.concatenate(rows, axis=0)                             # (16*Cout, 9*Cin)


# --------------------------------- kernels -------------------------------------
def _conv1_kernel(x_ref, w_ref, mask_ref, z_ref, ps_ref, *, h, wp):
    """Layer-1 4-phase transposed conv for one batch element.

    Emits the phase-separated conv output (bf16) and per-channel masked f32 partial
    sum / sum-of-squares for the two-pass BatchNorm (one store per batch element)."""
    L = h * wp
    x = x_ref[0]                                          # (Cin, (H+2)*Wp)  bf16
    taps = [x[:, dy * wp + dx: dy * wp + dx + L] for dy in (0, 1) for dx in (0, 1)]
    patch = jnp.concatenate(taps, axis=0)                 # (4*Cin, L)       bf16
    acc = jnp.dot(w_ref[...], patch,
                  preferred_element_type=jnp.float32)     # (4*Cout, L)      f32
    z_ref[0] = acc.astype(jnp.bfloat16)                   # bf16 intermediate (halves HBM)
    am = acc * mask_ref[...]                              # mask pad columns for stats only
    s1 = jnp.sum(am, axis=1, keepdims=True)               # (4*Cout, 1)
    s2 = jnp.sum(am * acc, axis=1, keepdims=True)
    ps_ref[0] = jnp.concatenate([s1, s2], axis=1)         # (4*Cout, 2)


def _bn_relu_conv2_kernel(z1_ref, sc_ref, sh_ref, mask_ref, w2_ref,
                          z2_ref, ps_ref, *, c, h, wp):
    """Fused: BatchNorm(train stats)+ReLU on layer-1's conv output, then the layer-2
    transposed conv consuming the phase-separated layout directly (no HBM round-trip of
    the inter-layer activation, no phase->NCHW interleave)."""
    L = h * wp
    z1 = z1_ref[0].astype(jnp.float32)                    # (4*C, L)
    act = jnp.maximum(z1 * sc_ref[...] + sh_ref[...], 0.0)
    act = act * mask_ref[...]                             # padded cols must be zero for +1 taps
    a = act.reshape(4, c, L)
    a = jnp.concatenate(                                  # zero rows for the +1 row tap
        [a, jnp.zeros((4, c, 2 * wp), jnp.float32)], axis=-1)
    taps = []
    for sy in range(3):
        py1, oy = _SEL[sy]
        for sx in range(3):
            px1, ox = _SEL[sx]
            taps.append(a[py1 * 2 + px1][:, oy * wp + ox: oy * wp + ox + L])
    patch = jnp.concatenate(taps, axis=0).astype(jnp.bfloat16)       # (9*C, L)
    acc = jnp.dot(w2_ref[...], patch,
                  preferred_element_type=jnp.float32)                # (16*Cout, L)
    z2_ref[0] = acc.astype(jnp.bfloat16)
    am = acc * mask_ref[...]
    s1 = jnp.sum(am, axis=1, keepdims=True)
    s2 = jnp.sum(am * acc, axis=1, keepdims=True)
    ps_ref[0] = jnp.concatenate([s1, s2], axis=1)                    # (16*Cout, 2)


def _bn_softmax_kernel(z2_ref, sc_ref, sh_ref, y_ref, *, cout, h, wp):
    """Final BatchNorm (train stats) + channel softmax on the 16-phase layout."""
    L = h * wp
    y = z2_ref[0].astype(jnp.float32) * sc_ref[...] + sh_ref[...]    # (16*Cout, L)
    y = y.reshape(16, cout, L)
    m = jnp.max(y, axis=1, keepdims=True)
    e = jnp.exp(y - m)
    y = e / jnp.sum(e, axis=1, keepdims=True)
    y_ref[0] = y.reshape(16 * cout, L)


# ----------------------------- host-side wrapper --------------------------------
def _bn_scale_shift(psums, n_phase, cout, count, gamma, beta):
    """Combine per-batch-element partial sums into BN scale/shift, tiled per conv row."""
    tot = psums[..., 0].reshape(-1, n_phase, cout).sum(axis=(0, 1))
    totsq = psums[..., 1].reshape(-1, n_phase, cout).sum(axis=(0, 1))
    mean = tot / count
    var = jnp.maximum(totsq / count - mean * mean, 0.0)   # biased var (train-mode BN)
    scale = gamma * lax.rsqrt(var + EPS)
    shift = beta - mean * scale
    return (jnp.tile(scale, n_phase).reshape(n_phase * cout, 1),
            jnp.tile(shift, n_phase).reshape(n_phase * cout, 1))


def decoder_forward(params, x_nchw):
    """Decoder('hrnet'): NCHW (N, in_dim, H, W) -> NCHW (N, out_dim, 4H, 4W)."""
    N, Cin, H, W = x_nchw.shape
    Cout = params["w1"].shape[1]
    Wp = _round_up(W + 1, 32)          # padded row width (>= W+1 so +1 col taps never wrap)
    assert Wp > W
    L = H * Wp

    # glue (input only): right/bottom zero pad, flatten spatial, cast to bf16
    xp = jnp.zeros((N, Cin, H + 2, Wp), jnp.bfloat16)
    xp = xp.at[:, :, :H, :W].set(x_nchw.astype(jnp.bfloat16))
    xflat = xp.reshape(N, Cin, (H + 2) * Wp)

    w1p = _build_phase4_weights(params["w1"]).astype(jnp.bfloat16)    # (4*Cout, 4*Cin)
    w2p = _build_phase16_weights(params["w2"]).astype(jnp.bfloat16)   # (16*Cout, 9*Cout)
    col_mask = jnp.tile((jnp.arange(Wp) < W).astype(jnp.float32), H).reshape(1, L)
    # NOTE: conv biases b1/b2 cancel exactly through train-mode BatchNorm and are dropped.

    cparams = pltpu.CompilerParams(
        dimension_semantics=("parallel",),
        vmem_limit_bytes=32 * 1024 * 1024)

    # ---- pass 1: layer-1 phase-decomposed transposed conv + BN partial stats ----
    z1, ps1 = pl.pallas_call(
        functools.partial(_conv1_kernel, h=H, wp=Wp),
        grid=(N,),
        in_specs=[
            pl.BlockSpec((1, Cin, (H + 2) * Wp), lambda n: (n, 0, 0)),
            pl.BlockSpec((4 * Cout, 4 * Cin), lambda n: (0, 0)),
            pl.BlockSpec((1, L), lambda n: (0, 0)),
        ],
        out_specs=[
            pl.BlockSpec((1, 4 * Cout, L), lambda n: (n, 0, 0)),
            pl.BlockSpec((1, 4 * Cout, 2), lambda n: (n, 0, 0)),
        ],
        out_shape=[
            jax.ShapeDtypeStruct((N, 4 * Cout, L), jnp.bfloat16),
            jax.ShapeDtypeStruct((N, 4 * Cout, 2), jnp.float32),
        ],
        compiler_params=cparams,
    )(xflat, w1p, col_mask)

    sc1, sh1 = _bn_scale_shift(ps1, 4, Cout, jnp.float32(N * (2 * H) * (2 * W)),
                               params["g1"], params["be1"])

    # ---- pass 2: BN1 + ReLU fused with the layer-2 conv (consumes phase layout) ----
    z2, ps2 = pl.pallas_call(
        functools.partial(_bn_relu_conv2_kernel, c=Cout, h=H, wp=Wp),
        grid=(N,),
        in_specs=[
            pl.BlockSpec((1, 4 * Cout, L), lambda n: (n, 0, 0)),
            pl.BlockSpec((4 * Cout, 1), lambda n: (0, 0)),
            pl.BlockSpec((4 * Cout, 1), lambda n: (0, 0)),
            pl.BlockSpec((1, L), lambda n: (0, 0)),
            pl.BlockSpec((16 * Cout, 9 * Cout), lambda n: (0, 0)),
        ],
        out_specs=[
            pl.BlockSpec((1, 16 * Cout, L), lambda n: (n, 0, 0)),
            pl.BlockSpec((1, 16 * Cout, 2), lambda n: (n, 0, 0)),
        ],
        out_shape=[
            jax.ShapeDtypeStruct((N, 16 * Cout, L), jnp.bfloat16),
            jax.ShapeDtypeStruct((N, 16 * Cout, 2), jnp.float32),
        ],
        compiler_params=cparams,
    )(z1, sc1, sh1, col_mask, w2p)

    sc2, sh2 = _bn_scale_shift(ps2, 16, Cout, jnp.float32(N * (4 * H) * (4 * W)),
                               params["g2"], params["be2"])

    # ---- pass 3: BN2 + softmax over channels ----
    y = pl.pallas_call(
        functools.partial(_bn_softmax_kernel, cout=Cout, h=H, wp=Wp),
        grid=(N,),
        in_specs=[
            pl.BlockSpec((1, 16 * Cout, L), lambda n: (n, 0, 0)),
            pl.BlockSpec((16 * Cout, 1), lambda n: (0, 0)),
            pl.BlockSpec((16 * Cout, 1), lambda n: (0, 0)),
        ],
        out_specs=pl.BlockSpec((1, 16 * Cout, L), lambda n: (n, 0, 0)),
        out_shape=jax.ShapeDtypeStruct((N, 16 * Cout, L), jnp.float32),
        compiler_params=cparams,
    )(z2, sc2, sh2)

    # glue (final output only): drop width padding, interleave the 16 phases to NCHW
    # y row = (ry*4+rx)*Cout + co  ->  out[n, co, 4m+ry, 4k+rx]
    y = y.reshape(N, 4, 4, Cout, H, Wp)[..., :W]          # (n, ry, rx, co, m, k)
    out = y.transpose(0, 3, 4, 1, 5, 2).reshape(N, Cout, 4 * H, 4 * W)
    return out


def init_decoder_params(key, in_dim, out_dim):
    ks = jax.random.split(key, 8)
    p = {}
    p["w1"] = jax.random.normal(ks[0], (in_dim, out_dim, 3, 3), jnp.float32) / jnp.sqrt(9.0 * in_dim)
    p["b1"] = 0.1 * jax.random.normal(ks[1], (out_dim,), jnp.float32)
    p["g1"] = 1.0 + 0.1 * jax.random.normal(ks[2], (out_dim,), jnp.float32)
    p["be1"] = 0.1 * jax.random.normal(ks[3], (out_dim,), jnp.float32)
    p["w2"] = jax.random.normal(ks[4], (out_dim, out_dim, 3, 3), jnp.float32) / jnp.sqrt(9.0 * out_dim)
    p["b2"] = 0.1 * jax.random.normal(ks[5], (out_dim,), jnp.float32)
    p["g2"] = 1.0 + 0.1 * jax.random.normal(ks[6], (out_dim,), jnp.float32)
    p["be2"] = 0.1 * jax.random.normal(ks[7], (out_dim,), jnp.float32)
    return p


# ---------------- pure-JAX references (for correctness checks) ----------------
def _ref_convt(x_nhwc, w_pt):
    w_hwio = jnp.transpose(w_pt, (2, 3, 0, 1))[::-1, ::-1, :, :]
    return lax.conv_general_dilated(
        x_nhwc, w_hwio, window_strides=(1, 1), padding=((1, 2), (1, 2)),
        lhs_dilation=(2, 2), dimension_numbers=("NHWC", "HWIO", "NHWC"),
        precision=lax.Precision.HIGHEST, preferred_element_type=jnp.float32)


def _ref_layer_matched(x, w, g, be, activation):
    """Mirrors the kernel numerics: bf16 matmul inputs, f32 stats, bf16-stored conv output."""
    z = _ref_convt(x.astype(jnp.bfloat16), w.astype(jnp.bfloat16))       # f32 (bias dropped)
    mean = jnp.mean(z, axis=(0, 1, 2))
    var = jnp.mean((z - mean) ** 2, axis=(0, 1, 2))
    scale = g * lax.rsqrt(var + EPS)
    shift = be - mean * scale
    zb = z.astype(jnp.bfloat16).astype(jnp.float32)                      # bf16 z round-trip
    y = zb * scale + shift
    if activation == "relu":
        return jnp.maximum(y, 0.0)
    return jax.nn.softmax(y, axis=-1)


def _ref_layer_f32(x, w, b, g, be, activation):
    y = _ref_convt(x, w) + b
    mean = jnp.mean(y, axis=(0, 1, 2))
    var = jnp.mean((y - mean) ** 2, axis=(0, 1, 2))
    y = (y - mean) * lax.rsqrt(var + EPS) * g + be
    if activation == "relu":
        return jnp.maximum(y, 0.0)
    return jax.nn.softmax(y, axis=-1)


def ref_forward_matched(params, x_nchw):
    x = jnp.transpose(x_nchw, (0, 2, 3, 1))
    h = _ref_layer_matched(x, params["w1"], params["g1"], params["be1"], "relu")
    o = _ref_layer_matched(h, params["w2"], params["g2"], params["be2"], "softmax")
    return jnp.transpose(o, (0, 3, 1, 2))


def ref_forward_f32(params, x_nchw):
    x = jnp.transpose(x_nchw, (0, 2, 3, 1))
    h = _ref_layer_f32(x, params["w1"], params["b1"], params["g1"], params["be1"], "relu")
    o = _ref_layer_f32(h, params["w2"], params["b2"], params["g2"], params["be2"], "softmax")
    return jnp.transpose(o, (0, 3, 1, 2))


if __name__ == "__main__":
    N, in_dim, out_dim, H, W = 2, 32, 8, 16, 16
    key = jax.random.PRNGKey(0)
    k_param, k_x = jax.random.split(key)
    params = init_decoder_params(k_param, in_dim, out_dim)
    x = jax.random.normal(k_x, (N, in_dim, H, W), jnp.float32)    # NCHW, like PyTorch

    fwd = jax.jit(decoder_forward)
    out = jax.block_until_ready(fwd(params, x))
    assert out.shape == (N, out_dim, 4 * H, 4 * W), out.shape

    # check vs a reference that mirrors the kernel's numerics (bf16 matmul inputs,
    # f32 stats, bf16-stored conv outputs); residual differences are accumulation
    # order + isolated bf16 rounding-boundary flips.
    ref_m = jax.block_until_ready(ref_forward_matched(params, x))
    err_max = float(jnp.max(jnp.abs(out - ref_m)))
    err_mean = float(jnp.mean(jnp.abs(out - ref_m)))
    assert err_max < 3e-2, f"max mismatch vs matched reference: {err_max}"
    assert err_mean < 1e-3, f"mean mismatch vs matched reference: {err_mean}"

    # loose sanity bound vs the full-f32 PyTorch-faithful reference (bf16 trade-off)
    ref_f = jax.block_until_ready(ref_forward_f32(params, x))
    err_f = float(jnp.max(jnp.abs(out - ref_f)))
    assert err_f < 1e-1, f"mismatch vs f32 reference: {err_f}"

    # channel softmax sanity: probabilities sum to 1
    s = float(jnp.max(jnp.abs(jnp.sum(out, axis=1) - 1.0)))
    assert s < 1e-4, f"softmax not normalized: {s}"

    print("KERNEL_OK")
</pallas_src>

<mosaic_0001>
module attributes {stable_mosaic.version = 11 : i64} {
  func.func @_conv1_kernel(%arg0: i32, %arg1: memref<1x32x576xbf16, #tpu.memory_space<vmem>>, %arg2: memref<32x128xbf16, #tpu.memory_space<vmem>>, %arg3: memref<1x512xf32, #tpu.memory_space<vmem>>, %arg4: memref<1x32x512xbf16, #tpu.memory_space<vmem>>, %arg5: memref<1x32x2xf32, #tpu.memory_space<vmem>>) attributes {dimension_semantics = [#tpu.dimension_semantics<parallel>], iteration_bounds = array<i64: 2>, scalar_prefetch = 0 : i64, scratch_operands = 0 : i64, tpu.core_type = #tpu.core_type<tc>, window_params = [{transform_indices = @transform_0, window_bounds = array<i64: 1, 32, 576>}, {pipeline_mode = #tpu.pipeline_mode<synchronous>, transform_indices = @transform_1, window_bounds = array<i64: 32, 128>}, {pipeline_mode = #tpu.pipeline_mode<synchronous>, transform_indices = @transform_2, window_bounds = array<i64: 1, 512>}, {transform_indices = @transform_3, window_bounds = array<i64: 1, 32, 512>}, {transform_indices = @transform_4, window_bounds = array<i64: 1, 32, 2>}]} {
    %c0 = arith.constant 0 : index
    %c0_0 = arith.constant 0 : index
    %c0_1 = arith.constant 0 : index
    %0 = vector.load %arg1[%c0, %c0_0, %c0_1] : memref<1x32x576xbf16, #tpu.memory_space<vmem>>, vector<1x32x576xbf16>
    %1 = vector.shape_cast %0 : vector<1x32x576xbf16> to vector<32x576xbf16>
    %2 = vector.extract_strided_slice %1 {offsets = [0, 0], sizes = [32, 512], strides = [1, 1]} : vector<32x576xbf16> to vector<32x512xbf16>
    %3 = vector.extract_strided_slice %1 {offsets = [0, 1], sizes = [32, 512], strides = [1, 1]} : vector<32x576xbf16> to vector<32x512xbf16>
    %4 = vector.extract_strided_slice %1 {offsets = [0, 32], sizes = [32, 512], strides = [1, 1]} : vector<32x576xbf16> to vector<32x512xbf16>
    %5 = vector.extract_strided_slice %1 {offsets = [0, 33], sizes = [32, 512], strides = [1, 1]} : vector<32x576xbf16> to vector<32x512xbf16>
    %6 = tpu.concatenate %2, %3, %4, %5 in 0 : vector<32x512xbf16>, vector<32x512xbf16>, vector<32x512xbf16>, vector<32x512xbf16> -> vector<128x512xbf16>
    %c0_2 = arith.constant 0 : index
    %c0_3 = arith.constant 0 : index
    %7 = vector.load %arg2[%c0_2, %c0_3] : memref<32x128xbf16, #tpu.memory_space<vmem>>, vector<32x128xbf16>
    %cst = arith.constant dense<0.000000e+00> : vector<32x512xf32>
    %8 = tpu.matmul %7, %6, %cst {dimension_numbers = #tpu.dot_dimension_numbers<[1], [0], [0], [1], [0, 0, 1, 1], [], []>} : vector<32x128xbf16>, vector<128x512xbf16>, vector<32x512xf32> -> vector<32x512xf32>
    %9 = arith.truncf %8 : vector<32x512xf32> to vector<32x512xbf16>
    %c0_4 = arith.constant 0 : index
    %c0_5 = arith.constant 0 : index
    %c0_6 = arith.constant 0 : index
    %10 = vector.load %arg4[%c0_4, %c0_5, %c0_6] : memref<1x32x512xbf16, #tpu.memory_space<vmem>>, vector<1x32x512xbf16>
    %11 = vector.shape_cast %10 : vector<1x32x512xbf16> to vector<32x512xbf16>
    %12 = vector.shape_cast %9 : vector<32x512xbf16> to vector<1x32x512xbf16>
    tpu.vector_store %arg4[%c0_4, %c0_5, %c0_6], %12 {strides = array<i32>} : memref<1x32x512xbf16, #tpu.memory_space<vmem>>, vector<1x32x512xbf16>,
    %c0_7 = arith.constant 0 : index
    %c0_8 = arith.constant 0 : index
    %13 = vector.load %arg3[%c0_7, %c0_8] : memref<1x512xf32, #tpu.memory_space<vmem>>, vector<1x512xf32>
    %14 = vector.broadcast %13 : vector<1x512xf32> to vector<32x512xf32>
    %15 = arith.mulf %8, %14 : vector<32x512xf32>
    %cst_9 = arith.constant dense<0.000000e+00> : vector<32xf32>
    %16 = vector.multi_reduction <add>, %15, %cst_9 [1] : vector<32x512xf32> to vector<32xf32>
    %17 = vector.shape_cast %16 : vector<32xf32> to vector<32x1xf32>
    %18 = arith.mulf %15, %8 : vector<32x512xf32>
    %cst_10 = arith.constant dense<0.000000e+00> : vector<32xf32>
    %19 = vector.multi_reduction <add>, %18, %cst_10 [1] : vector<32x512xf32> to vector<32xf32>
    %20 = vector.shape_cast %19 : vector<32xf32> to vector<32x1xf32>
    %21 = tpu.concatenate %17, %20 in 1 : vector<32x1xf32>, vector<32x1xf32> -> vector<32x2xf32>
    %c0_11 = arith.constant 0 : index
    %c0_12 = arith.constant 0 : index
    %c0_13 = arith.constant 0 : index
    %22 = vector.load %arg5[%c0_11, %c0_12, %c0_13] : memref<1x32x2xf32, #tpu.memory_space<vmem>>, vector<1x32x2xf32>
    %23 = vector.shape_cast %22 : vector<1x32x2xf32> to vector<32x2xf32>
    %24 = vector.shape_cast %21 : vector<32x2xf32> to vector<1x32x2xf32>
    tpu.vector_store %arg5[%c0_11, %c0_12, %c0_13], %24 {strides = array<i32>} : memref<1x32x2xf32, #tpu.memory_space<vmem>>, vector<1x32x2xf32>,
    return
  }
  func.func @transform_0(%arg0: i32) -> (i32, i32, i32) {
    %c0_i32 = arith.constant 0 : i32
    %c0_i32_0 = arith.constant 0 : i32
    %c0_i32_1 = arith.constant 0 : i32
    return %arg0, %c0_i32, %c0_i32_0 : i32, i32, i32
  }
  func.func @transform_1(%arg0: i32) -> (i32, i32) {
    %c0_i32 = arith.constant 0 : i32
    %c0_i32_0 = arith.constant 0 : i32
    %c0_i32_1 = arith.constant 0 : i32
    return %c0_i32, %c0_i32_0 : i32, i32
  }
  func.func @transform_2(%arg0: i32) -> (i32, i32) {
    %c0_i32 = arith.constant 0 : i32
    %c0_i32_0 = arith.constant 0 : i32
    %c0_i32_1 = arith.constant 0 : i32
    return %c0_i32, %c0_i32_0 : i32, i32
  }
  func.func @transform_3(%arg0: i32) -> (i32, i32, i32) {
    %c0_i32 = arith.constant 0 : i32
    %c0_i32_0 = arith.constant 0 : i32
    %c0_i32_1 = arith.constant 0 : i32
    return %arg0, %c0_i32, %c0_i32_0 : i32, i32, i32
  }
  func.func @transform_4(%arg0: i32) -> (i32, i32, i32) {
    %c0_i32 = arith.constant 0 : i32
    %c0_i32_0 = arith.constant 0 : i32
    %c0_i32_1 = arith.constant 0 : i32
    return %arg0, %c0_i32, %c0_i32_0 : i32, i32, i32
  }
}

module attributes {stable_mosaic.version = 11 : i64} {
  func.func @_bn_relu_conv2_kernel(%arg0: i32, %arg1: memref<1x32x512xbf16, #tpu.memory_space<vmem>>, %arg2: memref<32x1xf32, #tpu.memory_space<vmem>>, %arg3: memref<32x1xf32, #tpu.memory_space<vmem>>, %arg4: memref<1x512xf32, #tpu.memory_space<vmem>>, %arg5: memref<128x72xbf16, #tpu.memory_space<vmem>>, %arg6: memref<1x128x512xbf16, #tpu.memory_space<vmem>>, %arg7: memref<1x128x2xf32, #tpu.memory_space<vmem>>) attributes {dimension_semantics = [#tpu.dimension_semantics<parallel>], iteration_bounds = array<i64: 2>, scalar_prefetch = 0 : i64, scratch_operands = 0 : i64, tpu.core_type = #tpu.core_type<tc>, window_params = [{transform_indices = @transform_0, window_bounds = array<i64: 1, 32, 512>}, {pipeline_mode = #tpu.pipeline_mode<synchronous>, transform_indices = @transform_1, window_bounds = array<i64: 32, 1>}, {pipeline_mode = #tpu.pipeline_mode<synchronous>, transform_indices = @transform_2, window_bounds = array<i64: 32, 1>}, {pipeline_mode = #tpu.pipeline_mode<synchronous>, transform_indices = @transform_3, window_bounds = array<i64: 1, 512>}, {pipeline_mode = #tpu.pipeline_mode<synchronous>, transform_indices = @transform_4, window_bounds = array<i64: 128, 72>}, {transform_indices = @transform_5, window_bounds = array<i64: 1, 128, 512>}, {transform_indices = @transform_6, window_bounds = array<i64: 1, 128, 2>}]} {
    %c0 = arith.constant 0 : index
    %c0_0 = arith.constant 0 : index
    %c0_1 = arith.constant 0 : index
    %0 = vector.load %arg1[%c0, %c0_0, %c0_1] : memref<1x32x512xbf16, #tpu.memory_space<vmem>>, vector<1x32x512xbf16>
    %1 = vector.shape_cast %0 : vector<1x32x512xbf16> to vector<32x512xbf16>
    %2 = arith.extf %1 : vector<32x512xbf16> to vector<32x512xf32>
    %c0_2 = arith.constant 0 : index
    %c0_3 = arith.constant 0 : index
    %3 = vector.load %arg2[%c0_2, %c0_3] : memref<32x1xf32, #tpu.memory_space<vmem>>, vector<32x1xf32>
    %4 = vector.broadcast %3 : vector<32x1xf32> to vector<32x512xf32>
    %5 = arith.mulf %2, %4 : vector<32x512xf32>
    %c0_4 = arith.constant 0 : index
    %c0_5 = arith.constant 0 : index
    %6 = vector.load %arg3[%c0_4, %c0_5] : memref<32x1xf32, #tpu.memory_space<vmem>>, vector<32x1xf32>
    %7 = vector.broadcast %6 : vector<32x1xf32> to vector<32x512xf32>
    %8 = arith.addf %5, %7 : vector<32x512xf32>
    %cst = arith.constant 0.000000e+00 : f32
    %9 = vector.broadcast %cst : f32 to vector<32x512xf32>
    %10 = arith.maximumf %8, %9 : vector<32x512xf32>
    %c0_6 = arith.constant 0 : index
    %c0_7 = arith.constant 0 : index
    %11 = vector.load %arg4[%c0_6, %c0_7] : memref<1x512xf32, #tpu.memory_space<vmem>>, vector<1x512xf32>
    %12 = vector.broadcast %11 : vector<1x512xf32> to vector<32x512xf32>
    %13 = arith.mulf %10, %12 : vector<32x512xf32>
    %14 = vector.shape_cast %13 : vector<32x512xf32> to vector<4x8x512xf32>
    %cst_8 = arith.constant 0.000000e+00 : f32
    %15 = vector.broadcast %cst_8 : f32 to vector<4x8x64xf32>
    %16 = tpu.concatenate %14, %15 in 2 : vector<4x8x512xf32>, vector<4x8x64xf32> -> vector<4x8x576xf32>
    %17 = vector.extract_strided_slice %16 {offsets = [0, 0, 0], sizes = [1, 8, 576], strides = [1, 1, 1]} : vector<4x8x576xf32> to vector<1x8x576xf32>
    %18 = vector.shape_cast %17 : vector<1x8x576xf32> to vector<8x576xf32>
    %19 = vector.extract_strided_slice %18 {offsets = [0, 0], sizes = [8, 512], strides = [1, 1]} : vector<8x576xf32> to vector<8x512xf32>
    %20 = vector.extract_strided_slice %16 {offsets = [1, 0, 0], sizes = [1, 8, 576], strides = [1, 1, 1]} : vector<4x8x576xf32> to vector<1x8x576xf32>
    %21 = vector.shape_cast %20 : vector<1x8x576xf32> to vector<8x576xf32>
    %22 = vector.extract_strided_slice %21 {offsets = [0, 0], sizes = [8, 512], strides = [1, 1]} : vector<8x576xf32> to vector<8x512xf32>
    %23 = vector.extract_strided_slice %16 {offsets = [0, 0, 0], sizes = [1, 8, 576], strides = [1, 1, 1]} : vector<4x8x576xf32> to vector<1x8x576xf32>
    %24 = vector.shape_cast %23 : vector<1x8x576xf32> to vector<8x576xf32>
    %25 = vector.extract_strided_slice %24 {offsets = [0, 1], sizes = [8, 512], strides = [1, 1]} : vector<8x576xf32> to vector<8x512xf32>
    %26 = vector.extract_strided_slice %16 {offsets = [2, 0, 0], sizes = [1, 8, 576], strides = [1, 1, 1]} : vector<4x8x576xf32> to vector<1x8x576xf32>
    %27 = vector.shape_cast %26 : vector<1x8x576xf32> to vector<8x576xf32>
    %28 = vector.extract_strided_slice %27 {offsets = [0, 0], sizes = [8, 512], strides = [1, 1]} : vector<8x576xf32> to vector<8x512xf32>
    %29 = vector.extract_strided_slice %16 {offsets = [3, 0, 0], sizes = [1, 8, 576], strides = [1, 1, 1]} : vector<4x8x576xf32> to vector<1x8x576xf32>
    %30 = vector.shape_cast %29 : vector<1x8x576xf32> to vector<8x576xf32>
    %31 = vector.extract_strided_slice %30 {offsets = [0, 0], sizes = [8, 512], strides = [1, 1]} : vector<8x576xf32> to vector<8x512xf32>
    %32 = vector.extract_strided_slice %16 {offsets = [2, 0, 0], sizes = [1, 8, 576], strides = [1, 1, 1]} : vector<4x8x576xf32> to vector<1x8x576xf32>
    %33 = vector.shape_cast %32 : vector<1x8x576xf32> to vector<8x576xf32>
    %34 = vector.extract_strided_slice %33 {offsets = [0, 1], sizes = [8, 512], strides = [1, 1]} : vector<8x576xf32> to vector<8x512xf32>
    %35 = vector.extract_strided_slice %16 {offsets = [0, 0, 0], sizes = [1, 8, 576], strides = [1, 1, 1]} : vector<4x8x576xf32> to vector<1x8x576xf32>
    %36 = vector.shape_cast %35 : vector<1x8x576xf32> to vector<8x576xf32>
    %37 = vector.extract_strided_slice %36 {offsets = [0, 32], sizes = [8, 512], strides = [1, 1]} : vector<8x576xf32> to vector<8x512xf32>
    %38 = vector.extract_strided_slice %16 {offsets = [1, 0, 0], sizes = [1, 8, 576], strides = [1, 1, 1]} : vector<4x8x576xf32> to vector<1x8x576xf32>
    %39 = vector.shape_cast %38 : vector<1x8x576xf32> to vector<8x576xf32>
    %40 = vector.extract_strided_slice %39 {offsets = [0, 32], sizes = [8, 512], strides = [1, 1]} : vector<8x576xf32> to vector<8x512xf32>
    %41 = vector.extract_strided_slice %16 {offsets = [0, 0, 0], sizes = [1, 8, 576], strides = [1, 1, 1]} : vector<4x8x576xf32> to vector<1x8x576xf32>
    %42 = vector.shape_cast %41 : vector<1x8x576xf32> to vector<8x576xf32>
    %43 = vector.extract_strided_slice %42 {offsets = [0, 33], sizes = [8, 512], strides = [1, 1]} : vector<8x576xf32> to vector<8x512xf32>
    %44 = tpu.concatenate %19, %22, %25, %28, %31, %34, %37, %40, %43 in 0 : vector<8x512xf32>, vector<8x512xf32>, vector<8x512xf32>, vector<8x512xf32>, vector<8x512xf32>, vector<8x512xf32>, vector<8x512xf32>, vector<8x512xf32>, vector<8x512xf32> -> vector<72x512xf32>
    %45 = arith.truncf %44 : vector<72x512xf32> to vector<72x512xbf16>
    %c0_9 = arith.constant 0 : index
    %c0_10 = arith.constant 0 : index
    %46 = vector.load %arg5[%c0_9, %c0_10] : memref<128x72xbf16, #tpu.memory_space<vmem>>, vector<128x72xbf16>
    %cst_11 = arith.constant dense<0.000000e+00> : vector<128x512xf32>
    %47 = tpu.matmul %46, %45, %cst_11 {dimension_numbers = #tpu.dot_dimension_numbers<[1], [0], [0], [1], [0, 0, 1, 1], [], []>} : vector<128x72xbf16>, vector<72x512xbf16>, vector<128x512xf32> -> vector<128x512xf32>
    %48 = arith.truncf %47 : vector<128x512xf32> to vector<128x512xbf16>
    %c0_12 = arith.constant 0 : index
    %c0_13 = arith.constant 0 : index
    %c0_14 = arith.constant 0 : index
    %49 = vector.load %arg6[%c0_12, %c0_13, %c0_14] : memref<1x128x512xbf16, #tpu.memory_space<vmem>>, vector<1x128x512xbf16>
    %50 = vector.shape_cast %49 : vector<1x128x512xbf16> to vector<128x512xbf16>
    %51 = vector.shape_cast %48 : vector<128x512xbf16> to vector<1x128x512xbf16>
    tpu.vector_store %arg6[%c0_12, %c0_13, %c0_14], %51 {strides = array<i32>} : memref<1x128x512xbf16, #tpu.memory_space<vmem>>, vector<1x128x512xbf16>,
    %c0_15 = arith.constant 0 : index
    %c0_16 = arith.constant 0 : index
    %52 = vector.load %arg4[%c0_15, %c0_16] : memref<1x512xf32, #tpu.memory_space<vmem>>, vector<1x512xf32>
    %53 = vector.broadcast %52 : vector<1x512xf32> to vector<128x512xf32>
    %54 = arith.mulf %47, %53 : vector<128x512xf32>
    %cst_17 = arith.constant dense<0.000000e+00> : vector<128xf32>
    %55 = vector.multi_reduction <add>, %54, %cst_17 [1] : vector<128x512xf32> to vector<128xf32>
    %56 = vector.shape_cast %55 : vector<128xf32> to vector<128x1xf32>
    %57 = arith.mulf %54, %47 : vector<128x512xf32>
    %cst_18 = arith.constant dense<0.000000e+00> : vector<128xf32>
    %58 = vector.multi_reduction <add>, %57, %cst_18 [1] : vector<128x512xf32> to vector<128xf32>
    %59 = vector.shape_cast %58 : vector<128xf32> to vector<128x1xf32>
    %60 = tpu.concatenate %56, %59 in 1 : vector<128x1xf32>, vector<128x1xf32> -> vector<128x2xf32>
    %c0_19 = arith.constant 0 : index
    %c0_20 = arith.constant 0 : index
    %c0_21 = arith.constant 0 : index
    %61 = vector.load %arg7[%c0_19, %c0_20, %c0_21] : memref<1x128x2xf32, #tpu.memory_space<vmem>>, vector<1x128x2xf32>
    %62 = vector.shape_cast %61 : vector<1x128x2xf32> to vector<128x2xf32>
    %63 = vector.shape_cast %60 : vector<128x2xf32> to vector<1x128x2xf32>
    tpu.vector_store %arg7[%c0_19, %c0_20, %c0_21], %63 {strides = array<i32>} : memref<1x128x2xf32, #tpu.memory_space<vmem>>, vector<1x128x2xf32>,
    return
  }
  func.func @transform_0(%arg0: i32) -> (i32, i32, i32) {
    %c0_i32 = arith.constant 0 : i32
    %c0_i32_0 = arith.constant 0 : i32
    %c0_i32_1 = arith.constant 0 : i32
    return %arg0, %c0_i32, %c0_i32_0 : i32, i32, i32
  }
  func.func @transform_1(%arg0: i32) -> (i32, i32) {
    %c0_i32 = arith.constant 0 : i32
    %c0_i32_0 = arith.constant 0 : i32
    %c0_i32_1 = arith.constant 0 : i32
    return %c0_i32, %c0_i32_0 : i32, i32
  }
  func.func @transform_2(%arg0: i32) -> (i32, i32) {
    %c0_i32 = arith.constant 0 : i32
    %c0_i32_0 = arith.constant 0 : i32
    %c0_i32_1 = arith.constant 0 : i32
    return %c0_i32, %c0_i32_0 : i32, i32
  }
  func.func @transform_3(%arg0: i32) -> (i32, i32) {
    %c0_i32 = arith.constant 0 : i32
    %c0_i32_0 = arith.constant 0 : i32
    %c0_i32_1 = arith.constant 0 : i32
    return %c0_i32, %c0_i32_0 : i32, i32
  }
  func.func @transform_4(%arg0: i32) -> (i32, i32) {
    %c0_i32 = arith.constant 0 : i32
    %c0_i32_0 = arith.constant 0 : i32
    %c0_i32_1 = arith.constant 0 : i32
    return %c0_i32, %c0_i32_0 : i32, i32
  }
  func.func @transform_5(%arg0: i32) -> (i32, i32, i32) {
    %c0_i32 = arith.constant 0 : i32
    %c0_i32_0 = arith.constant 0 : i32
    %c0_i32_1 = arith.constant 0 : i32
    return %arg0, %c0_i32, %c0_i32_0 : i32, i32, i32
  }
  func.func @transform_6(%arg0: i32) -> (i32, i32, i32) {
    %c0_i32 = arith.constant 0 : i32
    %c0_i32_0 = arith.constant 0 : i32
    %c0_i32_1 = arith.constant 0 : i32
    return %arg0, %c0_i32, %c0_i32_0 : i32, i32, i32
  }
}

module attributes {stable_mosaic.version = 11 : i64} {
  func.func @_bn_softmax_kernel(%arg0: i32, %arg1: memref<1x128x512xbf16, #tpu.memory_space<vmem>>, %arg2: memref<128x1xf32, #tpu.memory_space<vmem>>, %arg3: memref<128x1xf32, #tpu.memory_space<vmem>>, %arg4: memref<1x128x512xf32, #tpu.memory_space<vmem>>) attributes {dimension_semantics = [#tpu.dimension_semantics<parallel>], iteration_bounds = array<i64: 2>, scalar_prefetch = 0 : i64, scratch_operands = 0 : i64, tpu.core_type = #tpu.core_type<tc>, window_params = [{transform_indices = @transform_0, window_bounds = array<i64: 1, 128, 512>}, {pipeline_mode = #tpu.pipeline_mode<synchronous>, transform_indices = @transform_1, window_bounds = array<i64: 128, 1>}, {pipeline_mode = #tpu.pipeline_mode<synchronous>, transform_indices = @transform_2, window_bounds = array<i64: 128, 1>}, {transform_indices = @transform_3, window_bounds = array<i64: 1, 128, 512>}]} {
    %c0 = arith.constant 0 : index
    %c0_0 = arith.constant 0 : index
    %c0_1 = arith.constant 0 : index
    %0 = vector.load %arg1[%c0, %c0_0, %c0_1] : memref<1x128x512xbf16, #tpu.memory_space<vmem>>, vector<1x128x512xbf16>
    %1 = vector.shape_cast %0 : vector<1x128x512xbf16> to vector<128x512xbf16>
    %2 = arith.extf %1 : vector<128x512xbf16> to vector<128x512xf32>
    %c0_2 = arith.constant 0 : index
    %c0_3 = arith.constant 0 : index
    %3 = vector.load %arg2[%c0_2, %c0_3] : memref<128x1xf32, #tpu.memory_space<vmem>>, vector<128x1xf32>
    %4 = vector.broadcast %3 : vector<128x1xf32> to vector<128x512xf32>
    %5 = arith.mulf %2, %4 : vector<128x512xf32>
    %c0_4 = arith.constant 0 : index
    %c0_5 = arith.constant 0 : index
    %6 = vector.load %arg3[%c0_4, %c0_5] : memref<128x1xf32, #tpu.memory_space<vmem>>, vector<128x1xf32>
    %7 = vector.broadcast %6 : vector<128x1xf32> to vector<128x512xf32>
    %8 = arith.addf %5, %7 : vector<128x512xf32>
    %9 = vector.shape_cast %8 : vector<128x512xf32> to vector<16x8x512xf32>
    %cst = arith.constant dense<0xFF800000> : vector<16x512xf32>
    %10 = vector.multi_reduction <maximumf>, %9, %cst [1] : vector<16x8x512xf32> to vector<16x512xf32>
    %11 = vector.shape_cast %10 : vector<16x512xf32> to vector<16x1x512xf32>
    %12 = vector.broadcast %11 : vector<16x1x512xf32> to vector<16x8x512xf32>
    %13 = arith.subf %9, %12 : vector<16x8x512xf32>
    %14 = math.exp %13 : vector<16x8x512xf32>
    %cst_6 = arith.constant dense<0.000000e+00> : vector<16x512xf32>
    %15 = vector.multi_reduction <add>, %14, %cst_6 [1] : vector<16x8x512xf32> to vector<16x512xf32>
    %16 = vector.shape_cast %15 : vector<16x512xf32> to vector<16x1x512xf32>
    %17 = vector.broadcast %16 : vector<16x1x512xf32> to vector<16x8x512xf32>
    %18 = arith.divf %14, %17 : vector<16x8x512xf32>
    %19 = vector.shape_cast %18 : vector<16x8x512xf32> to vector<128x512xf32>
    %c0_7 = arith.constant 0 : index
    %c0_8 = arith.constant 0 : index
    %c0_9 = arith.constant 0 : index
    %20 = vector.load %arg4[%c0_7, %c0_8, %c0_9] : memref<1x128x512xf32, #tpu.memory_space<vmem>>, vector<1x128x512xf32>
    %21 = vector.shape_cast %20 : vector<1x128x512xf32> to vector<128x512xf32>
    %22 = vector.shape_cast %19 : vector<128x512xf32> to vector<1x128x512xf32>
    tpu.vector_store %arg4[%c0_7, %c0_8, %c0_9], %22 {strides = array<i32>} : memref<1x128x512xf32, #tpu.memory_space<vmem>>, vector<1x128x512xf32>,
    return
  }
  func.func @transform_0(%arg0: i32) -> (i32, i32, i32) {
    %c0_i32 = arith.constant 0 : i32
    %c0_i32_0 = arith.constant 0 : i32
    %c0_i32_1 = arith.constant 0 : i32
    return %arg0, %c0_i32, %c0_i32_0 : i32, i32, i32
  }
  func.func @transform_1(%arg0: i32) -> (i32, i32) {
    %c0_i32 = arith.constant 0 : i32
    %c0_i32_0 = arith.constant 0 : i32
    %c0_i32_1 = arith.constant 0 : i32
    return %c0_i32, %c0_i32_0 : i32, i32
  }
  func.func @transform_2(%arg0: i32) -> (i32, i32) {
    %c0_i32 = arith.constant 0 : i32
    %c0_i32_0 = arith.constant 0 : i32
    %c0_i32_1 = arith.constant 0 : i32
    return %c0_i32, %c0_i32_0 : i32, i32
  }
  func.func @transform_3(%arg0: i32) -> (i32, i32, i32) {
    %c0_i32 = arith.constant 0 : i32
    %c0_i32_0 = arith.constant 0 : i32
    %c0_i32_1 = arith.constant 0 : i32
    return %arg0, %c0_i32, %c0_i32_0 : i32, i32, i32
  }
}

</mosaic_0001>

<llo_original>
// kernel: tile.28
$region0: #{tile.28}
  #allocation0 [shape = 's32[1]{0}', space=sflag, size = 0x4, scoped, tag = 'scoped memory for tile.28']
  %s0 = inlined_call_operand.vmem [shape: f32[32], index: 0, kind: input, shape index: {}]
  %s1 = inlined_call_operand.vmem [shape: f32[16,32], index: 1, kind: output, shape index: {}]
  // Predicated region
  $region2: #{tile.28} parent=0 // pred_check
    _
  $region3: #{tile.28} parent=0 // pred_check_branch
    %3 = sbr.rel (0) target = $region5
  $region4: #{tile.28} parent=0 // pred_region
    _
  $region5: #{tile.28} parent=0 // pred_fallthru
    _
  %v4 = vld [vmem:[%s0] ss:$0 sm:$0xff]
  %5 = vst [vmem:[%s1] sm:$0xff] %v4
  %s6 = scalar_lea.vmem %s1, 8
  %7 = vst [vmem:[%s6] sm:$0xff] %v4

// kernel: tile.29
$region0: #{tile.29}
  %s0 = inlined_call_operand.vmem [shape: f32[16,32], index: 0, kind: input, shape index: {}]
  %s1 = inlined_call_operand.vmem [shape: f32[1,512], index: 1, kind: output, shape index: {}]
  $region1: #{tile.29} parent=0
    #allocation0 [shape = 'u8[16384]{0}', space=vmem, size = 0x4000, scoped, tag = 'scoped mem for output reshape']
    %v2 = vld [vmem:[%s0] ss:$4 sm:$0xf]
    %vm3 = vcmask 261120
    %4 = vst.msk [vmem:[#allocation0] ss:$8 sm:$0xf] %vm3, %v2
    %s5 = scalar_lea.vmem %s0, 3
    %v6 = vld [vmem:[%s5] ss:$4 sm:$0xf]
    %7 = vrot.lane.b32.xlu0 %v6, 96
    %v8 = vpop.permute.xlu0 %7
    %vm9 = vcmask 1048320
    %10 = vst.msk [vmem:[#allocation0] ss:$8 sm:$0xf] %vm9, %v8
    %s11 = scalar_lea.vmem %s0, 2
    %v12 = vld [vmem:[%s11] ss:$4 sm:$0xf]
    %13 = vrot.lane.b32.xlu0 %v12, 64
    %v14 = vpop.permute.xlu0 %13
    %vm15 = vcmask 785920
    %16 = vst.msk [vmem:[#allocation0] ss:$8 sm:$0xf] %vm15, %v14
    %s17 = scalar_lea.vmem %s0, 1
    %v18 = vld [vmem:[%s17] ss:$4 sm:$0xf]
    %19 = vrot.lane.b32.xlu0 %v18, 32
    %v20 = vpop.permute.xlu0 %19
    %vm21 = vcmask 523520
    %22 = vst.msk [vmem:[#allocation0] ss:$8 sm:$0xf] %vm21, %v20
    %s24 = sshll.u32 1, 1
    %s25 = ssub.s32 %s24, 1
    %v27 = vld [vmem:[#allocation0] sm:%s25]
    %s28 = sshll.u32 1, 1
    %s29 = ssub.s32 %s28, 1
    %30 = vst [vmem:[%s1] sm:%s29] %v27
    %s31 = scalar_lea.vmem [#allocation0], 8
    %v32 = vld [vmem:[%s31] sm:%s25]
    %s33 = sshll.u32 1, 1
    %s34 = ssub.s32 %s33, 1
    %s35 = scalar_lea.vmem %s1, 1
    %36 = vst [vmem:[%s35] sm:%s34] %v32
    %s37 = scalar_lea.vmem [#allocation0], 16
    %v38 = vld [vmem:[%s37] sm:%s25]
    %s39 = sshll.u32 1, 1
    %s40 = ssub.s32 %s39, 1
    %s41 = smul.addr 1, 2
    %s42 = scalar_lea.vmem %s1, %s41
    %43 = vst [vmem:[%s42] sm:%s40] %v38
    %s44 = scalar_lea.vmem [#allocation0], 24
    %v45 = vld [vmem:[%s44] sm:%s25]
    %s46 = sshll.u32 1, 1
    %s47 = ssub.s32 %s46, 1
    %s48 = smul.addr 1, 3
    %s49 = scalar_lea.vmem %s1, %s48
    %50 = vst [vmem:[%s49] sm:%s47] %v45

// kernel: tile.38
$region0: #{tile.38}
  #allocation0 [shape = 's32[1]{0}', space=sflag, size = 0x4, scoped, tag = 'scoped memory for tile.38']
  %s0 = inlined_call_operand.vmem [shape: f32[8], index: 0, kind: input, shape index: {}]
  %s1 = inlined_call_operand.vmem [shape: f32[4,8], index: 1, kind: output, shape index: {}]
  // Predicated region
  $region2: #{tile.38} parent=0 // pred_check
    _
  $region3: #{tile.38} parent=0 // pred_check_branch
    %3 = sbr.rel (0) target = $region5
  $region4: #{tile.38} parent=0 // pred_region
    _
  $region5: #{tile.38} parent=0 // pred_fallthru
    _
  %v4 = vld [vmem:[%s0] ss:$0 sm:$0xff]
  %5 = vst [vmem:[%s1] sm:$0xf] %v4

// kernel: tile.0
$region0: #{tile.0}
  %s0 = inlined_call_operand.vmem [shape: f32[4,8], index: 0, kind: input, shape index: {}]
  %s1 = inlined_call_operand.vmem [shape: f32[32,1], index: 1, kind: output, shape index: {}]
  $region1: #{tile.0} parent=0
    #allocation0 [shape = 'u8[4096]{0}', space=vmem, size = 0x1000, scoped, tag = 'scoped mem for input reshape']
    %s3 = sshll.u32 1, 4
    %s4 = ssub.s32 %s3, 1
    %v5 = vld [vmem:[%s0] sm:%s4]
    %6 = vst [vmem:[#allocation0] sm:%s4] %v5
    %v7 = vld [vmem:[#allocation0] sm:$0xf]
    %vm8 = vcmask 7168
    %9 = vst.msk [vmem:[%s1] ss:$8 sm:$0xf] %vm8, %v7
    %v10 = vld [vmem:[#allocation0] sm:$0xf]
    %11 = vrot.lane.b32.xlu0 %v10, 127
    %v12 = vpop.permute.xlu0 %11
    %vm13 = vcmask 7168
    %s14 = scalar_lea.vmem %s1, 1
    %15 = vst.msk [vmem:[%s14] ss:$8 sm:$0xf] %vm13, %v12
    %v16 = vld [vmem:[#allocation0] sm:$0xf]
    %17 = vrot.lane.b32.xlu0 %v16, 126
    %v18 = vpop.permute.xlu0 %17
    %vm19 = vcmask 7168
    %s20 = scalar_lea.vmem %s1, 2
    %21 = vst.msk [vmem:[%s20] ss:$8 sm:$0xf] %vm19, %v18
    %v22 = vld [vmem:[#allocation0] sm:$0xf]
    %23 = vrot.lane.b32.xlu0 %v22, 125
    %v24 = vpop.permute.xlu0 %23
    %vm25 = vcmask 7168
    %s26 = scalar_lea.vmem %s1, 3
    %27 = vst.msk [vmem:[%s26] ss:$8 sm:$0xf] %vm25, %v24
    %v28 = vld [vmem:[#allocation0] sm:$0xf]
    %29 = vrot.lane.b32.xlu0 %v28, 124
    %v30 = vpop.permute.xlu0 %29
    %vm31 = vcmask 7168
    %s32 = scalar_lea.vmem %s1, 4
    %33 = vst.msk [vmem:[%s32] ss:$8 sm:$0xf] %vm31, %v30
    %v34 = vld [vmem:[#allocation0] sm:$0xf]
    %35 = vrot.lane.b32.xlu0 %v34, 123
    %v36 = vpop.permute.xlu0 %35
    %vm37 = vcmask 7168
    %s38 = scalar_lea.vmem %s1, 5
    %39 = vst.msk [vmem:[%s38] ss:$8 sm:$0xf] %vm37, %v36
    %v40 = vld [vmem:[#allocation0] sm:$0xf]
    %41 = vrot.lane.b32.xlu0 %v40, 122
    %v42 = vpop.permute.xlu0 %41
    %vm43 = vcmask 7168
    %s44 = scalar_lea.vmem %s1, 6
    %45 = vst.msk [vmem:[%s44] ss:$8 sm:$0xf] %vm43, %v42
    %v46 = vld [vmem:[#allocation0] sm:$0xf]
    %47 = vrot.lane.b32.xlu0 %v46, 121
    %v48 = vpop.permute.xlu0 %47
    %vm49 = vcmask 7168
    %s50 = scalar_lea.vmem %s1, 7
    %51 = vst.msk [vmem:[%s50] ss:$8 sm:$0xf] %vm49, %v48

// kernel: tile.48
$region0: #{tile.48}
  #allocation0 [shape = 's32[1]{0}', space=sflag, size = 0x4, scoped, tag = 'scoped memory for tile.48']
  %s0 = inlined_call_operand.vmem [shape: f32[8], index: 0, kind: input, shape index: {}]
  %s1 = inlined_call_operand.vmem [shape: f32[16,8], index: 1, kind: output, shape index: {}]
  // Predicated region
  $region2: #{tile.48} parent=0 // pred_check
    _
  $region3: #{tile.48} parent=0 // pred_check_branch
    %3 = sbr.rel (0) target = $region5
  $region4: #{tile.48} parent=0 // pred_region
    _
  $region5: #{tile.48} parent=0 // pred_fallthru
    _
  %v4 = vld [vmem:[%s0] ss:$0 sm:$0xff]
  %5 = vst [vmem:[%s1] sm:$0xff] %v4
  %s6 = scalar_lea.vmem %s1, 8
  %7 = vst [vmem:[%s6] sm:$0xff] %v4

// kernel: tile.2
$region0: #{tile.2}
  %s0 = inlined_call_operand.vmem [shape: f32[16,8], index: 0, kind: input, shape index: {}]
  %s1 = inlined_call_operand.vmem [shape: f32[128,1], index: 1, kind: output, shape index: {}]
  %v2 = vld [vmem:[%s0] sm:$0xff]
  %vm3 = vcmask 7168
  %4 = vst.msk [vmem:[%s1] ss:$8 sm:$0xf] %vm3, %v2
  %5 = vst.msk [vmem:[%s1] ss:$8 sm:$0xf0] %vm3, %v2
  %s6 = scalar_lea.vmem %s0, 8
  %v7 = vld [vmem:[%s6] sm:$0xff]
  %vm8 = vcmask 7168
  %s9 = scalar_lea.vmem %s1, 64
  %10 = vst.msk [vmem:[%s9] ss:$8 sm:$0xf] %vm8, %v7
  %s11 = scalar_lea.vmem %s1, 64
  %12 = vst.msk [vmem:[%s11] ss:$8 sm:$0xf0] %vm8, %v7
  %v13 = vld [vmem:[%s0] sm:$0xff]
  %14 = vrot.lane.b32.xlu0 %v13, 127
  %v15 = vpop.permute.xlu0 %14
  %vm16 = vcmask 7168
  %s17 = scalar_lea.vmem %s1, 1
  %18 = vst.msk [vmem:[%s17] ss:$8 sm:$0xf] %vm16, %v15
  %s19 = scalar_lea.vmem %s1, 1
  %20 = vst.msk [vmem:[%s19] ss:$8 sm:$0xf0] %vm16, %v15
  %s21 = scalar_lea.vmem %s0, 8
  %v22 = vld [vmem:[%s21] sm:$0xff]
  %23 = vrot.lane.b32.xlu0 %v22, 127
  %v24 = vpop.permute.xlu0 %23
  %vm25 = vcmask 7168
  %s26 = scalar_lea.vmem %s1, 65
  %27 = vst.msk [vmem:[%s26] ss:$8 sm:$0xf] %vm25, %v24
  %s28 = scalar_lea.vmem %s1, 65
  %29 = vst.msk [vmem:[%s28] ss:$8 sm:$0xf0] %vm25, %v24
  %v30 = vld [vmem:[%s0] sm:$0xff]
  %31 = vrot.lane.b32.xlu0 %v30, 126
  %v32 = vpop.permute.xlu0 %31
  %vm33 = vcmask 7168
  %s34 = scalar_lea.vmem %s1, 2
  %35 = vst.msk [vmem:[%s34] ss:$8 sm:$0xf] %vm33, %v32
  %s36 = scalar_lea.vmem %s1, 2
  %37 = vst.msk [vmem:[%s36] ss:$8 sm:$0xf0] %vm33, %v32
  %s38 = scalar_lea.vmem %s0, 8
  %v39 = vld [vmem:[%s38] sm:$0xff]
  %40 = vrot.lane.b32.xlu0 %v39, 126
  %v41 = vpop.permute.xlu0 %40
  %vm42 = vcmask 7168
  %s43 = scalar_lea.vmem %s1, 66
  %44 = vst.msk [vmem:[%s43] ss:$8 sm:$0xf] %vm42, %v41
  %s45 = scalar_lea.vmem %s1, 66
  %46 = vst.msk [vmem:[%s45] ss:$8 sm:$0xf0] %vm42, %v41
  %v47 = vld [vmem:[%s0] sm:$0xff]
  %48 = vrot.lane.b32.xlu0 %v47, 125
  %v49 = vpop.permute.xlu0 %48
  %vm50 = vcmask 7168
  %s51 = scalar_lea.vmem %s1, 3
  %52 = vst.msk [vmem:[%s51] ss:$8 sm:$0xf] %vm50, %v49
  %s53 = scalar_lea.vmem %s1, 3
  %54 = vst.msk [vmem:[%s53] ss:$8 sm:$0xf0] %vm50, %v49
  %s55 = scalar_lea.vmem %s0, 8
  %v56 = vld [vmem:[%s55] sm:$0xff]
  %57 = vrot.lane.b32.xlu0 %v56, 125
  %v58 = vpop.permute.xlu0 %57
  %vm59 = vcmask 7168
  %s60 = scalar_lea.vmem %s1, 67
  %61 = vst.msk [vmem:[%s60] ss:$8 sm:$0xf] %vm59, %v58
  %s62 = scalar_lea.vmem %s1, 67
  %63 = vst.msk [vmem:[%s62] ss:$8 sm:$0xf0] %vm59, %v58
  %v64 = vld [vmem:[%s0] sm:$0xff]
  %65 = vrot.lane.b32.xlu0 %v64, 124
  %v66 = vpop.permute.xlu0 %65
  %vm67 = vcmask 7168
  %s68 = scalar_lea.vmem %s1, 4
  %69 = vst.msk [vmem:[%s68] ss:$8 sm:$0xf] %vm67, %v66
  %s70 = scalar_lea.vmem %s1, 4
  %71 = vst.msk [vmem:[%s70] ss:$8 sm:$0xf0] %vm67, %v66
  %s72 = scalar_lea.vmem %s0, 8
  %v73 = vld [vmem:[%s72] sm:$0xff]
  %74 = vrot.lane.b32.xlu0 %v73, 124
  %v75 = vpop.permute.xlu0 %74
  %vm76 = vcmask 7168
  %s77 = scalar_lea.vmem %s1, 68
  %78 = vst.msk [vmem:[%s77] ss:$8 sm:$0xf] %vm76, %v75
  %s79 = scalar_lea.vmem %s1, 68
  %80 = vst.msk [vmem:[%s79] ss:$8 sm:$0xf0] %vm76, %v75
  %v81 = vld [vmem:[%s0] sm:$0xff]
  %82 = vrot.lane.b32.xlu0 %v81, 123
  %v83 = vpop.permute.xlu0 %82
  %vm84 = vcmask 7168
  %s85 = scalar_lea.vmem %s1, 5
  %86 = vst.msk [vmem:[%s85] ss:$8 sm:$0xf] %vm84, %v83
  %s87 = scalar_lea.vmem %s1, 5
  %88 = vst.msk [vmem:[%s87] ss:$8 sm:$0xf0] %vm84, %v83
  %s89 = scalar_lea.vmem %s0, 8
  %v90 = vld [vmem:[%s89] sm:$0xff]
  %91 = vrot.lane.b32.xlu0 %v90, 123
  %v92 = vpop.permute.xlu0 %91
  %vm93 = vcmask 7168
  %s94 = scalar_lea.vmem %s1, 69
  %95 = vst.msk [vmem:[%s94] ss:$8 sm:$0xf] %vm93, %v92
  %s96 = scalar_lea.vmem %s1, 69
  %97 = vst.msk [vmem:[%s96] ss:$8 sm:$0xf0] %vm93, %v92
  %v98 = vld [vmem:[%s0] sm:$0xff]
  %99 = vrot.lane.b32.xlu0 %v98, 122
  %v100 = vpop.permute.xlu0 %99
  %vm101 = vcmask 7168
  %s102 = scalar_lea.vmem %s1, 6
  %103 = vst.msk [vmem:[%s102] ss:$8 sm:$0xf] %vm101, %v100
  %s104 = scalar_lea.vmem %s1, 6
  %105 = vst.msk [vmem:[%s104] ss:$8 sm:$0xf0] %vm101, %v100
  %s106 = scalar_lea.vmem %s0, 8
  %v107 = vld [vmem:[%s106] sm:$0xff]
  %108 = vrot.lane.b32.xlu0 %v107, 122
  %v109 = vpop.permute.xlu0 %108
  %vm110 = vcmask 7168
  %s111 = scalar_lea.vmem %s1, 70
  %112 = vst.msk [vmem:[%s111] ss:$8 sm:$0xf] %vm110, %v109
  %s113 = scalar_lea.vmem %s1, 70
  %114 = vst.msk [vmem:[%s113] ss:$8 sm:$0xf0] %vm110, %v109
  %v115 = vld [vmem:[%s0] sm:$0xff]
  %116 = vrot.lane.b32.xlu0 %v115, 121
  %v117 = vpop.permute.xlu0 %116
  %vm118 = vcmask 7168
  %s119 = scalar_lea.vmem %s1, 7
  %120 = vst.msk [vmem:[%s119] ss:$8 sm:$0xf] %vm118, %v117
  %s121 = scalar_lea.vmem %s1, 7
  %122 = vst.msk [vmem:[%s121] ss:$8 sm:$0xf0] %vm118, %v117
  %s123 = scalar_lea.vmem %s0, 8
  %v124 = vld [vmem:[%s123] sm:$0xff]
  %125 = vrot.lane.b32.xlu0 %v124, 121
  %v126 = vpop.permute.xlu0 %125
  %vm127 = vcmask 7168
  %s128 = scalar_lea.vmem %s1, 71
  %129 = vst.msk [vmem:[%s128] ss:$8 sm:$0xf] %vm127, %v126
  %s130 = scalar_lea.vmem %s1, 71
  %131 = vst.msk [vmem:[%s130] ss:$8 sm:$0xf0] %vm127, %v126

// kernel: decoder_forward.3
$region0: #{decoder_forward.3}
  #allocation0 [shape = 'u32[]', space=smem, size = 0x4, offset = 0x4, fixed_abs, tag = 'smem constant byte address 0x4 - core index']
  #allocation1 [shape = 'u32[144,128]{1,0:T(1,128)}', space=vmem, size = 0x12000, scoped, tag = 'internal scratch']
  %s0 = inlined_call_operand.vmem [shape: bf16[2,32,576], index: 0, kind: input, shape index: {}]
  %s1 = inlined_call_operand.vmem [shape: bf16[32,128], index: 1, kind: input, shape index: {}]
  %s2 = inlined_call_operand.vmem [shape: f32[1,512], index: 2, kind: input, shape index: {}]
  %s3 = inlined_call_operand.vmem [shape: bf16[2,32,512], index: 3, kind: output, shape index: {0}]
  %s4 = inlined_call_operand.vmem [shape: f32[2,32,2], index: 4, kind: output, shape index: {1}]
  %5 = xla_tuple %s3, %s4
  %s6 = sld [smem:[#allocation0]]
  $region53: #{decoder_forward.3} parent=0
    _
  %s8 = ssub.s32 1, %s6
  %s9 = scalar_select 0, %s8, %s6
  loop: start=0, step=1, limit=4
  $region2: #{decoder_forward.3} parent=0 // loop_pre_header
    _
  $region3: #{decoder_forward.3} parent=0 // loop_header
    %s11 = sphi 0, %s15
    %p12 = scmp.ge.s32.totalorder %s11, 4
    %s21 = sphi 0, %s23
    %s24 = sphi 0, %s21
    %s25 = sphi 0, %s24
    %s41 = sphi 0, %s25
    %s45 = sphi 0, %s45
    %s47 = sphi 0, %s45
    %s48 = sphi 0, %s47
    %s62 = sphi 0, %s48
    %s66 = sphi 0, %s66
    %s68 = sphi 0, %s66
    %s69 = sphi 0, %s68
    %s83 = sphi 0, %s69
    %s89 = sphi 0, %s91
    %s92 = sphi 0, %s89
    %s93 = sphi 0, %s92
    %s109 = sphi 0, %s93
    %s115 = sphi 0, %s117
    %s118 = sphi 0, %s115
    %s119 = sphi 0, %s118
    %s135 = sphi 0, %s119
  $region4: #{decoder_forward.3} parent=0 // loop_header_branch
    %14 = sbr.rel (%p12) target = $region8
  $region5: #{decoder_forward.3} parent=0 // loop_body
    %s16 = ssub.s32 %s11, 1
    %s17 = ssub.s32 %s11, 2
    %s18 = sadd.s32 %s11, 1
    %s19 = ssub.s32 %s11, %s18
    %p20 = scmp.eq.s32.totalorder %s19, 0
    %s22 = sadd.s32 %s21, 1
    %s23 = scalar_select %p20, %s21, %s22
    %p26 = pneg %p20
    %p27 = scmp.eq.s32.totalorder %s11, 1
    %p28 = por %p26, %p27
    %p29 = scmp.ne.s32.totalorder %s21, %s24
    %p30 = scmp.eq.s32.totalorder %s11, 0
    %p31 = por %p29, %p30
    %p32 = scmp.ne.s32.totalorder %s21, %s24
    %p33 = scmp.eq.s32.totalorder %s16, 1
    %p34 = por %p32, %p33
    %p35 = scmp.ne.s32.totalorder %s24, %s25
    %p36 = scmp.eq.s32.totalorder %s16, 0
    %p37 = por %p35, %p36
    %p38 = scmp.ne.s32.totalorder %s24, %s25
    %p39 = scmp.eq.s32.totalorder %s17, 1
    %p40 = por %p38, %p39
    %p42 = scmp.ne.s32.totalorder %s25, %s41
    %p43 = scmp.eq.s32.totalorder %s17, 0
    %p44 = por %p42, %p43
    %s46 = sadd.s32 %s45, 1
    %p49 = scmp.eq.s32.totalorder %s11, 1
    %p50 = scmp.ne.s32.totalorder %s45, %s47
    %p51 = scmp.eq.s32.totalorder %s11, 0
    %p52 = por %p50, %p51
    %p53 = scmp.ne.s32.totalorder %s45, %s47
    %p54 = scmp.eq.s32.totalorder %s16, 1
    %p55 = por %p53, %p54
    %p56 = scmp.ne.s32.totalorder %s47, %s48
    %p57 = scmp.eq.s32.totalorder %s16, 0
    %p58 = por %p56, %p57
    %p59 = scmp.ne.s32.totalorder %s47, %s48
    %p60 = scmp.eq.s32.totalorder %s17, 1
    %p61 = por %p59, %p60
    %p63 = scmp.ne.s32.totalorder %s48, %s62
    %p64 = scmp.eq.s32.totalorder %s17, 0
    %p65 = por %p63, %p64
    %s67 = sadd.s32 %s66, 1
    %p70 = scmp.eq.s32.totalorder %s11, 1
    %p71 = scmp.ne.s32.totalorder %s66, %s68
    %p72 = scmp.eq.s32.totalorder %s11, 0
    %p73 = por %p71, %p72
    %p74 = scmp.ne.s32.totalorder %s66, %s68
    %p75 = scmp.eq.s32.totalorder %s16, 1
    %p76 = por %p74, %p75
    %p77 = scmp.ne.s32.totalorder %s68, %s69
    %p78 = scmp.eq.s32.totalorder %s16, 0
    %p79 = por %p77, %p78
    %p80 = scmp.ne.s32.totalorder %s68, %s69
    %p81 = scmp.eq.s32.totalorder %s17, 1
    %p82 = por %p80, %p81
    %p84 = scmp.ne.s32.totalorder %s69, %s83
    %p85 = scmp.eq.s32.totalorder %s17, 0
    %p86 = por %p84, %p85
    %s87 = ssub.s32 %s11, %s18
    %p88 = scmp.eq.s32.totalorder %s87, 0
    %s90 = sadd.s32 %s89, 1
    %s91 = scalar_select %p88, %s89, %s90
    %p94 = pneg %p88
    %p95 = scmp.eq.s32.totalorder %s11, 1
    %p96 = por %p94, %p95
    %p97 = scmp.ne.s32.totalorder %s89, %s92
    %p98 = scmp.eq.s32.totalorder %s11, 0
    %p99 = por %p97, %p98
    %p100 = scmp.ne.s32.totalorder %s89, %s92
    %p101 = scmp.eq.s32.totalorder %s16, 1
    %p102 = por %p100, %p101
    %p103 = scmp.ne.s32.totalorder %s92, %s93
    %p104 = scmp.eq.s32.totalorder %s16, 0
    %p105 = por %p103, %p104
    %p106 = scmp.ne.s32.totalorder %s92, %s93
    %p107 = scmp.eq.s32.totalorder %s17, 1
    %p108 = por %p106, %p107
    %p110 = scmp.ne.s32.totalorder %s93, %s109
    %p111 = scmp.eq.s32.totalorder %s17, 0
    %p112 = por %p110, %p111
    %s113 = ssub.s32 %s11, %s18
    %p114 = scmp.eq.s32.totalorder %s113, 0
    %s116 = sadd.s32 %s115, 1
    %s117 = scalar_select %p114, %s115, %s116
    %p120 = pneg %p114
    %p121 = scmp.eq.s32.totalorder %s11, 1
    %p122 = por %p120, %p121
    %p123 = scmp.ne.s32.totalorder %s115, %s118
    %p124 = scmp.eq.s32.totalorder %s11, 0
    %p125 = por %p123, %p124
    %p126 = scmp.ne.s32.totalorder %s115, %s118
    %p127 = scmp.eq.s32.totalorder %s16, 1
    %p128 = por %p126, %p127
    %p129 = scmp.ne.s32.totalorder %s118, %s119
    %p130 = scmp.eq.s32.totalorder %s16, 0
    %p131 = por %p129, %p130
    %p132 = scmp.ne.s32.totalorder %s118, %s119
    %p133 = scmp.eq.s32.totalorder %s17, 1
    %p134 = por %p132, %p133
    %p136 = scmp.ne.s32.totalorder %s119, %s135
    %p137 = scmp.eq.s32.totalorder %s17, 0
    %p138 = por %p136, %p137
    %p139 = scmp.le.s32.totalorder 1, %s11
    %p140 = scmp.lt.s32.totalorder %s11, 3
    %p141 = pnand %p139, %p140
    %p142 = pneg %p141
    // Predicated region
    $region9: #{decoder_forward.3} parent=5 // pred_check
      _
    $region10: #{decoder_forward.3} parent=5 // pred_check_branch
      %144 = sbr.rel (%p141) target = $region12
    $region11: #{decoder_forward.3} parent=5 // pred_region
      %s145 = ssub.s32 %s11, 1
      // Predicated region
      $region13: #{decoder_forward.3} parent=11 // pred_check
        %p146 = pneg %p58
      $region14: #{decoder_forward.3} parent=11 // pred_check_branch
        %148 = sbr.rel (%p146) target = $region16
      $region15: #{decoder_forward.3} parent=11 // pred_region
        _
      $region16: #{decoder_forward.3} parent=11 // pred_fallthru
        _
      // Predicated region
      $region17: #{decoder_forward.3} parent=11 // pred_check
        %p149 = pneg %p79
      $region18: #{decoder_forward.3} parent=11 // pred_check_branch
        %151 = sbr.rel (%p149) target = $region20
      $region19: #{decoder_forward.3} parent=11 // pred_region
        _
      $region20: #{decoder_forward.3} parent=11 // pred_fallthru
        _
    $region12: #{decoder_forward.3} parent=5 // pred_fallthru
      _
    %p152 = scmp.lt.s32.totalorder %s11, 2
    // Predicated region
    $region21: #{decoder_forward.3} parent=5 // pred_check
      %p153 = pneg %p152
    $region22: #{decoder_forward.3} parent=5 // pred_check_branch
      %155 = sbr.rel (%p153) target = $region24
    $region23: #{decoder_forward.3} parent=5 // pred_region
      // Predicated region
      $region25: #{decoder_forward.3} parent=23 // pred_check
        %p156 = pneg %p31
      $region26: #{decoder_forward.3} parent=23 // pred_check_branch
        %158 = sbr.rel (%p156) target = $region28
      $region27: #{decoder_forward.3} parent=23 // pred_region
        %p159 = scmp.lt.s32.totalorder %s11, 1
        %s160 = scalar_select %p159, %s11, 1
        %s161 = smul.addr %s160, 20
        %s162 = smul.addr %s161, 4
        %s163 = scalar_lea.vmem %s0, %s162
      $region28: #{decoder_forward.3} parent=23 // pred_fallthru
        _
    $region24: #{decoder_forward.3} parent=5 // pred_fallthru
      _
    %p164 = scmp.le.s32.totalorder 1, %s11
    %p165 = scmp.lt.s32.totalorder %s11, 3
    %p166 = pnand %p164, %p165
    %p167 = pneg %p166
    // Predicated region
    $region29: #{decoder_forward.3} parent=5 // pred_check
      _
    $region30: #{decoder_forward.3} parent=5 // pred_check_branch
      %169 = sbr.rel (%p166) target = $region32
    $region31: #{decoder_forward.3} parent=5 // pred_region
      %s170 = ssub.s32 %s11, 1
      %p171 = scmp.lt.s32.totalorder %s16, 1
      %s172 = scalar_select %p171, %s16, 1
      %s173 = smul.addr %s172, 20
      %s174 = smul.addr %s173, 4
      %s175 = scalar_lea.vmem %s0, %s174
      %p176 = pneg %p37
      %p177 = pneg %p34
      %p178 = pneg %p58
      %p179 = pneg %p55
      %p180 = pneg %p79
      %p181 = pneg %p76
      %p182 = pneg %p105
      %p183 = pneg %p102
      %p184 = scmp.lt.s32.totalorder %s16, 1
      %s185 = scalar_select %p184, %s16, 1
      %s186 = smul.addr %s185, 16
      %s187 = smul.addr %s186, 4
      %s188 = scalar_lea.vmem %s3, %s187
      %p189 = pneg %p131
      %p190 = pneg %p128
      %p191 = scmp.lt.s32.totalorder %s16, 1
      %s192 = scalar_select %p191, %s16, 1
      %s193 = smul.addr %s192, 4
      %s194 = smul.addr %s193, 8
      %s195 = scalar_lea.vmem %s4, %s194
      %p196 = scmp.lt.s32.totalorder %s16, 1
      %s197 = scalar_select %p196, %s16, 1
      %s198 = smul.addr %s197, 20
      %s199 = smul.addr %s198, 4
      %s200 = scalar_lea.vmem %s0, %s199
      %p201 = scmp.lt.s32.totalorder %s16, 1
      %s202 = scalar_select %p201, %s16, 1
      %s203 = smul.addr %s202, 16
      %s204 = smul.addr %s203, 4
      %s205 = scalar_lea.vmem %s3, %s204
      %p206 = scmp.lt.s32.totalorder %s16, 1
      %s207 = scalar_select %p206, %s16, 1
      %s208 = smul.addr %s207, 4
      %s209 = smul.addr %s208, 8
      %s210 = scalar_lea.vmem %s4, %s209
      %v212 = vld [vmem:[%s200] sm:$0xff]
      %v213 = vld [vmem:[%s200 + $0x8] sm:$0xff]
      %v214 = vld [vmem:[%s200 + $0x10] sm:$0xf]
      %v215 = vld [vmem:[%s200 + $0x14] sm:$0xff]
      %v216 = vld [vmem:[%s200 + $0x1c] sm:$0xff]
      %v217 = vld [vmem:[%s200 + $0x24] sm:$0xf]
      %v218 = vld [vmem:[%s200 + $0x28] sm:$0xff]
      %v219 = vld [vmem:[%s200 + $0x30] sm:$0xff]
      %v220 = vld [vmem:[%s200 + $0x38] sm:$0xf]
      %v221 = vld [vmem:[%s200 + $0x3c] sm:$0xff]
      %v222 = vld [vmem:[%s200 + $0x44] sm:$0xff]
      %v223 = vld [vmem:[%s200 + $0x4c] sm:$0xf]
      %v232 = vunpack.c.l.b16 %v212
      %v233 = vunpack.c.h.b16 %v212
      %v234 = vunpack.c.l.b16 %v213
      %v235 = vunpack.c.h.b16 %v213
      %v236 = vunpack.c.l.b16 %v215
      %v237 = vunpack.c.h.b16 %v215
      %v238 = vunpack.c.l.b16 %v216
      %v239 = vunpack.c.h.b16 %v216
      %v240 = vunpack.c.l.b16 %v218
      %v241 = vunpack.c.h.b16 %v218
      %v242 = vunpack.c.l.b16 %v219
      %v243 = vunpack.c.h.b16 %v219
      %v244 = vunpack.c.l.b16 %v221
      %v245 = vunpack.c.h.b16 %v221
      %v246 = vunpack.c.l.b16 %v222
      %v247 = vunpack.c.h.b16 %v222
      %v248 = vpack.c.b16 %v236, %v232
      %v249 = vpack.c.b16 %v237, %v233
      %v250 = vpack.c.b16 %v238, %v234
      %v251 = vpack.c.b16 %v239, %v235
      %v252 = vpack.c.b16 %v244, %v240
      %v253 = vpack.c.b16 %v245, %v241
      %v254 = vpack.c.b16 %v246, %v242
      %v255 = vpack.c.b16 %v247, %v243
      %v268 = vunpack.c.l.b16 %v214
      %v269 = vunpack.c.l.b16 %v217
      %v270 = vunpack.c.l.b16 %v220
      %v271 = vunpack.c.l.b16 %v223
      %v272 = vpack.c.b16 %v269, %v268
      %v273 = vpack.c.b16 %v271, %v270
      %274 = vrot.lane.b32.xlu0 %v248, 127
      %v275 = vpop.permute.xlu0 %274
      %276 = vrot.lane.b32.xlu0 %v249, 127
      %v277 = vpop.permute.xlu0 %276
      %278 = vrot.lane.b32.xlu0 %v250, 127
      %v279 = vpop.permute.xlu0 %278
      %280 = vrot.lane.b32.xlu0 %v251, 127
      %v281 = vpop.permute.xlu0 %280
      %282 = vrot.lane.b32.xlu0 %v272, 127
      %v283 = vpop.permute.xlu0 %282
      %284 = vrot.lane.b32.xlu0 %v252, 127
      %v285 = vpop.permute.xlu0 %284
      %286 = vrot.lane.b32.xlu0 %v253, 127
      %v287 = vpop.permute.xlu0 %286
      %288 = vrot.lane.b32.xlu0 %v254, 127
      %v289 = vpop.permute.xlu0 %288
      %290 = vrot.lane.b32.xlu0 %v255, 127
      %v291 = vpop.permute.xlu0 %290
      %292 = vrot.lane.b32.xlu0 %v273, 127
      %v293 = vpop.permute.xlu0 %292
      %vm294 = vcmask 1039360
      %v295 = vsel %vm294, %v275, %v277
      %v296 = vsel %vm294, %v277, %v279
      %v297 = vsel %vm294, %v279, %v281
      %v298 = vsel %vm294, %v281, %v283
      %v299 = vsel %vm294, %v285, %v287
      %v300 = vsel %vm294, %v287, %v289
      %v301 = vsel %vm294, %v289, %v291
      %v302 = vsel %vm294, %v291, %v293
      %311 = vrot.lane.b32.xlu0 %v248, 96
      %v312 = vpop.permute.xlu0 %311
      %313 = vrot.lane.b32.xlu0 %v249, 96
      %v314 = vpop.permute.xlu0 %313
      %315 = vrot.lane.b32.xlu0 %v250, 96
      %v316 = vpop.permute.xlu0 %315
      %317 = vrot.lane.b32.xlu0 %v251, 96
      %v318 = vpop.permute.xlu0 %317
      %319 = vrot.lane.b32.xlu0 %v272, 96
      %v320 = vpop.permute.xlu0 %319
      %321 = vrot.lane.b32.xlu0 %v252, 96
      %v322 = vpop.permute.xlu0 %321
      %323 = vrot.lane.b32.xlu0 %v253, 96
      %v324 = vpop.permute.xlu0 %323
      %325 = vrot.lane.b32.xlu0 %v254, 96
      %v326 = vpop.permute.xlu0 %325
      %327 = vrot.lane.b32.xlu0 %v255, 96
      %v328 = vpop.permute.xlu0 %327
      %329 = vrot.lane.b32.xlu0 %v273, 96
      %v330 = vpop.permute.xlu0 %329
      %vm331 = vcmask 785408
      %v332 = vsel %vm331, %v312, %v314
      %v333 = vsel %vm331, %v314, %v316
      %v334 = vsel %vm331, %v316, %v318
      %v335 = vsel %vm331, %v318, %v320
      %v336 = vsel %vm331, %v322, %v324
      %v337 = vsel %vm331, %v324, %v326
      %v338 = vsel %vm331, %v326, %v328
      %v339 = vsel %vm331, %v328, %v330
      %348 = vrot.lane.b32.xlu0 %v248, 95
      %v349 = vpop.permute.xlu0 %348
      %350 = vrot.lane.b32.xlu0 %v249, 95
      %v351 = vpop.permute.xlu0 %350
      %352 = vrot.lane.b32.xlu0 %v250, 95
      %v353 = vpop.permute.xlu0 %352
      %354 = vrot.lane.b32.xlu0 %v251, 95
      %v355 = vpop.permute.xlu0 %354
      %356 = vrot.lane.b32.xlu0 %v272, 95
      %v357 = vpop.permute.xlu0 %356
      %358 = vrot.lane.b32.xlu0 %v252, 95
      %v359 = vpop.permute.xlu0 %358
      %360 = vrot.lane.b32.xlu0 %v253, 95
      %v361 = vpop.permute.xlu0 %360
      %362 = vrot.lane.b32.xlu0 %v254, 95
      %v363 = vpop.permute.xlu0 %362
      %364 = vrot.lane.b32.xlu0 %v255, 95
      %v365 = vpop.permute.xlu0 %364
      %366 = vrot.lane.b32.xlu0 %v273, 95
      %v367 = vpop.permute.xlu0 %366
      %vm368 = vcmask 777216
      %v369 = vsel %vm368, %v349, %v351
      %v370 = vsel %vm368, %v351, %v353
      %v371 = vsel %vm368, %v353, %v355
      %v372 = vsel %vm368, %v355, %v357
      %v373 = vsel %vm368, %v359, %v361
      %v374 = vsel %vm368, %v361, %v363
      %v375 = vsel %vm368, %v363, %v365
      %v376 = vsel %vm368, %v365, %v367
      %v385 = vld [vmem:[%s1] sm:$0xf]
      %v386 = vld [vmem:[%s1 + $0x4] sm:$0xf]
      %v387 = vld [vmem:[%s1 + $0x8] sm:$0xf]
      %v388 = vld [vmem:[%s1 + $0xc] sm:$0xf]
      %v393 = vunpack.c.l.b16 %v385
      %v394 = vunpack.c.l.b16 %v386
      %v395 = vunpack.c.l.b16 %v387
      %v396 = vunpack.c.l.b16 %v388
      %v397 = vpack.c.b16 %v394, %v393
      %v398 = vpack.c.b16 %v396, %v395
      %401 = vmatprep.subr.bf16.mxu0 %v374
      %402 = vmatpush1.bf16.msra.mxu0 %v373
      %403 = vmatprep.subr.bf16.mxu0 %v370
      %404 = vmatpush1.bf16.msra.mxu0 %v369
      %405 = vmatprep.subr.bf16.mxu0 %v337
      %406 = vmatpush1.bf16.msra.mxu0 %v336
      %407 = vmatprep.subr.bf16.mxu0 %v333
      %408 = vmatpush1.bf16.msra.mxu0 %v332
      %409 = vmatprep.subr.bf16.mxu0 %v300
      %410 = vmatpush1.bf16.msra.mxu0 %v299
      %411 = vmatprep.subr.bf16.mxu0 %v296
      %412 = vmatpush1.bf16.msra.mxu0 %v295
      %413 = vmatprep.subr.bf16.mxu0 %v253
      %414 = vmatpush1.bf16.msra.mxu0 %v252
      %415 = vmatprep.subr.bf16.mxu0 %v249
      %416 = vmatpush1.bf16.msra.mxu0 %v248
      %417 = vmatprep.subr.bf16.mxu0 0
      %418 = vmatpush2.bf16.msra.mxu0 0
      %419 = vmatprep.subr.bf16.mxu0 0
      %420 = vmatpush2.bf16.msra.mxu0 0
      %421 = vmatprep.subr.bf16.mxu0 0
      %422 = vmatpush2.bf16.msra.mxu0 0
      %423 = vmatprep.subr.bf16.mxu0 0
      %424 = vmatpush2.bf16.msra.mxu0 0
      %425 = vmatprep.subr.bf16.mxu0 0
      %426 = vmatpush2.bf16.msra.mxu0 0
      %427 = vmatprep.subr.bf16.mxu0 0
      %428 = vmatpush2.bf16.msra.mxu0 0
      %429 = vmatprep.subr.bf16.mxu0 0
      %430 = vmatpush2.bf16.msra.mxu0 0
      %431 = vmatprep.subr.bf16.mxu0 0
      %432 = vmatpush2.bf16.msra.mxu0 0
      %433 = vmatprep.mubr.bf16.mxu0 0
      %434 = vmatmul.mubr.bf16.gmra.mxu0 %v397
      %v435 = vpop.f32.mrf.mxu0
      %v436 = vadd.f32 0.0, %v435
      %v437 = vpop.f32.mrf.mxu0
      %v438 = vadd.f32 0.0, %v437
      %v439 = vpop.f32.mrf.mxu0
      %v440 = vadd.f32 0.0, %v439
      %v441 = vpop.f32.mrf.mxu0
      %v442 = vadd.f32 0.0, %v441
      %443 = vmatprep.mubr.bf16.mxu0 0
      %444 = vmatmul.mubr.bf16.gmra.mxu0 %v398
      %v445 = vpop.f32.mrf.mxu0
      %v446 = vadd.f32 0.0, %v445
      %v447 = vpop.f32.mrf.mxu0
      %v448 = vadd.f32 0.0, %v447
      %v449 = vpop.f32.mrf.mxu0
      %v450 = vadd.f32 0.0, %v449
      %v451 = vpop.f32.mrf.mxu0
      %v452 = vadd.f32 0.0, %v451
      %453 = vdwg.mxu0
      %454 = vmatprep.subr.bf16.mxu0 %v376
      %455 = vmatpush1.bf16.msra.mxu0 %v375
      %456 = vmatprep.subr.bf16.mxu0 %v372
      %457 = vmatpush1.bf16.msra.mxu0 %v371
      %458 = vmatprep.subr.bf16.mxu0 %v339
      %459 = vmatpush1.bf16.msra.mxu0 %v338
      %460 = vmatprep.subr.bf16.mxu0 %v335
      %461 = vmatpush1.bf16.msra.mxu0 %v334
      %462 = vmatprep.subr.bf16.mxu0 %v302
      %463 = vmatpush1.bf16.msra.mxu0 %v301
      %464 = vmatprep.subr.bf16.mxu0 %v298
      %465 = vmatpush1.bf16.msra.mxu0 %v297
      %466 = vmatprep.subr.bf16.mxu0 %v255
      %467 = vmatpush1.bf16.msra.mxu0 %v254
      %468 = vmatprep.subr.bf16.mxu0 %v251
      %469 = vmatpush1.bf16.msra.mxu0 %v250
      %470 = vmatprep.subr.bf16.mxu0 0
      %471 = vmatpush2.bf16.msra.mxu0 0
      %472 = vmatprep.subr.bf16.mxu0 0
      %473 = vmatpush2.bf16.msra.mxu0 0
      %474 = vmatprep.subr.bf16.mxu0 0
      %475 = vmatpush2.bf16.msra.mxu0 0
      %476 = vmatprep.subr.bf16.mxu0 0
      %477 = vmatpush2.bf16.msra.mxu0 0
      %478 = vmatprep.subr.bf16.mxu0 0
      %479 = vmatpush2.bf16.msra.mxu0 0
      %480 = vmatprep.subr.bf16.mxu0 0
      %481 = vmatpush2.bf16.msra.mxu0 0
      %482 = vmatprep.subr.bf16.mxu0 0
      %483 = vmatpush2.bf16.msra.mxu0 0
      %484 = vmatprep.subr.bf16.mxu0 0
      %485 = vmatpush2.bf16.msra.mxu0 0
      %486 = vmatprep.mubr.bf16.mxu0 0
      %487 = vmatmul.mubr.bf16.gmra.mxu0 %v397
      %v488 = vpop.f32.mrf.mxu0
      %v489 = vadd.f32 0.0, %v488
      %v490 = vpop.f32.mrf.mxu0
      %v491 = vadd.f32 0.0, %v490
      %v492 = vpop.f32.mrf.mxu0
      %v493 = vadd.f32 0.0, %v492
      %v494 = vpop.f32.mrf.mxu0
      %v495 = vadd.f32 0.0, %v494
      %496 = vmatprep.mubr.bf16.mxu0 0
      %497 = vmatmul.mubr.bf16.gmra.mxu0 %v398
      %v498 = vpop.f32.mrf.mxu0
      %v499 = vadd.f32 0.0, %v498
      %v500 = vpop.f32.mrf.mxu0
      %v501 = vadd.f32 0.0, %v500
      %v502 = vpop.f32.mrf.mxu0
      %v503 = vadd.f32 0.0, %v502
      %v504 = vpop.f32.mrf.mxu0
      %v505 = vadd.f32 0.0, %v504
      %506 = vdwg.mxu0
      %v507 = vpack.c.bf16 %v440, %v436
      %v508 = vpack.c.bf16 %v442, %v438
      %v509 = vpack.c.bf16 %v493, %v489
      %v510 = vpack.c.bf16 %v495, %v491
      %v511 = vpack.c.bf16 %v450, %v446
      %v512 = vpack.c.bf16 %v452, %v448
      %v513 = vpack.c.bf16 %v503, %v499
      %v514 = vpack.c.bf16 %v505, %v501
      %v523 = vunpack.c.l.b16 %v507
      %v524 = vunpack.c.l.b16 %v508
      %v525 = vunpack.c.l.b16 %v509
      %v526 = vunpack.c.l.b16 %v510
      %v527 = vunpack.c.h.b16 %v507
      %v528 = vunpack.c.h.b16 %v508
      %v529 = vunpack.c.h.b16 %v509
      %v530 = vunpack.c.h.b16 %v510
      %v531 = vunpack.c.l.b16 %v511
      %v532 = vunpack.c.l.b16 %v512
      %v533 = vunpack.c.l.b16 %v513
      %v534 = vunpack.c.l.b16 %v514
      %v535 = vunpack.c.h.b16 %v511
      %v536 = vunpack.c.h.b16 %v512
      %v537 = vunpack.c.h.b16 %v513
      %v538 = vunpack.c.h.b16 %v514
      %v539 = vpack.c.b16 %v524, %v523
      %v540 = vpack.c.b16 %v526, %v525
      %v541 = vpack.c.b16 %v528, %v527
      %v542 = vpack.c.b16 %v530, %v529
      %v543 = vpack.c.b16 %v532, %v531
      %v544 = vpack.c.b16 %v534, %v533
      %v545 = vpack.c.b16 %v536, %v535
      %v546 = vpack.c.b16 %v538, %v537
      %555 = vst [vmem:[%s205] sm:$0xff] %v539
      %556 = vst [vmem:[%s205 + $0x8] sm:$0xff] %v540
      %557 = vst [vmem:[%s205 + $0x10] sm:$0xff] %v541
      %558 = vst [vmem:[%s205 + $0x18] sm:$0xff] %v542
      %559 = vst [vmem:[%s205 + $0x20] sm:$0xff] %v543
      %560 = vst [vmem:[%s205 + $0x28] sm:$0xff] %v544
      %561 = vst [vmem:[%s205 + $0x30] sm:$0xff] %v545
      %562 = vst [vmem:[%s205 + $0x38] sm:$0xff] %v546
      %v563 = vld [vmem:[%s2] sm:$0xf]
      %v565 = vlaneseq
      %v566 = vshrl.u32 %v565, 7
      %v567 = vsub.s32 0, %v566
      %v568 = vrot.slane %v563, %v567
      %v569 = vlaneseq
      %v570 = vshrl.u32 %v569, 7
      %v571 = vsub.s32 1, %v570
      %v572 = vrot.slane %v563, %v571
      %v573 = vlaneseq
      %v574 = vshrl.u32 %v573, 7
      %v575 = vsub.s32 2, %v574
      %v576 = vrot.slane %v563, %v575
      %v577 = vlaneseq
      %v578 = vshrl.u32 %v577, 7
      %v579 = vsub.s32 3, %v578
      %v580 = vrot.slane %v563, %v579
      %v585 = vmul.f32 %v436, %v568
      %v586 = vmul.f32 %v438, %v572
      %v587 = vmul.f32 %v489, %v576
      %v588 = vmul.f32 %v491, %v580
      %v589 = vmul.f32 %v440, %v568
      %v590 = vmul.f32 %v442, %v572
      %v591 = vmul.f32 %v493, %v576
      %v592 = vmul.f32 %v495, %v580
      %v593 = vmul.f32 %v446, %v568
      %v594 = vmul.f32 %v448, %v572
      %v595 = vmul.f32 %v499, %v576
      %v596 = vmul.f32 %v501, %v580
      %v597 = vmul.f32 %v450, %v568
      %v598 = vmul.f32 %v452, %v572
      %v599 = vmul.f32 %v503, %v576
      %v600 = vmul.f32 %v505, %v580
      %v601 = vadd.f32 %v585, %v586
      %v602 = vadd.f32 %v601, %v587
      %v603 = vadd.f32 %v602, %v588
      %604 = vadd.xlane.f32.xlu0 %v603
      %v605 = vpop.xlane.xlu0 %604
      %v606 = vadd.f32 %v589, %v590
      %v607 = vadd.f32 %v606, %v591
      %v608 = vadd.f32 %v607, %v592
      %609 = vadd.xlane.f32.xlu0 %v608
      %v610 = vpop.xlane.xlu0 %609
      %v611 = vadd.f32 %v593, %v594
      %v612 = vadd.f32 %v611, %v595
      %v613 = vadd.f32 %v612, %v596
      %614 = vadd.xlane.f32.xlu0 %v613
      %v615 = vpop.xlane.xlu0 %614
      %v616 = vadd.f32 %v597, %v598
      %v617 = vadd.f32 %v616, %v599
      %v618 = vadd.f32 %v617, %v600
      %619 = vadd.xlane.f32.xlu0 %v618
      %v620 = vpop.xlane.xlu0 %619
      %v621 = vmul.f32 %v585, %v436
      %v622 = vmul.f32 %v586, %v438
      %v623 = vmul.f32 %v587, %v489
      %v624 = vmul.f32 %v588, %v491
      %v625 = vmul.f32 %v589, %v440
      %v626 = vmul.f32 %v590, %v442
      %v627 = vmul.f32 %v591, %v493
      %v628 = vmul.f32 %v592, %v495
      %v629 = vmul.f32 %v593, %v446
      %v630 = vmul.f32 %v594, %v448
      %v631 = vmul.f32 %v595, %v499
      %v632 = vmul.f32 %v596, %v501
      %v633 = vmul.f32 %v597, %v450
      %v634 = vmul.f32 %v598, %v452
      %v635 = vmul.f32 %v599, %v503
      %v636 = vmul.f32 %v600, %v505
      %v637 = vadd.f32 %v621, %v622
      %v638 = vadd.f32 %v637, %v623
      %v639 = vadd.f32 %v638, %v624
      %640 = vadd.xlane.f32.xlu0 %v639
      %v641 = vpop.xlane.xlu0 %640
      %v642 = vadd.f32 %v625, %v626
      %v643 = vadd.f32 %v642, %v627
      %v644 = vadd.f32 %v643, %v628
      %645 = vadd.xlane.f32.xlu0 %v644
      %v646 = vpop.xlane.xlu0 %645
      %v647 = vadd.f32 %v629, %v630
      %v648 = vadd.f32 %v647, %v631
      %v649 = vadd.f32 %v648, %v632
      %650 = vadd.xlane.f32.xlu0 %v649
      %v651 = vpop.xlane.xlu0 %650
      %v652 = vadd.f32 %v633, %v634
      %v653 = vadd.f32 %v652, %v635
      %v654 = vadd.f32 %v653, %v636
      %655 = vadd.xlane.f32.xlu0 %v654
      %v656 = vpop.xlane.xlu0 %655
      %vm657 = vcmask 7168
      %v658 = vsel %vm657, %v605, %v641
      %v659 = vsel %vm657, %v610, %v646
      %v660 = vsel %vm657, %v615, %v651
      %v661 = vsel %vm657, %v620, %v656
      %vm662 = vcmask 15360
      %663 = vst.msk [vmem:[%s210] sm:$0xff] %vm662, %v658
      %664 = vst.msk [vmem:[%s210 + $0x8] sm:$0xff] %vm662, %v659
      %665 = vst.msk [vmem:[%s210 + $0x10] sm:$0xff] %vm662, %v660
      %666 = vst.msk [vmem:[%s210 + $0x18] sm:$0xff] %vm662, %v661
      %p667 = scmp.lt.s32.totalorder %s16, 1
      %s668 = scalar_select %p667, %s16, 1
      %s669 = smul.addr %s668, 16
      %s670 = smul.addr %s669, 4
      %s671 = scalar_lea.vmem %s3, %s670
      %p672 = scmp.lt.s32.totalorder %s16, 1
      %s673 = scalar_select %p672, %s16, 1
      %s674 = smul.addr %s673, 4
      %s675 = smul.addr %s674, 8
      %s676 = scalar_lea.vmem %s4, %s675
      // Predicated region
      $region33: #{decoder_forward.3} parent=31 // pred_check
        %p677 = pneg %p102
      $region34: #{decoder_forward.3} parent=31 // pred_check_branch
        %679 = sbr.rel (%p677) target = $region36
      $region35: #{decoder_forward.3} parent=31 // pred_region
        _
      $region36: #{decoder_forward.3} parent=31 // pred_fallthru
        _
      // Predicated region
      $region37: #{decoder_forward.3} parent=31 // pred_check
        %p680 = pneg %p128
      $region38: #{decoder_forward.3} parent=31 // pred_check_branch
        %682 = sbr.rel (%p680) target = $region40
      $region39: #{decoder_forward.3} parent=31 // pred_region
        _
      $region40: #{decoder_forward.3} parent=31 // pred_fallthru
        _
    $region32: #{decoder_forward.3} parent=5 // pred_fallthru
      _
    %p683 = scmp.le.s32.totalorder 2, %s11
    // Predicated region
    $region41: #{decoder_forward.3} parent=5 // pred_check
      %p684 = pneg %p683
    $region42: #{decoder_forward.3} parent=5 // pred_check_branch
      %686 = sbr.rel (%p684) target = $region44
    $region43: #{decoder_forward.3} parent=5 // pred_region
      %s687 = ssub.s32 %s11, 2
      // Predicated region
      $region45: #{decoder_forward.3} parent=43 // pred_check
        %p688 = pneg %p108
      $region46: #{decoder_forward.3} parent=43 // pred_check_branch
        %690 = sbr.rel (%p688) target = $region48
      $region47: #{decoder_forward.3} parent=43 // pred_region
        %p691 = scmp.lt.s32.totalorder %s17, 1
        %s692 = scalar_select %p691, %s17, 1
        %s693 = smul.addr %s692, 16
        %s694 = smul.addr %s693, 4
        %s695 = scalar_lea.vmem %s3, %s694
      $region48: #{decoder_forward.3} parent=43 // pred_fallthru
        _
      // Predicated region
      $region49: #{decoder_forward.3} parent=43 // pred_check
        %p696 = pneg %p134
      $region50: #{decoder_forward.3} parent=43 // pred_check_branch
        %698 = sbr.rel (%p696) target = $region52
      $region51: #{decoder_forward.3} parent=43 // pred_region
        %p699 = scmp.lt.s32.totalorder %s17, 1
        %s700 = scalar_select %p699, %s17, 1
        %s701 = smul.addr %s700, 4
        %s702 = smul.addr %s701, 8
        %s703 = scalar_lea.vmem %s4, %s702
      $region52: #{decoder_forward.3} parent=43 // pred_fallthru
        _
    $region44: #{decoder_forward.3} parent=5 // pred_fallthru
      _
  $region6: #{decoder_forward.3} parent=0 // loop_footer
    %s15 = sadd.s32 1, %s11
  $region7: #{decoder_forward.3} parent=0 // loop_footer_branch
    %10 = sbr.rel target = $region3
  $region8: #{decoder_forward.3} parent=0 // loop_exit
    _

// kernel: decoder_forward.4
$region0: #{decoder_forward.4}
  #allocation0 [shape = 'u32[]', space=smem, size = 0x4, offset = 0x4, fixed_abs, tag = 'smem constant byte address 0x4 - core index']
  #allocation1 [shape = 'u32[144,128]{1,0:T(1,128)}', space=vmem, size = 0x12000, scoped, tag = 'internal scratch']
  %s0 = inlined_call_operand.vmem [shape: bf16[2,32,512], index: 0, kind: input, shape index: {}]
  %s1 = inlined_call_operand.vmem [shape: f32[32,1], index: 1, kind: input, shape index: {}]
  %s2 = inlined_call_operand.vmem [shape: f32[32,1], index: 2, kind: input, shape index: {}]
  %s3 = inlined_call_operand.vmem [shape: f32[1,512], index: 3, kind: input, shape index: {}]
  %s4 = inlined_call_operand.vmem [shape: bf16[128,72], index: 4, kind: input, shape index: {}]
  %s5 = inlined_call_operand.vmem [shape: bf16[2,128,512], index: 5, kind: output, shape index: {0}]
  %s6 = inlined_call_operand.vmem [shape: f32[2,128,2], index: 6, kind: output, shape index: {1}]
  %7 = xla_tuple %s5, %s6
  %s8 = sld [smem:[#allocation0]]
  $region61: #{decoder_forward.4} parent=0
    _
  %s10 = ssub.s32 1, %s8
  %s11 = scalar_select 0, %s10, %s8
  loop: start=0, step=1, limit=4
  $region2: #{decoder_forward.4} parent=0 // loop_pre_header
    _
  $region3: #{decoder_forward.4} parent=0 // loop_header
    %s13 = sphi 0, %s17
    %p14 = scmp.ge.s32.totalorder %s13, 4
    %s23 = sphi 0, %s25
    %s26 = sphi 0, %s23
    %s27 = sphi 0, %s26
    %s43 = sphi 0, %s27
    %s47 = sphi 0, %s47
    %s49 = sphi 0, %s47
    %s50 = sphi 0, %s49
    %s64 = sphi 0, %s50
    %s68 = sphi 0, %s68
    %s70 = sphi 0, %s68
    %s71 = sphi 0, %s70
    %s85 = sphi 0, %s71
    %s89 = sphi 0, %s89
    %s91 = sphi 0, %s89
    %s92 = sphi 0, %s91
    %s106 = sphi 0, %s92
    %s110 = sphi 0, %s110
    %s112 = sphi 0, %s110
    %s113 = sphi 0, %s112
    %s127 = sphi 0, %s113
    %s133 = sphi 0, %s135
    %s136 = sphi 0, %s133
    %s137 = sphi 0, %s136
    %s153 = sphi 0, %s137
    %s159 = sphi 0, %s161
    %s162 = sphi 0, %s159
    %s163 = sphi 0, %s162
    %s179 = sphi 0, %s163
  $region4: #{decoder_forward.4} parent=0 // loop_header_branch
    %16 = sbr.rel (%p14) target = $region8
  $region5: #{decoder_forward.4} parent=0 // loop_body
    %s18 = ssub.s32 %s13, 1
    %s19 = ssub.s32 %s13, 2
    %s20 = sadd.s32 %s13, 1
    %s21 = ssub.s32 %s13, %s20
    %p22 = scmp.eq.s32.totalorder %s21, 0
    %s24 = sadd.s32 %s23, 1
    %s25 = scalar_select %p22, %s23, %s24
    %p28 = pneg %p22
    %p29 = scmp.eq.s32.totalorder %s13, 1
    %p30 = por %p28, %p29
    %p31 = scmp.ne.s32.totalorder %s23, %s26
    %p32 = scmp.eq.s32.totalorder %s13, 0
    %p33 = por %p31, %p32
    %p34 = scmp.ne.s32.totalorder %s23, %s26
    %p35 = scmp.eq.s32.totalorder %s18, 1
    %p36 = por %p34, %p35
    %p37 = scmp.ne.s32.totalorder %s26, %s27
    %p38 = scmp.eq.s32.totalorder %s18, 0
    %p39 = por %p37, %p38
    %p40 = scmp.ne.s32.totalorder %s26, %s27
    %p41 = scmp.eq.s32.totalorder %s19, 1
    %p42 = por %p40, %p41
    %p44 = scmp.ne.s32.totalorder %s27, %s43
    %p45 = scmp.eq.s32.totalorder %s19, 0
    %p46 = por %p44, %p45
    %s48 = sadd.s32 %s47, 1
    %p51 = scmp.eq.s32.totalorder %s13, 1
    %p52 = scmp.ne.s32.totalorder %s47, %s49
    %p53 = scmp.eq.s32.totalorder %s13, 0
    %p54 = por %p52, %p53
    %p55 = scmp.ne.s32.totalorder %s47, %s49
    %p56 = scmp.eq.s32.totalorder %s18, 1
    %p57 = por %p55, %p56
    %p58 = scmp.ne.s32.totalorder %s49, %s50
    %p59 = scmp.eq.s32.totalorder %s18, 0
    %p60 = por %p58, %p59
    %p61 = scmp.ne.s32.totalorder %s49, %s50
    %p62 = scmp.eq.s32.totalorder %s19, 1
    %p63 = por %p61, %p62
    %p65 = scmp.ne.s32.totalorder %s50, %s64
    %p66 = scmp.eq.s32.totalorder %s19, 0
    %p67 = por %p65, %p66
    %s69 = sadd.s32 %s68, 1
    %p72 = scmp.eq.s32.totalorder %s13, 1
    %p73 = scmp.ne.s32.totalorder %s68, %s70
    %p74 = scmp.eq.s32.totalorder %s13, 0
    %p75 = por %p73, %p74
    %p76 = scmp.ne.s32.totalorder %s68, %s70
    %p77 = scmp.eq.s32.totalorder %s18, 1
    %p78 = por %p76, %p77
    %p79 = scmp.ne.s32.totalorder %s70, %s71
    %p80 = scmp.eq.s32.totalorder %s18, 0
    %p81 = por %p79, %p80
    %p82 = scmp.ne.s32.totalorder %s70, %s71
    %p83 = scmp.eq.s32.totalorder %s19, 1
    %p84 = por %p82, %p83
    %p86 = scmp.ne.s32.totalorder %s71, %s85
    %p87 = scmp.eq.s32.totalorder %s19, 0
    %p88 = por %p86, %p87
    %s90 = sadd.s32 %s89, 1
    %p93 = scmp.eq.s32.totalorder %s13, 1
    %p94 = scmp.ne.s32.totalorder %s89, %s91
    %p95 = scmp.eq.s32.totalorder %s13, 0
    %p96 = por %p94, %p95
    %p97 = scmp.ne.s32.totalorder %s89, %s91
    %p98 = scmp.eq.s32.totalorder %s18, 1
    %p99 = por %p97, %p98
    %p100 = scmp.ne.s32.totalorder %s91, %s92
    %p101 = scmp.eq.s32.totalorder %s18, 0
    %p102 = por %p100, %p101
    %p103 = scmp.ne.s32.totalorder %s91, %s92
    %p104 = scmp.eq.s32.totalorder %s19, 1
    %p105 = por %p103, %p104
    %p107 = scmp.ne.s32.totalorder %s92, %s106
    %p108 = scmp.eq.s32.totalorder %s19, 0
    %p109 = por %p107, %p108
    %s111 = sadd.s32 %s110, 1
    %p114 = scmp.eq.s32.totalorder %s13, 1
    %p115 = scmp.ne.s32.totalorder %s110, %s112
    %p116 = scmp.eq.s32.totalorder %s13, 0
    %p117 = por %p115, %p116
    %p118 = scmp.ne.s32.totalorder %s110, %s112
    %p119 = scmp.eq.s32.totalorder %s18, 1
    %p120 = por %p118, %p119
    %p121 = scmp.ne.s32.totalorder %s112, %s113
    %p122 = scmp.eq.s32.totalorder %s18, 0
    %p123 = por %p121, %p122
    %p124 = scmp.ne.s32.totalorder %s112, %s113
    %p125 = scmp.eq.s32.totalorder %s19, 1
    %p126 = por %p124, %p125
    %p128 = scmp.ne.s32.totalorder %s113, %s127
    %p129 = scmp.eq.s32.totalorder %s19, 0
    %p130 = por %p128, %p129
    %s131 = ssub.s32 %s13, %s20
    %p132 = scmp.eq.s32.totalorder %s131, 0
    %s134 = sadd.s32 %s133, 1
    %s135 = scalar_select %p132, %s133, %s134
    %p138 = pneg %p132
    %p139 = scmp.eq.s32.totalorder %s13, 1
    %p140 = por %p138, %p139
    %p141 = scmp.ne.s32.totalorder %s133, %s136
    %p142 = scmp.eq.s32.totalorder %s13, 0
    %p143 = por %p141, %p142
    %p144 = scmp.ne.s32.totalorder %s133, %s136
    %p145 = scmp.eq.s32.totalorder %s18, 1
    %p146 = por %p144, %p145
    %p147 = scmp.ne.s32.totalorder %s136, %s137
    %p148 = scmp.eq.s32.totalorder %s18, 0
    %p149 = por %p147, %p148
    %p150 = scmp.ne.s32.totalorder %s136, %s137
    %p151 = scmp.eq.s32.totalorder %s19, 1
    %p152 = por %p150, %p151
    %p154 = scmp.ne.s32.totalorder %s137, %s153
    %p155 = scmp.eq.s32.totalorder %s19, 0
    %p156 = por %p154, %p155
    %s157 = ssub.s32 %s13, %s20
    %p158 = scmp.eq.s32.totalorder %s157, 0
    %s160 = sadd.s32 %s159, 1
    %s161 = scalar_select %p158, %s159, %s160
    %p164 = pneg %p158
    %p165 = scmp.eq.s32.totalorder %s13, 1
    %p166 = por %p164, %p165
    %p167 = scmp.ne.s32.totalorder %s159, %s162
    %p168 = scmp.eq.s32.totalorder %s13, 0
    %p169 = por %p167, %p168
    %p170 = scmp.ne.s32.totalorder %s159, %s162
    %p171 = scmp.eq.s32.totalorder %s18, 1
    %p172 = por %p170, %p171
    %p173 = scmp.ne.s32.totalorder %s162, %s163
    %p174 = scmp.eq.s32.totalorder %s18, 0
    %p175 = por %p173, %p174
    %p176 = scmp.ne.s32.totalorder %s162, %s163
    %p177 = scmp.eq.s32.totalorder %s19, 1
    %p178 = por %p176, %p177
    %p180 = scmp.ne.s32.totalorder %s163, %s179
    %p181 = scmp.eq.s32.totalorder %s19, 0
    %p182 = por %p180, %p181
    %p183 = scmp.le.s32.totalorder 1, %s13
    %p184 = scmp.lt.s32.totalorder %s13, 3
    %p185 = pnand %p183, %p184
    %p186 = pneg %p185
    // Predicated region
    $region9: #{decoder_forward.4} parent=5 // pred_check
      _
    $region10: #{decoder_forward.4} parent=5 // pred_check_branch
      %188 = sbr.rel (%p185) target = $region12
    $region11: #{decoder_forward.4} parent=5 // pred_region
      %s189 = ssub.s32 %s13, 1
      // Predicated region
      $region13: #{decoder_forward.4} parent=11 // pred_check
        %p190 = pneg %p60
      $region14: #{decoder_forward.4} parent=11 // pred_check_branch
        %192 = sbr.rel (%p190) target = $region16
      $region15: #{decoder_forward.4} parent=11 // pred_region
        _
      $region16: #{decoder_forward.4} parent=11 // pred_fallthru
        _
      // Predicated region
      $region17: #{decoder_forward.4} parent=11 // pred_check
        %p193 = pneg %p81
      $region18: #{decoder_forward.4} parent=11 // pred_check_branch
        %195 = sbr.rel (%p193) target = $region20
      $region19: #{decoder_forward.4} parent=11 // pred_region
        _
      $region20: #{decoder_forward.4} parent=11 // pred_fallthru
        _
      // Predicated region
      $region21: #{decoder_forward.4} parent=11 // pred_check
        %p196 = pneg %p102
      $region22: #{decoder_forward.4} parent=11 // pred_check_branch
        %198 = sbr.rel (%p196) target = $region24
      $region23: #{decoder_forward.4} parent=11 // pred_region
        _
      $region24: #{decoder_forward.4} parent=11 // pred_fallthru
        _
      // Predicated region
      $region25: #{decoder_forward.4} parent=11 // pred_check
        %p199 = pneg %p123
      $region26: #{decoder_forward.4} parent=11 // pred_check_branch
        %201 = sbr.rel (%p199) target = $region28
      $region27: #{decoder_forward.4} parent=11 // pred_region
        _
      $region28: #{decoder_forward.4} parent=11 // pred_fallthru
        _
    $region12: #{decoder_forward.4} parent=5 // pred_fallthru
      _
    %p202 = scmp.lt.s32.totalorder %s13, 2
    // Predicated region
    $region29: #{decoder_forward.4} parent=5 // pred_check
      %p203 = pneg %p202
    $region30: #{decoder_forward.4} parent=5 // pred_check_branch
      %205 = sbr.rel (%p203) target = $region32
    $region31: #{decoder_forward.4} parent=5 // pred_region
      // Predicated region
      $region33: #{decoder_forward.4} parent=31 // pred_check
        %p206 = pneg %p33
      $region34: #{decoder_forward.4} parent=31 // pred_check_branch
        %208 = sbr.rel (%p206) target = $region36
      $region35: #{decoder_forward.4} parent=31 // pred_region
        %p209 = scmp.lt.s32.totalorder %s13, 1
        %s210 = scalar_select %p209, %s13, 1
        %s211 = smul.addr %s210, 16
        %s212 = smul.addr %s211, 4
        %s213 = scalar_lea.vmem %s0, %s212
      $region36: #{decoder_forward.4} parent=31 // pred_fallthru
        _
    $region32: #{decoder_forward.4} parent=5 // pred_fallthru
      _
    %p214 = scmp.le.s32.totalorder 1, %s13
    %p215 = scmp.lt.s32.totalorder %s13, 3
    %p216 = pnand %p214, %p215
    %p217 = pneg %p216
    // Predicated region
    $region37: #{decoder_forward.4} parent=5 // pred_check
      _
    $region38: #{decoder_forward.4} parent=5 // pred_check_branch
      %219 = sbr.rel (%p216) target = $region40
    $region39: #{decoder_forward.4} parent=5 // pred_region
      %s220 = ssub.s32 %s13, 1
      %p221 = scmp.lt.s32.totalorder %s18, 1
      %s222 = scalar_select %p221, %s18, 1
      %s223 = smul.addr %s222, 16
      %s224 = smul.addr %s223, 4
      %s225 = scalar_lea.vmem %s0, %s224
      %p226 = pneg %p39
      %p227 = pneg %p36
      %p228 = pneg %p60
      %p229 = pneg %p57
      %p230 = pneg %p81
      %p231 = pneg %p78
      %p232 = pneg %p102
      %p233 = pneg %p99
      %p234 = pneg %p123
      %p235 = pneg %p120
      %p236 = pneg %p149
      %p237 = pneg %p146
      %p238 = scmp.lt.s32.totalorder %s18, 1
      %s239 = scalar_select %p238, %s18, 1
      %s240 = smul.addr %s239, 64
      %s241 = smul.addr %s240, 4
      %s242 = scalar_lea.vmem %s5, %s241
      %p243 = pneg %p175
      %p244 = pneg %p172
      %p245 = scmp.lt.s32.totalorder %s18, 1
      %s246 = scalar_select %p245, %s18, 1
      %s247 = smul.addr %s246, 16
      %s248 = smul.addr %s247, 8
      %s249 = scalar_lea.vmem %s6, %s248
      %p250 = scmp.lt.s32.totalorder %s18, 1
      %s251 = scalar_select %p250, %s18, 1
      %s252 = smul.addr %s251, 16
      %s253 = smul.addr %s252, 4
      %s254 = scalar_lea.vmem %s0, %s253
      %p255 = scmp.lt.s32.totalorder %s18, 1
      %s256 = scalar_select %p255, %s18, 1
      %s257 = smul.addr %s256, 64
      %s258 = smul.addr %s257, 4
      %s259 = scalar_lea.vmem %s5, %s258
      %p260 = scmp.lt.s32.totalorder %s18, 1
      %s261 = scalar_select %p260, %s18, 1
      %s262 = smul.addr %s261, 16
      %s263 = smul.addr %s262, 8
      %s264 = scalar_lea.vmem %s6, %s263
      %v266 = vld [vmem:[%s254] sm:$0xff]
      %v267 = vld [vmem:[%s254 + $0x8] sm:$0xff]
      %v268 = vld [vmem:[%s254 + $0x10] sm:$0xff]
      %v269 = vld [vmem:[%s254 + $0x18] sm:$0xff]
      %v270 = vld [vmem:[%s254 + $0x20] sm:$0xff]
      %v271 = vld [vmem:[%s254 + $0x28] sm:$0xff]
      %v272 = vld [vmem:[%s254 + $0x30] sm:$0xff]
      %v273 = vld [vmem:[%s254 + $0x38] sm:$0xff]
      %v274 = vunpack.c.l.bf16 %v266
      %v275 = vunpack.c.h.bf16 %v266
      %v276 = vunpack.c.l.bf16 %v267
      %v277 = vunpack.c.h.bf16 %v267
      %v278 = vunpack.c.l.bf16 %v268
      %v279 = vunpack.c.h.bf16 %v268
      %v280 = vunpack.c.l.bf16 %v269
      %v281 = vunpack.c.h.bf16 %v269
      %v282 = vunpack.c.l.bf16 %v270
      %v283 = vunpack.c.h.bf16 %v270
      %v284 = vunpack.c.l.bf16 %v271
      %v285 = vunpack.c.h.bf16 %v271
      %v286 = vunpack.c.l.bf16 %v272
      %v287 = vunpack.c.h.bf16 %v272
      %v288 = vunpack.c.l.bf16 %v273
      %v289 = vunpack.c.h.bf16 %v273
      %v290 = vld [vmem:[%s1] sm:$0xff]
      %v291 = vld [vmem:[%s1 + $0x8] sm:$0xff]
      %v292 = vld [vmem:[%s1 + $0x10] sm:$0xff]
      %v293 = vld [vmem:[%s1 + $0x18] sm:$0xff]
      %295 = vset.pattern.permute.xlu0 0
      %296 = vperm.xlu0 %295, %v290
      %v297 = vpop.permute.xlu0 %296
      %300 = vset.pattern.permute.xlu0 0
      %301 = vperm.xlu0 %300, %v291
      %v302 = vpop.permute.xlu0 %301
      %305 = vset.pattern.permute.xlu0 0
      %306 = vperm.xlu0 %305, %v292
      %v307 = vpop.permute.xlu0 %306
      %310 = vset.pattern.permute.xlu0 0
      %311 = vperm.xlu0 %310, %v293
      %v312 = vpop.permute.xlu0 %311
      %v314 = vmul.f32 %v274, %v297
      %v315 = vmul.f32 %v275, %v297
      %v316 = vmul.f32 %v276, %v297
      %v317 = vmul.f32 %v277, %v297
      %v318 = vmul.f32 %v278, %v302
      %v319 = vmul.f32 %v279, %v302
      %v320 = vmul.f32 %v280, %v302
      %v321 = vmul.f32 %v281, %v302
      %v322 = vmul.f32 %v282, %v307
      %v323 = vmul.f32 %v283, %v307
      %v324 = vmul.f32 %v284, %v307
      %v325 = vmul.f32 %v285, %v307
      %v326 = vmul.f32 %v286, %v312
      %v327 = vmul.f32 %v287, %v312
      %v328 = vmul.f32 %v288, %v312
      %v329 = vmul.f32 %v289, %v312
      %v330 = vld [vmem:[%s2] sm:$0xff]
      %v331 = vld [vmem:[%s2 + $0x8] sm:$0xff]
      %v332 = vld [vmem:[%s2 + $0x10] sm:$0xff]
      %v333 = vld [vmem:[%s2 + $0x18] sm:$0xff]
      %335 = vset.pattern.permute.xlu0 0
      %336 = vperm.xlu0 %335, %v330
      %v337 = vpop.permute.xlu0 %336
      %340 = vset.pattern.permute.xlu0 0
      %341 = vperm.xlu0 %340, %v331
      %v342 = vpop.permute.xlu0 %341
      %345 = vset.pattern.permute.xlu0 0
      %346 = vperm.xlu0 %345, %v332
      %v347 = vpop.permute.xlu0 %346
      %350 = vset.pattern.permute.xlu0 0
      %351 = vperm.xlu0 %350, %v333
      %v352 = vpop.permute.xlu0 %351
      %v354 = vadd.f32 %v314, %v337
      %v355 = vadd.f32 %v315, %v337
      %v356 = vadd.f32 %v316, %v337
      %v357 = vadd.f32 %v317, %v337
      %v358 = vadd.f32 %v318, %v342
      %v359 = vadd.f32 %v319, %v342
      %v360 = vadd.f32 %v320, %v342
      %v361 = vadd.f32 %v321, %v342
      %v362 = vadd.f32 %v322, %v347
      %v363 = vadd.f32 %v323, %v347
      %v364 = vadd.f32 %v324, %v347
      %v365 = vadd.f32 %v325, %v347
      %v366 = vadd.f32 %v326, %v352
      %v367 = vadd.f32 %v327, %v352
      %v368 = vadd.f32 %v328, %v352
      %v369 = vadd.f32 %v329, %v352
      %v370 = vmax.f32 %v354, 0.0
      %v371 = vmax.f32 %v355, 0.0
      %v372 = vmax.f32 %v356, 0.0
      %v373 = vmax.f32 %v357, 0.0
      %v374 = vmax.f32 %v358, 0.0
      %v375 = vmax.f32 %v359, 0.0
      %v376 = vmax.f32 %v360, 0.0
      %v377 = vmax.f32 %v361, 0.0
      %v378 = vmax.f32 %v362, 0.0
      %v379 = vmax.f32 %v363, 0.0
      %v380 = vmax.f32 %v364, 0.0
      %v381 = vmax.f32 %v365, 0.0
      %v382 = vmax.f32 %v366, 0.0
      %v383 = vmax.f32 %v367, 0.0
      %v384 = vmax.f32 %v368, 0.0
      %v385 = vmax.f32 %v369, 0.0
      %v386 = vld [vmem:[%s3] sm:$0xf]
      %v388 = vlaneseq
      %v389 = vshrl.u32 %v388, 7
      %v390 = vsub.s32 0, %v389
      %v391 = vrot.slane %v386, %v390
      %v392 = vlaneseq
      %v393 = vshrl.u32 %v392, 7
      %v394 = vsub.s32 1, %v393
      %v395 = vrot.slane %v386, %v394
      %v396 = vlaneseq
      %v397 = vshrl.u32 %v396, 7
      %v398 = vsub.s32 2, %v397
      %v399 = vrot.slane %v386, %v398
      %v400 = vlaneseq
      %v401 = vshrl.u32 %v400, 7
      %v402 = vsub.s32 3, %v401
      %v403 = vrot.slane %v386, %v402
      %v408 = vmul.f32 %v370, %v391
      %v409 = vmul.f32 %v371, %v395
      %v410 = vmul.f32 %v372, %v399
      %v411 = vmul.f32 %v373, %v403
      %v412 = vmul.f32 %v374, %v391
      %v413 = vmul.f32 %v375, %v395
      %v414 = vmul.f32 %v376, %v399
      %v415 = vmul.f32 %v377, %v403
      %v416 = vmul.f32 %v378, %v391
      %v417 = vmul.f32 %v379, %v395
      %v418 = vmul.f32 %v380, %v399
      %v419 = vmul.f32 %v381, %v403
      %v420 = vmul.f32 %v382, %v391
      %v421 = vmul.f32 %v383, %v395
      %v422 = vmul.f32 %v384, %v399
      %v423 = vmul.f32 %v385, %v403
      %429 = vrot.lane.b32.xlu0 %v408, 127
      %v430 = vpop.permute.xlu0 %429
      %431 = vrot.lane.b32.xlu0 %v409, 127
      %v432 = vpop.permute.xlu0 %431
      %433 = vrot.lane.b32.xlu0 %v410, 127
      %v434 = vpop.permute.xlu0 %433
      %435 = vrot.lane.b32.xlu0 %v411, 127
      %v436 = vpop.permute.xlu0 %435
      %437 = vrot.lane.b32.xlu0 0.0, 127
      %v438 = vpop.permute.xlu0 %437
      %vm439 = vcmask 1039360
      %v440 = vsel %vm439, %v430, %v432
      %v441 = vsel %vm439, %v432, %v434
      %v442 = vsel %vm439, %v434, %v436
      %v443 = vsel %vm439, %v436, %v438
      %452 = vrot.lane.b32.xlu0 %v416, 127
      %v453 = vpop.permute.xlu0 %452
      %454 = vrot.lane.b32.xlu0 %v417, 127
      %v455 = vpop.permute.xlu0 %454
      %456 = vrot.lane.b32.xlu0 %v418, 127
      %v457 = vpop.permute.xlu0 %456
      %458 = vrot.lane.b32.xlu0 %v419, 127
      %v459 = vpop.permute.xlu0 %458
      %v460 = vsel %vm439, %v453, %v455
      %v461 = vsel %vm439, %v455, %v457
      %v462 = vsel %vm439, %v457, %v459
      %v463 = vsel %vm439, %v459, %v438
      %468 = vrot.lane.b32.xlu0 %v408, 96
      %v469 = vpop.permute.xlu0 %468
      %470 = vrot.lane.b32.xlu0 %v409, 96
      %v471 = vpop.permute.xlu0 %470
      %472 = vrot.lane.b32.xlu0 %v410, 96
      %v473 = vpop.permute.xlu0 %472
      %474 = vrot.lane.b32.xlu0 %v411, 96
      %v475 = vpop.permute.xlu0 %474
      %476 = vrot.lane.b32.xlu0 0.0, 96
      %v477 = vpop.permute.xlu0 %476
      %vm478 = vcmask 785408
      %v479 = vsel %vm478, %v469, %v471
      %v480 = vsel %vm478, %v471, %v473
      %v481 = vsel %vm478, %v473, %v475
      %v482 = vsel %vm478, %v475, %v477
      %491 = vrot.lane.b32.xlu0 %v412, 96
      %v492 = vpop.permute.xlu0 %491
      %493 = vrot.lane.b32.xlu0 %v413, 96
      %v494 = vpop.permute.xlu0 %493
      %495 = vrot.lane.b32.xlu0 %v414, 96
      %v496 = vpop.permute.xlu0 %495
      %497 = vrot.lane.b32.xlu0 %v415, 96
      %v498 = vpop.permute.xlu0 %497
      %v499 = vsel %vm478, %v492, %v494
      %v500 = vsel %vm478, %v494, %v496
      %v501 = vsel %vm478, %v496, %v498
      %v502 = vsel %vm478, %v498, %v477
      %507 = vrot.lane.b32.xlu0 %v408, 95
      %v508 = vpop.permute.xlu0 %507
      %509 = vrot.lane.b32.xlu0 %v409, 95
      %v510 = vpop.permute.xlu0 %509
      %511 = vrot.lane.b32.xlu0 %v410, 95
      %v512 = vpop.permute.xlu0 %511
      %513 = vrot.lane.b32.xlu0 %v411, 95
      %v514 = vpop.permute.xlu0 %513
      %515 = vrot.lane.b32.xlu0 0.0, 95
      %v516 = vpop.permute.xlu0 %515
      %vm517 = vcmask 777216
      %v518 = vsel %vm517, %v508, %v510
      %v519 = vsel %vm517, %v510, %v512
      %v520 = vsel %vm517, %v512, %v514
      %v521 = vsel %vm517, %v514, %v516
      %v526 = vpack.c.bf16 %v412, %v408
      %v527 = vpack.c.bf16 %v413, %v409
      %v528 = vpack.c.bf16 %v414, %v410
      %v529 = vpack.c.bf16 %v415, %v411
      %v530 = vpack.c.bf16 %v416, %v440
      %v531 = vpack.c.bf16 %v417, %v441
      %v532 = vpack.c.bf16 %v418, %v442
      %v533 = vpack.c.bf16 %v419, %v443
      %v534 = vpack.c.bf16 %v460, %v420
      %v535 = vpack.c.bf16 %v461, %v421
      %v536 = vpack.c.bf16 %v462, %v422
      %v537 = vpack.c.bf16 %v463, %v423
      %v538 = vpack.c.bf16 %v499, %v479
      %v539 = vpack.c.bf16 %v500, %v480
      %v540 = vpack.c.bf16 %v501, %v481
      %v541 = vpack.c.bf16 %v502, %v482
      %v542 = vpack.c.bf16 %v518, %v518
      %v543 = vpack.c.bf16 %v519, %v519
      %v544 = vpack.c.bf16 %v520, %v520
      %v545 = vpack.c.bf16 %v521, %v521
      %v546 = vld [vmem:[%s4] sm:$0xf]
      %v547 = vld [vmem:[%s4 + $0x4] sm:$0xf]
      %v548 = vld [vmem:[%s4 + $0x8] sm:$0xf]
      %v549 = vld [vmem:[%s4 + $0xc] sm:$0xf]
      %v550 = vld [vmem:[%s4 + $0x10] sm:$0xf]
      %v551 = vld [vmem:[%s4 + $0x14] sm:$0xf]
      %v552 = vld [vmem:[%s4 + $0x18] sm:$0xf]
      %v553 = vld [vmem:[%s4 + $0x1c] sm:$0xf]
      %v554 = vld [vmem:[%s4 + $0x20] sm:$0xf]
      %v555 = vld [vmem:[%s4 + $0x24] sm:$0xf]
      %v556 = vld [vmem:[%s4 + $0x28] sm:$0xf]
      %v557 = vld [vmem:[%s4 + $0x2c] sm:$0xf]
      %v558 = vld [vmem:[%s4 + $0x30] sm:$0xf]
      %v559 = vld [vmem:[%s4 + $0x34] sm:$0xf]
      %v560 = vld [vmem:[%s4 + $0x38] sm:$0xf]
      %v561 = vld [vmem:[%s4 + $0x3c] sm:$0xf]
      %v578 = vunpack.c.l.b16 %v546
      %v579 = vunpack.c.l.b16 %v547
      %v580 = vunpack.c.l.b16 %v548
      %v581 = vunpack.c.l.b16 %v549
      %v582 = vunpack.c.l.b16 %v550
      %v583 = vunpack.c.l.b16 %v551
      %v584 = vunpack.c.l.b16 %v552
      %v585 = vunpack.c.l.b16 %v553
      %v586 = vunpack.c.l.b16 %v554
      %v587 = vunpack.c.l.b16 %v555
      %v588 = vunpack.c.l.b16 %v556
      %v589 = vunpack.c.l.b16 %v557
      %v590 = vunpack.c.l.b16 %v558
      %v591 = vunpack.c.l.b16 %v559
      %v592 = vunpack.c.l.b16 %v560
      %v593 = vunpack.c.l.b16 %v561
      %v594 = vpack.c.b16 %v579, %v578
      %v595 = vpack.c.b16 %v581, %v580
      %v596 = vpack.c.b16 %v583, %v582
      %v597 = vpack.c.b16 %v585, %v584
      %v598 = vpack.c.b16 %v587, %v586
      %v599 = vpack.c.b16 %v589, %v588
      %v600 = vpack.c.b16 %v591, %v590
      %v601 = vpack.c.b16 %v593, %v592
      %vm602 = vcmask 588800
      %v604 = vsel %vm602, %v594, 0
      %v607 = vsel %vm602, %v595, 0
      %v610 = vsel %vm602, %v596, 0
      %v613 = vsel %vm602, %v597, 0
      %v616 = vsel %vm602, %v598, 0
      %v619 = vsel %vm602, %v599, 0
      %v622 = vsel %vm602, %v600, 0
      %v625 = vsel %vm602, %v601, 0
      %vm627 = vcmask 1043456
      %v629 = vsel %vm627, %v542, 0
      %v632 = vsel %vm627, %v543, 0
      %v635 = vsel %vm627, %v544, 0
      %v638 = vsel %vm627, %v545, 0
      %640 = vmatprep.subr.bf16.mxu0 0
      %641 = vmatpush1.bf16.msra.mxu0 0
      %642 = vmatprep.subr.bf16.mxu0 0
      %643 = vmatpush1.bf16.msra.mxu0 0
      %644 = vmatprep.subr.bf16.mxu0 0
      %645 = vmatpush1.bf16.msra.mxu0 0
      %646 = vmatprep.subr.bf16.mxu0 %v632
      %647 = vmatpush1.bf16.msra.mxu0 %v629
      %648 = vmatprep.subr.bf16.mxu0 %v539
      %649 = vmatpush1.bf16.msra.mxu0 %v538
      %650 = vmatprep.subr.bf16.mxu0 %v535
      %651 = vmatpush1.bf16.msra.mxu0 %v534
      %652 = vmatprep.subr.bf16.mxu0 %v531
      %653 = vmatpush1.bf16.msra.mxu0 %v530
      %654 = vmatprep.subr.bf16.mxu0 %v527
      %655 = vmatpush1.bf16.msra.mxu0 %v526
      %656 = vmatprep.subr.bf16.mxu0 0
      %657 = vmatpush2.bf16.msra.mxu0 0
      %658 = vmatprep.subr.bf16.mxu0 0
      %659 = vmatpush2.bf16.msra.mxu0 0
      %660 = vmatprep.subr.bf16.mxu0 0
      %661 = vmatpush2.bf16.msra.mxu0 0
      %662 = vmatprep.subr.bf16.mxu0 0
      %663 = vmatpush2.bf16.msra.mxu0 0
      %664 = vmatprep.subr.bf16.mxu0 0
      %665 = vmatpush2.bf16.msra.mxu0 0
      %666 = vmatprep.subr.bf16.mxu0 0
      %667 = vmatpush2.bf16.msra.mxu0 0
      %668 = vmatprep.subr.bf16.mxu0 0
      %669 = vmatpush2.bf16.msra.mxu0 0
      %670 = vmatprep.subr.bf16.mxu0 0
      %671 = vmatpush2.bf16.msra.mxu0 0
      %672 = vmatprep.mubr.bf16.mxu0 0
      %673 = vmatmul.mubr.bf16.gmra.mxu0 %v604
      %v674 = vpop.f32.mrf.mxu0
      %v675 = vadd.f32 0.0, %v674
      %v676 = vpop.f32.mrf.mxu0
      %v677 = vadd.f32 0.0, %v676
      %v678 = vpop.f32.mrf.mxu0
      %v679 = vadd.f32 0.0, %v678
      %v680 = vpop.f32.mrf.mxu0
      %v681 = vadd.f32 0.0, %v680
      %682 = vmatprep.mubr.bf16.mxu0 0
      %683 = vmatmul.mubr.bf16.gmra.mxu0 %v607
      %v684 = vpop.f32.mrf.mxu0
      %v685 = vadd.f32 0.0, %v684
      %v686 = vpop.f32.mrf.mxu0
      %v687 = vadd.f32 0.0, %v686
      %v688 = vpop.f32.mrf.mxu0
      %v689 = vadd.f32 0.0, %v688
      %v690 = vpop.f32.mrf.mxu0
      %v691 = vadd.f32 0.0, %v690
      %692 = vmatprep.mubr.bf16.mxu0 0
      %693 = vmatmul.mubr.bf16.gmra.mxu0 %v610
      %v694 = vpop.f32.mrf.mxu0
      %v695 = vadd.f32 0.0, %v694
      %v696 = vpop.f32.mrf.mxu0
      %v697 = vadd.f32 0.0, %v696
      %v698 = vpop.f32.mrf.mxu0
      %v699 = vadd.f32 0.0, %v698
      %v700 = vpop.f32.mrf.mxu0
      %v701 = vadd.f32 0.0, %v700
      %702 = vmatprep.mubr.bf16.mxu0 0
      %703 = vmatmul.mubr.bf16.gmra.mxu0 %v613
      %v704 = vpop.f32.mrf.mxu0
      %v705 = vadd.f32 0.0, %v704
      %v706 = vpop.f32.mrf.mxu0
      %v707 = vadd.f32 0.0, %v706
      %v708 = vpop.f32.mrf.mxu0
      %v709 = vadd.f32 0.0, %v708
      %v710 = vpop.f32.mrf.mxu0
      %v711 = vadd.f32 0.0, %v710
      %712 = vmatprep.mubr.bf16.mxu0 0
      %713 = vmatmul.mubr.bf16.gmra.mxu0 %v616
      %v714 = vpop.f32.mrf.mxu0
      %v715 = vadd.f32 0.0, %v714
      %v716 = vpop.f32.mrf.mxu0
      %v717 = vadd.f32 0.0, %v716
      %v718 = vpop.f32.mrf.mxu0
      %v719 = vadd.f32 0.0, %v718
      %v720 = vpop.f32.mrf.mxu0
      %v721 = vadd.f32 0.0, %v720
      %722 = vmatprep.mubr.bf16.mxu0 0
      %723 = vmatmul.mubr.bf16.gmra.mxu0 %v619
      %v724 = vpop.f32.mrf.mxu0
      %v725 = vadd.f32 0.0, %v724
      %v726 = vpop.f32.mrf.mxu0
      %v727 = vadd.f32 0.0, %v726
      %v728 = vpop.f32.mrf.mxu0
      %v729 = vadd.f32 0.0, %v728
      %v730 = vpop.f32.mrf.mxu0
      %v731 = vadd.f32 0.0, %v730
      %732 = vmatprep.mubr.bf16.mxu0 0
      %733 = vmatmul.mubr.bf16.gmra.mxu0 %v622
      %v734 = vpop.f32.mrf.mxu0
      %v735 = vadd.f32 0.0, %v734
      %v736 = vpop.f32.mrf.mxu0
      %v737 = vadd.f32 0.0, %v736
      %v738 = vpop.f32.mrf.mxu0
      %v739 = vadd.f32 0.0, %v738
      %v740 = vpop.f32.mrf.mxu0
      %v741 = vadd.f32 0.0, %v740
      %742 = vmatprep.mubr.bf16.mxu0 0
      %743 = vmatmul.mubr.bf16.gmra.mxu0 %v625
      %v744 = vpop.f32.mrf.mxu0
      %v745 = vadd.f32 0.0, %v744
      %v746 = vpop.f32.mrf.mxu0
      %v747 = vadd.f32 0.0, %v746
      %v748 = vpop.f32.mrf.mxu0
      %v749 = vadd.f32 0.0, %v748
      %v750 = vpop.f32.mrf.mxu0
      %v751 = vadd.f32 0.0, %v750
      %752 = vdwg.mxu0
      %753 = vmatprep.subr.bf16.mxu0 0
      %754 = vmatpush1.bf16.msra.mxu0 0
      %755 = vmatprep.subr.bf16.mxu0 0
      %756 = vmatpush1.bf16.msra.mxu0 0
      %757 = vmatprep.subr.bf16.mxu0 0
      %758 = vmatpush1.bf16.msra.mxu0 0
      %759 = vmatprep.subr.bf16.mxu0 %v638
      %760 = vmatpush1.bf16.msra.mxu0 %v635
      %761 = vmatprep.subr.bf16.mxu0 %v541
      %762 = vmatpush1.bf16.msra.mxu0 %v540
      %763 = vmatprep.subr.bf16.mxu0 %v537
      %764 = vmatpush1.bf16.msra.mxu0 %v536
      %765 = vmatprep.subr.bf16.mxu0 %v533
      %766 = vmatpush1.bf16.msra.mxu0 %v532
      %767 = vmatprep.subr.bf16.mxu0 %v529
      %768 = vmatpush1.bf16.msra.mxu0 %v528
      %769 = vmatprep.subr.bf16.mxu0 0
      %770 = vmatpush2.bf16.msra.mxu0 0
      %771 = vmatprep.subr.bf16.mxu0 0
      %772 = vmatpush2.bf16.msra.mxu0 0
      %773 = vmatprep.subr.bf16.mxu0 0
      %774 = vmatpush2.bf16.msra.mxu0 0
      %775 = vmatprep.subr.bf16.mxu0 0
      %776 = vmatpush2.bf16.msra.mxu0 0
      %777 = vmatprep.subr.bf16.mxu0 0
      %778 = vmatpush2.bf16.msra.mxu0 0
      %779 = vmatprep.subr.bf16.mxu0 0
      %780 = vmatpush2.bf16.msra.mxu0 0
      %781 = vmatprep.subr.bf16.mxu0 0
      %782 = vmatpush2.bf16.msra.mxu0 0
      %783 = vmatprep.subr.bf16.mxu0 0
      %784 = vmatpush2.bf16.msra.mxu0 0
      %785 = vmatprep.mubr.bf16.mxu0 0
      %786 = vmatmul.mubr.bf16.gmra.mxu0 %v604
      %v787 = vpop.f32.mrf.mxu0
      %v788 = vadd.f32 0.0, %v787
      %v789 = vpop.f32.mrf.mxu0
      %v790 = vadd.f32 0.0, %v789
      %v791 = vpop.f32.mrf.mxu0
      %v792 = vadd.f32 0.0, %v791
      %v793 = vpop.f32.mrf.mxu0
      %v794 = vadd.f32 0.0, %v793
      %795 = vmatprep.mubr.bf16.mxu0 0
      %796 = vmatmul.mubr.bf16.gmra.mxu0 %v607
      %v797 = vpop.f32.mrf.mxu0
      %v798 = vadd.f32 0.0, %v797
      %v799 = vpop.f32.mrf.mxu0
      %v800 = vadd.f32 0.0, %v799
      %v801 = vpop.f32.mrf.mxu0
      %v802 = vadd.f32 0.0, %v801
      %v803 = vpop.f32.mrf.mxu0
      %v804 = vadd.f32 0.0, %v803
      %805 = vmatprep.mubr.bf16.mxu0 0
      %806 = vmatmul.mubr.bf16.gmra.mxu0 %v610
      %v807 = vpop.f32.mrf.mxu0
      %v808 = vadd.f32 0.0, %v807
      %v809 = vpop.f32.mrf.mxu0
      %v810 = vadd.f32 0.0, %v809
      %v811 = vpop.f32.mrf.mxu0
      %v812 = vadd.f32 0.0, %v811
      %v813 = vpop.f32.mrf.mxu0
      %v814 = vadd.f32 0.0, %v813
      %815 = vmatprep.mubr.bf16.mxu0 0
      %816 = vmatmul.mubr.bf16.gmra.mxu0 %v613
      %v817 = vpop.f32.mrf.mxu0
      %v818 = vadd.f32 0.0, %v817
      %v819 = vpop.f32.mrf.mxu0
      %v820 = vadd.f32 0.0, %v819
      %v821 = vpop.f32.mrf.mxu0
      %v822 = vadd.f32 0.0, %v821
      %v823 = vpop.f32.mrf.mxu0
      %v824 = vadd.f32 0.0, %v823
      %825 = vmatprep.mubr.bf16.mxu0 0
      %826 = vmatmul.mubr.bf16.gmra.mxu0 %v616
      %v827 = vpop.f32.mrf.mxu0
      %v828 = vadd.f32 0.0, %v827
      %v829 = vpop.f32.mrf.mxu0
      %v830 = vadd.f32 0.0, %v829
      %v831 = vpop.f32.mrf.mxu0
      %v832 = vadd.f32 0.0, %v831
      %v833 = vpop.f32.mrf.mxu0
      %v834 = vadd.f32 0.0, %v833
      %835 = vmatprep.mubr.bf16.mxu0 0
      %836 = vmatmul.mubr.bf16.gmra.mxu0 %v619
      %v837 = vpop.f32.mrf.mxu0
      %v838 = vadd.f32 0.0, %v837
      %v839 = vpop.f32.mrf.mxu0
      %v840 = vadd.f32 0.0, %v839
      %v841 = vpop.f32.mrf.mxu0
      %v842 = vadd.f32 0.0, %v841
      %v843 = vpop.f32.mrf.mxu0
      %v844 = vadd.f32 0.0, %v843
      %845 = vmatprep.mubr.bf16.mxu0 0
      %846 = vmatmul.mubr.bf16.gmra.mxu0 %v622
      %v847 = vpop.f32.mrf.mxu0
      %v848 = vadd.f32 0.0, %v847
      %v849 = vpop.f32.mrf.mxu0
      %v850 = vadd.f32 0.0, %v849
      %v851 = vpop.f32.mrf.mxu0
      %v852 = vadd.f32 0.0, %v851
      %v853 = vpop.f32.mrf.mxu0
      %v854 = vadd.f32 0.0, %v853
      %855 = vmatprep.mubr.bf16.mxu0 0
      %856 = vmatmul.mubr.bf16.gmra.mxu0 %v625
      %v857 = vpop.f32.mrf.mxu0
      %v858 = vadd.f32 0.0, %v857
      %v859 = vpop.f32.mrf.mxu0
      %v860 = vadd.f32 0.0, %v859
      %v861 = vpop.f32.mrf.mxu0
      %v862 = vadd.f32 0.0, %v861
      %v863 = vpop.f32.mrf.mxu0
      %v864 = vadd.f32 0.0, %v863
      %865 = vdwg.mxu0
      %v866 = vpack.c.bf16 %v679, %v675
      %v867 = vpack.c.bf16 %v681, %v677
      %v868 = vpack.c.bf16 %v792, %v788
      %v869 = vpack.c.bf16 %v794, %v790
      %v870 = vpack.c.bf16 %v689, %v685
      %v871 = vpack.c.bf16 %v691, %v687
      %v872 = vpack.c.bf16 %v802, %v798
      %v873 = vpack.c.bf16 %v804, %v800
      %v874 = vpack.c.bf16 %v699, %v695
      %v875 = vpack.c.bf16 %v701, %v697
      %v876 = vpack.c.bf16 %v812, %v808
      %v877 = vpack.c.bf16 %v814, %v810
      %v878 = vpack.c.bf16 %v709, %v705
      %v879 = vpack.c.bf16 %v711, %v707
      %v880 = vpack.c.bf16 %v822, %v818
      %v881 = vpack.c.bf16 %v824, %v820
      %v882 = vpack.c.bf16 %v719, %v715
      %v883 = vpack.c.bf16 %v721, %v717
      %v884 = vpack.c.bf16 %v832, %v828
      %v885 = vpack.c.bf16 %v834, %v830
      %v886 = vpack.c.bf16 %v729, %v725
      %v887 = vpack.c.bf16 %v731, %v727
      %v888 = vpack.c.bf16 %v842, %v838
      %v889 = vpack.c.bf16 %v844, %v840
      %v890 = vpack.c.bf16 %v739, %v735
      %v891 = vpack.c.bf16 %v741, %v737
      %v892 = vpack.c.bf16 %v852, %v848
      %v893 = vpack.c.bf16 %v854, %v850
      %v894 = vpack.c.bf16 %v749, %v745
      %v895 = vpack.c.bf16 %v751, %v747
      %v896 = vpack.c.bf16 %v862, %v858
      %v897 = vpack.c.bf16 %v864, %v860
      %v930 = vunpack.c.l.b16 %v866
      %v931 = vunpack.c.l.b16 %v867
      %v932 = vunpack.c.l.b16 %v868
      %v933 = vunpack.c.l.b16 %v869
      %v934 = vunpack.c.h.b16 %v866
      %v935 = vunpack.c.h.b16 %v867
      %v936 = vunpack.c.h.b16 %v868
      %v937 = vunpack.c.h.b16 %v869
      %v938 = vunpack.c.l.b16 %v870
      %v939 = vunpack.c.l.b16 %v871
      %v940 = vunpack.c.l.b16 %v872
      %v941 = vunpack.c.l.b16 %v873
      %v942 = vunpack.c.h.b16 %v870
      %v943 = vunpack.c.h.b16 %v871
      %v944 = vunpack.c.h.b16 %v872
      %v945 = vunpack.c.h.b16 %v873
      %v946 = vunpack.c.l.b16 %v874
      %v947 = vunpack.c.l.b16 %v875
      %v948 = vunpack.c.l.b16 %v876
      %v949 = vunpack.c.l.b16 %v877
      %v950 = vunpack.c.h.b16 %v874
      %v951 = vunpack.c.h.b16 %v875
      %v952 = vunpack.c.h.b16 %v876
      %v953 = vunpack.c.h.b16 %v877
      %v954 = vunpack.c.l.b16 %v878
      %v955 = vunpack.c.l.b16 %v879
      %v956 = vunpack.c.l.b16 %v880
      %v957 = vunpack.c.l.b16 %v881
      %v958 = vunpack.c.h.b16 %v878
      %v959 = vunpack.c.h.b16 %v879
      %v960 = vunpack.c.h.b16 %v880
      %v961 = vunpack.c.h.b16 %v881
      %v962 = vunpack.c.l.b16 %v882
      %v963 = vunpack.c.l.b16 %v883
      %v964 = vunpack.c.l.b16 %v884
      %v965 = vunpack.c.l.b16 %v885
      %v966 = vunpack.c.h.b16 %v882
      %v967 = vunpack.c.h.b16 %v883
      %v968 = vunpack.c.h.b16 %v884
      %v969 = vunpack.c.h.b16 %v885
      %v970 = vunpack.c.l.b16 %v886
      %v971 = vunpack.c.l.b16 %v887
      %v972 = vunpack.c.l.b16 %v888
      %v973 = vunpack.c.l.b16 %v889
      %v974 = vunpack.c.h.b16 %v886
      %v975 = vunpack.c.h.b16 %v887
      %v976 = vunpack.c.h.b16 %v888
      %v977 = vunpack.c.h.b16 %v889
      %v978 = vunpack.c.l.b16 %v890
      %v979 = vunpack.c.l.b16 %v891
      %v980 = vunpack.c.l.b16 %v892
      %v981 = vunpack.c.l.b16 %v893
      %v982 = vunpack.c.h.b16 %v890
      %v983 = vunpack.c.h.b16 %v891
      %v984 = vunpack.c.h.b16 %v892
      %v985 = vunpack.c.h.b16 %v893
      %v986 = vunpack.c.l.b16 %v894
      %v987 = vunpack.c.l.b16 %v895
      %v988 = vunpack.c.l.b16 %v896
      %v989 = vunpack.c.l.b16 %v897
      %v990 = vunpack.c.h.b16 %v894
      %v991 = vunpack.c.h.b16 %v895
      %v992 = vunpack.c.h.b16 %v896
      %v993 = vunpack.c.h.b16 %v897
      %v994 = vpack.c.b16 %v931, %v930
      %v995 = vpack.c.b16 %v933, %v932
      %v996 = vpack.c.b16 %v935, %v934
      %v997 = vpack.c.b16 %v937, %v936
      %v998 = vpack.c.b16 %v939, %v938
      %v999 = vpack.c.b16 %v941, %v940
      %v1000 = vpack.c.b16 %v943, %v942
      %v1001 = vpack.c.b16 %v945, %v944
      %v1002 = vpack.c.b16 %v947, %v946
      %v1003 = vpack.c.b16 %v949, %v948
      %v1004 = vpack.c.b16 %v951, %v950
      %v1005 = vpack.c.b16 %v953, %v952
      %v1006 = vpack.c.b16 %v955, %v954
      %v1007 = vpack.c.b16 %v957, %v956
      %v1008 = vpack.c.b16 %v959, %v958
      %v1009 = vpack.c.b16 %v961, %v960
      %v1010 = vpack.c.b16 %v963, %v962
      %v1011 = vpack.c.b16 %v965, %v964
      %v1012 = vpack.c.b16 %v967, %v966
      %v1013 = vpack.c.b16 %v969, %v968
      %v1014 = vpack.c.b16 %v971, %v970
      %v1015 = vpack.c.b16 %v973, %v972
      %v1016 = vpack.c.b16 %v975, %v974
      %v1017 = vpack.c.b16 %v977, %v976
      %v1018 = vpack.c.b16 %v979, %v978
      %v1019 = vpack.c.b16 %v981, %v980
      %v1020 = vpack.c.b16 %v983, %v982
      %v1021 = vpack.c.b16 %v985, %v984
      %v1022 = vpack.c.b16 %v987, %v986
      %v1023 = vpack.c.b16 %v989, %v988
      %v1024 = vpack.c.b16 %v991, %v990
      %v1025 = vpack.c.b16 %v993, %v992
      %1058 = vst [vmem:[%s259] sm:$0xff] %v994
      %1059 = vst [vmem:[%s259 + $0x8] sm:$0xff] %v995
      %1060 = vst [vmem:[%s259 + $0x10] sm:$0xff] %v996
      %1061 = vst [vmem:[%s259 + $0x18] sm:$0xff] %v997
      %1062 = vst [vmem:[%s259 + $0x20] sm:$0xff] %v998
      %1063 = vst [vmem:[%s259 + $0x28] sm:$0xff] %v999
      %1064 = vst [vmem:[%s259 + $0x30] sm:$0xff] %v1000
      %1065 = vst [vmem:[%s259 + $0x38] sm:$0xff] %v1001
      %1066 = vst [vmem:[%s259 + $0x40] sm:$0xff] %v1002
      %1067 = vst [vmem:[%s259 + $0x48] sm:$0xff] %v1003
      %1068 = vst [vmem:[%s259 + $0x50] sm:$0xff] %v1004
      %1069 = vst [vmem:[%s259 + $0x58] sm:$0xff] %v1005
      %1070 = vst [vmem:[%s259 + $0x60] sm:$0xff] %v1006
      %1071 = vst [vmem:[%s259 + $0x68] sm:$0xff] %v1007
      %1072 = vst [vmem:[%s259 + $0x70] sm:$0xff] %v1008
      %1073 = vst [vmem:[%s259 + $0x78] sm:$0xff] %v1009
      %1074 = vst [vmem:[%s259 + $0x80] sm:$0xff] %v1010
      %1075 = vst [vmem:[%s259 + $0x88] sm:$0xff] %v1011
      %1076 = vst [vmem:[%s259 + $0x90] sm:$0xff] %v1012
      %1077 = vst [vmem:[%s259 + $0x98] sm:$0xff] %v1013
      %1078 = vst [vmem:[%s259 + $0xa0] sm:$0xff] %v1014
      %1079 = vst [vmem:[%s259 + $0xa8] sm:$0xff] %v1015
      %1080 = vst [vmem:[%s259 + $0xb0] sm:$0xff] %v1016
      %1081 = vst [vmem:[%s259 + $0xb8] sm:$0xff] %v1017
      %1082 = vst [vmem:[%s259 + $0xc0] sm:$0xff] %v1018
      %1083 = vst [vmem:[%s259 + $0xc8] sm:$0xff] %v1019
      %1084 = vst [vmem:[%s259 + $0xd0] sm:$0xff] %v1020
      %1085 = vst [vmem:[%s259 + $0xd8] sm:$0xff] %v1021
      %1086 = vst [vmem:[%s259 + $0xe0] sm:$0xff] %v1022
      %1087 = vst [vmem:[%s259 + $0xe8] sm:$0xff] %v1023
      %1088 = vst [vmem:[%s259 + $0xf0] sm:$0xff] %v1024
      %1089 = vst [vmem:[%s259 + $0xf8] sm:$0xff] %v1025
      %v1090 = vld [vmem:[%s3] sm:$0xf]
      %v1092 = vlaneseq
      %v1093 = vshrl.u32 %v1092, 7
      %v1094 = vsub.s32 0, %v1093
      %v1095 = vrot.slane %v1090, %v1094
      %v1096 = vlaneseq
      %v1097 = vshrl.u32 %v1096, 7
      %v1098 = vsub.s32 1, %v1097
      %v1099 = vrot.slane %v1090, %v1098
      %v1100 = vlaneseq
      %v1101 = vshrl.u32 %v1100, 7
      %v1102 = vsub.s32 2, %v1101
      %v1103 = vrot.slane %v1090, %v1102
      %v1104 = vlaneseq
      %v1105 = vshrl.u32 %v1104, 7
      %v1106 = vsub.s32 3, %v1105
      %v1107 = vrot.slane %v1090, %v1106
      %v1112 = vmul.f32 %v675, %v1095
      %v1113 = vmul.f32 %v677, %v1099
      %v1114 = vmul.f32 %v788, %v1103
      %v1115 = vmul.f32 %v790, %v1107
      %v1116 = vmul.f32 %v679, %v1095
      %v1117 = vmul.f32 %v681, %v1099
      %v1118 = vmul.f32 %v792, %v1103
      %v1119 = vmul.f32 %v794, %v1107
      %v1120 = vmul.f32 %v685, %v1095
      %v1121 = vmul.f32 %v687, %v1099
      %v1122 = vmul.f32 %v798, %v1103
      %v1123 = vmul.f32 %v800, %v1107
      %v1124 = vmul.f32 %v689, %v1095
      %v1125 = vmul.f32 %v691, %v1099
      %v1126 = vmul.f32 %v802, %v1103
      %v1127 = vmul.f32 %v804, %v1107
      %v1128 = vmul.f32 %v695, %v1095
      %v1129 = vmul.f32 %v697, %v1099
      %v1130 = vmul.f32 %v808, %v1103
      %v1131 = vmul.f32 %v810, %v1107
      %v1132 = vmul.f32 %v699, %v1095
      %v1133 = vmul.f32 %v701, %v1099
      %v1134 = vmul.f32 %v812, %v1103
      %v1135 = vmul.f32 %v814, %v1107
      %v1136 = vmul.f32 %v705, %v1095
      %v1137 = vmul.f32 %v707, %v1099
      %v1138 = vmul.f32 %v818, %v1103
      %v1139 = vmul.f32 %v820, %v1107
      %v1140 = vmul.f32 %v709, %v1095
      %v1141 = vmul.f32 %v711, %v1099
      %v1142 = vmul.f32 %v822, %v1103
      %v1143 = vmul.f32 %v824, %v1107
      %v1144 = vmul.f32 %v715, %v1095
      %v1145 = vmul.f32 %v717, %v1099
      %v1146 = vmul.f32 %v828, %v1103
      %v1147 = vmul.f32 %v830, %v1107
      %v1148 = vmul.f32 %v719, %v1095
      %v1149 = vmul.f32 %v721, %v1099
      %v1150 = vmul.f32 %v832, %v1103
      %v1151 = vmul.f32 %v834, %v1107
      %v1152 = vmul.f32 %v725, %v1095
      %v1153 = vmul.f32 %v727, %v1099
      %v1154 = vmul.f32 %v838, %v1103
      %v1155 = vmul.f32 %v840, %v1107
      %v1156 = vmul.f32 %v729, %v1095
      %v1157 = vmul.f32 %v731, %v1099
      %v1158 = vmul.f32 %v842, %v1103
      %v1159 = vmul.f32 %v844, %v1107
      %v1160 = vmul.f32 %v735, %v1095
      %v1161 = vmul.f32 %v737, %v1099
      %v1162 = vmul.f32 %v848, %v1103
      %v1163 = vmul.f32 %v850, %v1107
      %v1164 = vmul.f32 %v739, %v1095
      %v1165 = vmul.f32 %v741, %v1099
      %v1166 = vmul.f32 %v852, %v1103
      %v1167 = vmul.f32 %v854, %v1107
      %v1168 = vmul.f32 %v745, %v1095
      %v1169 = vmul.f32 %v747, %v1099
      %v1170 = vmul.f32 %v858, %v1103
      %v1171 = vmul.f32 %v860, %v1107
      %v1172 = vmul.f32 %v749, %v1095
      %v1173 = vmul.f32 %v751, %v1099
      %v1174 = vmul.f32 %v862, %v1103
      %v1175 = vmul.f32 %v864, %v1107
      %v1176 = vadd.f32 %v1112, %v1113
      %v1177 = vadd.f32 %v1176, %v1114
      %v1178 = vadd.f32 %v1177, %v1115
      %1179 = vadd.xlane.f32.xlu0 %v1178
      %v1180 = vpop.xlane.xlu0 %1179
      %v1181 = vadd.f32 %v1116, %v1117
      %v1182 = vadd.f32 %v1181, %v1118
      %v1183 = vadd.f32 %v1182, %v1119
      %1184 = vadd.xlane.f32.xlu0 %v1183
      %v1185 = vpop.xlane.xlu0 %1184
      %v1186 = vadd.f32 %v1120, %v1121
      %v1187 = vadd.f32 %v1186, %v1122
      %v1188 = vadd.f32 %v1187, %v1123
      %1189 = vadd.xlane.f32.xlu0 %v1188
      %v1190 = vpop.xlane.xlu0 %1189
      %v1191 = vadd.f32 %v1124, %v1125
      %v1192 = vadd.f32 %v1191, %v1126
      %v1193 = vadd.f32 %v1192, %v1127
      %1194 = vadd.xlane.f32.xlu0 %v1193
      %v1195 = vpop.xlane.xlu0 %1194
      %v1196 = vadd.f32 %v1128, %v1129
      %v1197 = vadd.f32 %v1196, %v1130
      %v1198 = vadd.f32 %v1197, %v1131
      %1199 = vadd.xlane.f32.xlu0 %v1198
      %v1200 = vpop.xlane.xlu0 %1199
      %v1201 = vadd.f32 %v1132, %v1133
      %v1202 = vadd.f32 %v1201, %v1134
      %v1203 = vadd.f32 %v1202, %v1135
      %1204 = vadd.xlane.f32.xlu0 %v1203
      %v1205 = vpop.xlane.xlu0 %1204
      %v1206 = vadd.f32 %v1136, %v1137
      %v1207 = vadd.f32 %v1206, %v1138
      %v1208 = vadd.f32 %v1207, %v1139
      %1209 = vadd.xlane.f32.xlu0 %v1208
      %v1210 = vpop.xlane.xlu0 %1209
      %v1211 = vadd.f32 %v1140, %v1141
      %v1212 = vadd.f32 %v1211, %v1142
      %v1213 = vadd.f32 %v1212, %v1143
      %1214 = vadd.xlane.f32.xlu0 %v1213
      %v1215 = vpop.xlane.xlu0 %1214
      %v1216 = vadd.f32 %v1144, %v1145
      %v1217 = vadd.f32 %v1216, %v1146
      %v1218 = vadd.f32 %v1217, %v1147
      %1219 = vadd.xlane.f32.xlu0 %v1218
      %v1220 = vpop.xlane.xlu0 %1219
      %v1221 = vadd.f32 %v1148, %v1149
      %v1222 = vadd.f32 %v1221, %v1150
      %v1223 = vadd.f32 %v1222, %v1151
      %1224 = vadd.xlane.f32.xlu0 %v1223
      %v1225 = vpop.xlane.xlu0 %1224
      %v1226 = vadd.f32 %v1152, %v1153
      %v1227 = vadd.f32 %v1226, %v1154
      %v1228 = vadd.f32 %v1227, %v1155
      %1229 = vadd.xlane.f32.xlu0 %v1228
      %v1230 = vpop.xlane.xlu0 %1229
      %v1231 = vadd.f32 %v1156, %v1157
      %v1232 = vadd.f32 %v1231, %v1158
      %v1233 = vadd.f32 %v1232, %v1159
      %1234 = vadd.xlane.f32.xlu0 %v1233
      %v1235 = vpop.xlane.xlu0 %1234
      %v1236 = vadd.f32 %v1160, %v1161
      %v1237 = vadd.f32 %v1236, %v1162
      %v1238 = vadd.f32 %v1237, %v1163
      %1239 = vadd.xlane.f32.xlu0 %v1238
      %v1240 = vpop.xlane.xlu0 %1239
      %v1241 = vadd.f32 %v1164, %v1165
      %v1242 = vadd.f32 %v1241, %v1166
      %v1243 = vadd.f32 %v1242, %v1167
      %1244 = vadd.xlane.f32.xlu0 %v1243
      %v1245 = vpop.xlane.xlu0 %1244
      %v1246 = vadd.f32 %v1168, %v1169
      %v1247 = vadd.f32 %v1246, %v1170
      %v1248 = vadd.f32 %v1247, %v1171
      %1249 = vadd.xlane.f32.xlu0 %v1248
      %v1250 = vpop.xlane.xlu0 %1249
      %v1251 = vadd.f32 %v1172, %v1173
      %v1252 = vadd.f32 %v1251, %v1174
      %v1253 = vadd.f32 %v1252, %v1175
      %1254 = vadd.xlane.f32.xlu0 %v1253
      %v1255 = vpop.xlane.xlu0 %1254
      %v1256 = vmul.f32 %v1112, %v675
      %v1257 = vmul.f32 %v1113, %v677
      %v1258 = vmul.f32 %v1114, %v788
      %v1259 = vmul.f32 %v1115, %v790
      %v1260 = vmul.f32 %v1116, %v679
      %v1261 = vmul.f32 %v1117, %v681
      %v1262 = vmul.f32 %v1118, %v792
      %v1263 = vmul.f32 %v1119, %v794
      %v1264 = vmul.f32 %v1120, %v685
      %v1265 = vmul.f32 %v1121, %v687
      %v1266 = vmul.f32 %v1122, %v798
      %v1267 = vmul.f32 %v1123, %v800
      %v1268 = vmul.f32 %v1124, %v689
      %v1269 = vmul.f32 %v1125, %v691
      %v1270 = vmul.f32 %v1126, %v802
      %v1271 = vmul.f32 %v1127, %v804
      %v1272 = vmul.f32 %v1128, %v695
      %v1273 = vmul.f32 %v1129, %v697
      %v1274 = vmul.f32 %v1130, %v808
      %v1275 = vmul.f32 %v1131, %v810
      %v1276 = vmul.f32 %v1132, %v699
      %v1277 = vmul.f32 %v1133, %v701
      %v1278 = vmul.f32 %v1134, %v812
      %v1279 = vmul.f32 %v1135, %v814
      %v1280 = vmul.f32 %v1136, %v705
      %v1281 = vmul.f32 %v1137, %v707
      %v1282 = vmul.f32 %v1138, %v818
      %v1283 = vmul.f32 %v1139, %v820
      %v1284 = vmul.f32 %v1140, %v709
      %v1285 = vmul.f32 %v1141, %v711
      %v1286 = vmul.f32 %v1142, %v822
      %v1287 = vmul.f32 %v1143, %v824
      %v1288 = vmul.f32 %v1144, %v715
      %v1289 = vmul.f32 %v1145, %v717
      %v1290 = vmul.f32 %v1146, %v828
      %v1291 = vmul.f32 %v1147, %v830
      %v1292 = vmul.f32 %v1148, %v719
      %v1293 = vmul.f32 %v1149, %v721
      %v1294 = vmul.f32 %v1150, %v832
      %v1295 = vmul.f32 %v1151, %v834
      %v1296 = vmul.f32 %v1152, %v725
      %v1297 = vmul.f32 %v1153, %v727
      %v1298 = vmul.f32 %v1154, %v838
      %v1299 = vmul.f32 %v1155, %v840
      %v1300 = vmul.f32 %v1156, %v729
      %v1301 = vmul.f32 %v1157, %v731
      %v1302 = vmul.f32 %v1158, %v842
      %v1303 = vmul.f32 %v1159, %v844
      %v1304 = vmul.f32 %v1160, %v735
      %v1305 = vmul.f32 %v1161, %v737
      %v1306 = vmul.f32 %v1162, %v848
      %v1307 = vmul.f32 %v1163, %v850
      %v1308 = vmul.f32 %v1164, %v739
      %v1309 = vmul.f32 %v1165, %v741
      %v1310 = vmul.f32 %v1166, %v852
      %v1311 = vmul.f32 %v1167, %v854
      %v1312 = vmul.f32 %v1168, %v745
      %v1313 = vmul.f32 %v1169, %v747
      %v1314 = vmul.f32 %v1170, %v858
      %v1315 = vmul.f32 %v1171, %v860
      %v1316 = vmul.f32 %v1172, %v749
      %v1317 = vmul.f32 %v1173, %v751
      %v1318 = vmul.f32 %v1174, %v862
      %v1319 = vmul.f32 %v1175, %v864
      %v1320 = vadd.f32 %v1256, %v1257
      %v1321 = vadd.f32 %v1320, %v1258
      %v1322 = vadd.f32 %v1321, %v1259
      %1323 = vadd.xlane.f32.xlu0 %v1322
      %v1324 = vpop.xlane.xlu0 %1323
      %v1325 = vadd.f32 %v1260, %v1261
      %v1326 = vadd.f32 %v1325, %v1262
      %v1327 = vadd.f32 %v1326, %v1263
      %1328 = vadd.xlane.f32.xlu0 %v1327
      %v1329 = vpop.xlane.xlu0 %1328
      %v1330 = vadd.f32 %v1264, %v1265
      %v1331 = vadd.f32 %v1330, %v1266
      %v1332 = vadd.f32 %v1331, %v1267
      %1333 = vadd.xlane.f32.xlu0 %v1332
      %v1334 = vpop.xlane.xlu0 %1333
      %v1335 = vadd.f32 %v1268, %v1269
      %v1336 = vadd.f32 %v1335, %v1270
      %v1337 = vadd.f32 %v1336, %v1271
      %1338 = vadd.xlane.f32.xlu0 %v1337
      %v1339 = vpop.xlane.xlu0 %1338
      %v1340 = vadd.f32 %v1272, %v1273
      %v1341 = vadd.f32 %v1340, %v1274
      %v1342 = vadd.f32 %v1341, %v1275
      %1343 = vadd.xlane.f32.xlu0 %v1342
      %v1344 = vpop.xlane.xlu0 %1343
      %v1345 = vadd.f32 %v1276, %v1277
      %v1346 = vadd.f32 %v1345, %v1278
      %v1347 = vadd.f32 %v1346, %v1279
      %1348 = vadd.xlane.f32.xlu0 %v1347
      %v1349 = vpop.xlane.xlu0 %1348
      %v1350 = vadd.f32 %v1280, %v1281
      %v1351 = vadd.f32 %v1350, %v1282
      %v1352 = vadd.f32 %v1351, %v1283
      %1353 = vadd.xlane.f32.xlu0 %v1352
      %v1354 = vpop.xlane.xlu0 %1353
      %v1355 = vadd.f32 %v1284, %v1285
      %v1356 = vadd.f32 %v1355, %v1286
      %v1357 = vadd.f32 %v1356, %v1287
      %1358 = vadd.xlane.f32.xlu0 %v1357
      %v1359 = vpop.xlane.xlu0 %1358
      %v1360 = vadd.f32 %v1288, %v1289
      %v1361 = vadd.f32 %v1360, %v1290
      %v1362 = vadd.f32 %v1361, %v1291
      %1363 = vadd.xlane.f32.xlu0 %v1362
      %v1364 = vpop.xlane.xlu0 %1363
      %v1365 = vadd.f32 %v1292, %v1293
      %v1366 = vadd.f32 %v1365, %v1294
      %v1367 = vadd.f32 %v1366, %v1295
      %1368 = vadd.xlane.f32.xlu0 %v1367
      %v1369 = vpop.xlane.xlu0 %1368
      %v1370 = vadd.f32 %v1296, %v1297
      %v1371 = vadd.f32 %v1370, %v1298
      %v1372 = vadd.f32 %v1371, %v1299
      %1373 = vadd.xlane.f32.xlu0 %v1372
      %v1374 = vpop.xlane.xlu0 %1373
      %v1375 = vadd.f32 %v1300, %v1301
      %v1376 = vadd.f32 %v1375, %v1302
      %v1377 = vadd.f32 %v1376, %v1303
      %1378 = vadd.xlane.f32.xlu0 %v1377
      %v1379 = vpop.xlane.xlu0 %1378
      %v1380 = vadd.f32 %v1304, %v1305
      %v1381 = vadd.f32 %v1380, %v1306
      %v1382 = vadd.f32 %v1381, %v1307
      %1383 = vadd.xlane.f32.xlu0 %v1382
      %v1384 = vpop.xlane.xlu0 %1383
      %v1385 = vadd.f32 %v1308, %v1309
      %v1386 = vadd.f32 %v1385, %v1310
      %v1387 = vadd.f32 %v1386, %v1311
      %1388 = vadd.xlane.f32.xlu0 %v1387
      %v1389 = vpop.xlane.xlu0 %1388
      %v1390 = vadd.f32 %v1312, %v1313
      %v1391 = vadd.f32 %v1390, %v1314
      %v1392 = vadd.f32 %v1391, %v1315
      %1393 = vadd.xlane.f32.xlu0 %v1392
      %v1394 = vpop.xlane.xlu0 %1393
      %v1395 = vadd.f32 %v1316, %v1317
      %v1396 = vadd.f32 %v1395, %v1318
      %v1397 = vadd.f32 %v1396, %v1319
      %1398 = vadd.xlane.f32.xlu0 %v1397
      %v1399 = vpop.xlane.xlu0 %1398
      %vm1400 = vcmask 7168
      %v1401 = vsel %vm1400, %v1180, %v1324
      %v1402 = vsel %vm1400, %v1185, %v1329
      %v1403 = vsel %vm1400, %v1190, %v1334
      %v1404 = vsel %vm1400, %v1195, %v1339
      %v1405 = vsel %vm1400, %v1200, %v1344
      %v1406 = vsel %vm1400, %v1205, %v1349
      %v1407 = vsel %vm1400, %v1210, %v1354
      %v1408 = vsel %vm1400, %v1215, %v1359
      %v1409 = vsel %vm1400, %v1220, %v1364
      %v1410 = vsel %vm1400, %v1225, %v1369
      %v1411 = vsel %vm1400, %v1230, %v1374
      %v1412 = vsel %vm1400, %v1235, %v1379
      %v1413 = vsel %vm1400, %v1240, %v1384
      %v1414 = vsel %vm1400, %v1245, %v1389
      %v1415 = vsel %vm1400, %v1250, %v1394
      %v1416 = vsel %vm1400, %v1255, %v1399
      %vm1417 = vcmask 15360
      %1418 = vst.msk [vmem:[%s264] sm:$0xff] %vm1417, %v1401
      %1419 = vst.msk [vmem:[%s264 + $0x8] sm:$0xff] %vm1417, %v1402
      %1420 = vst.msk [vmem:[%s264 + $0x10] sm:$0xff] %vm1417, %v1403
      %1421 = vst.msk [vmem:[%s264 + $0x18] sm:$0xff] %vm1417, %v1404
      %1422 = vst.msk [vmem:[%s264 + $0x20] sm:$0xff] %vm1417, %v1405
      %1423 = vst.msk [vmem:[%s264 + $0x28] sm:$0xff] %vm1417, %v1406
      %1424 = vst.msk [vmem:[%s264 + $0x30] sm:$0xff] %vm1417, %v1407
      %1425 = vst.msk [vmem:[%s264 + $0x38] sm:$0xff] %vm1417, %v1408
      %1426 = vst.msk [vmem:[%s264 + $0x40] sm:$0xff] %vm1417, %v1409
      %1427 = vst.msk [vmem:[%s264 + $0x48] sm:$0xff] %vm1417, %v1410
      %1428 = vst.msk [vmem:[%s264 + $0x50] sm:$0xff] %vm1417, %v1411
      %1429 = vst.msk [vmem:[%s264 + $0x58] sm:$0xff] %vm1417, %v1412
      %1430 = vst.msk [vmem:[%s264 + $0x60] sm:$0xff] %vm1417, %v1413
      %1431 = vst.msk [vmem:[%s264 + $0x68] sm:$0xff] %vm1417, %v1414
      %1432 = vst.msk [vmem:[%s264 + $0x70] sm:$0xff] %vm1417, %v1415
      %1433 = vst.msk [vmem:[%s264 + $0x78] sm:$0xff] %vm1417, %v1416
      %p1434 = scmp.lt.s32.totalorder %s18, 1
      %s1435 = scalar_select %p1434, %s18, 1
      %s1436 = smul.addr %s1435, 64
      %s1437 = smul.addr %s1436, 4
      %s1438 = scalar_lea.vmem %s5, %s1437
      %p1439 = scmp.lt.s32.totalorder %s18, 1
      %s1440 = scalar_select %p1439, %s18, 1
      %s1441 = smul.addr %s1440, 16
      %s1442 = smul.addr %s1441, 8
      %s1443 = scalar_lea.vmem %s6, %s1442
      // Predicated region
      $region41: #{decoder_forward.4} parent=39 // pred_check
        %p1444 = pneg %p146
      $region42: #{decoder_forward.4} parent=39 // pred_check_branch
        %1446 = sbr.rel (%p1444) target = $region44
      $region43: #{decoder_forward.4} parent=39 // pred_region
        _
      $region44: #{decoder_forward.4} parent=39 // pred_fallthru
        _
      // Predicated region
      $region45: #{decoder_forward.4} parent=39 // pred_check
        %p1447 = pneg %p172
      $region46: #{decoder_forward.4} parent=39 // pred_check_branch
        %1449 = sbr.rel (%p1447) target = $region48
      $region47: #{decoder_forward.4} parent=39 // pred_region
        _
      $region48: #{decoder_forward.4} parent=39 // pred_fallthru
        _
    $region40: #{decoder_forward.4} parent=5 // pred_fallthru
      _
    %p1450 = scmp.le.s32.totalorder 2, %s13
    // Predicated region
    $region49: #{decoder_forward.4} parent=5 // pred_check
      %p1451 = pneg %p1450
    $region50: #{decoder_forward.4} parent=5 // pred_check_branch
      %1453 = sbr.rel (%p1451) target = $region52
    $region51: #{decoder_forward.4} parent=5 // pred_region
      %s1454 = ssub.s32 %s13, 2
      // Predicated region
      $region53: #{decoder_forward.4} parent=51 // pred_check
        %p1455 = pneg %p152
      $region54: #{decoder_forward.4} parent=51 // pred_check_branch
        %1457 = sbr.rel (%p1455) target = $region56
      $region55: #{decoder_forward.4} parent=51 // pred_region
        %p1458 = scmp.lt.s32.totalorder %s19, 1
        %s1459 = scalar_select %p1458, %s19, 1
        %s1460 = smul.addr %s1459, 64
        %s1461 = smul.addr %s1460, 4
        %s1462 = scalar_lea.vmem %s5, %s1461
      $region56: #{decoder_forward.4} parent=51 // pred_fallthru
        _
      // Predicated region
      $region57: #{decoder_forward.4} parent=51 // pred_check
        %p1463 = pneg %p178
      $region58: #{decoder_forward.4} parent=51 // pred_check_branch
        %1465 = sbr.rel (%p1463) target = $region60
      $region59: #{decoder_forward.4} parent=51 // pred_region
        %p1466 = scmp.lt.s32.totalorder %s19, 1
        %s1467 = scalar_select %p1466, %s19, 1
        %s1468 = smul.addr %s1467, 16
        %s1469 = smul.addr %s1468, 8
        %s1470 = scalar_lea.vmem %s6, %s1469
      $region60: #{decoder_forward.4} parent=51 // pred_fallthru
        _
    $region52: #{decoder_forward.4} parent=5 // pred_fallthru
      _
  $region6: #{decoder_forward.4} parent=0 // loop_footer
    %s17 = sadd.s32 1, %s13
  $region7: #{decoder_forward.4} parent=0 // loop_footer_branch
    %12 = sbr.rel target = $region3
  $region8: #{decoder_forward.4} parent=0 // loop_exit
    _

// kernel: decoder_forward.5
$region0: #{decoder_forward.5}
  #allocation0 [shape = 'u32[]', space=smem, size = 0x4, offset = 0x4, fixed_abs, tag = 'smem constant byte address 0x4 - core index']
  #allocation1 [shape = 'u32[144,128]{1,0:T(1,128)}', space=vmem, size = 0x12000, scoped, tag = 'internal scratch']
  %s0 = inlined_call_operand.vmem [shape: bf16[2,128,512], index: 0, kind: input, shape index: {}]
  %s1 = inlined_call_operand.vmem [shape: f32[128,1], index: 1, kind: input, shape index: {}]
  %s2 = inlined_call_operand.vmem [shape: f32[128,1], index: 2, kind: input, shape index: {}]
  %s3 = inlined_call_operand.vmem [shape: f32[2,128,512], index: 3, kind: output, shape index: {}]
  %s4 = sld [smem:[#allocation0]]
  $region45: #{decoder_forward.5} parent=0
    _
  %s6 = ssub.s32 1, %s4
  %s7 = scalar_select 0, %s6, %s4
  loop: start=0, step=1, limit=4
  $region2: #{decoder_forward.5} parent=0 // loop_pre_header
    _
  $region3: #{decoder_forward.5} parent=0 // loop_header
    %s9 = sphi 0, %s13
    %p10 = scmp.ge.s32.totalorder %s9, 4
    %s19 = sphi 0, %s21
    %s22 = sphi 0, %s19
    %s23 = sphi 0, %s22
    %s39 = sphi 0, %s23
    %s43 = sphi 0, %s43
    %s45 = sphi 0, %s43
    %s46 = sphi 0, %s45
    %s60 = sphi 0, %s46
    %s64 = sphi 0, %s64
    %s66 = sphi 0, %s64
    %s67 = sphi 0, %s66
    %s81 = sphi 0, %s67
    %s87 = sphi 0, %s89
    %s90 = sphi 0, %s87
    %s91 = sphi 0, %s90
    %s107 = sphi 0, %s91
  $region4: #{decoder_forward.5} parent=0 // loop_header_branch
    %12 = sbr.rel (%p10) target = $region8
  $region5: #{decoder_forward.5} parent=0 // loop_body
    %s14 = ssub.s32 %s9, 1
    %s15 = ssub.s32 %s9, 2
    %s16 = sadd.s32 %s9, 1
    %s17 = ssub.s32 %s9, %s16
    %p18 = scmp.eq.s32.totalorder %s17, 0
    %s20 = sadd.s32 %s19, 1
    %s21 = scalar_select %p18, %s19, %s20
    %p24 = pneg %p18
    %p25 = scmp.eq.s32.totalorder %s9, 1
    %p26 = por %p24, %p25
    %p27 = scmp.ne.s32.totalorder %s19, %s22
    %p28 = scmp.eq.s32.totalorder %s9, 0
    %p29 = por %p27, %p28
    %p30 = scmp.ne.s32.totalorder %s19, %s22
    %p31 = scmp.eq.s32.totalorder %s14, 1
    %p32 = por %p30, %p31
    %p33 = scmp.ne.s32.totalorder %s22, %s23
    %p34 = scmp.eq.s32.totalorder %s14, 0
    %p35 = por %p33, %p34
    %p36 = scmp.ne.s32.totalorder %s22, %s23
    %p37 = scmp.eq.s32.totalorder %s15, 1
    %p38 = por %p36, %p37
    %p40 = scmp.ne.s32.totalorder %s23, %s39
    %p41 = scmp.eq.s32.totalorder %s15, 0
    %p42 = por %p40, %p41
    %s44 = sadd.s32 %s43, 1
    %p47 = scmp.eq.s32.totalorder %s9, 1
    %p48 = scmp.ne.s32.totalorder %s43, %s45
    %p49 = scmp.eq.s32.totalorder %s9, 0
    %p50 = por %p48, %p49
    %p51 = scmp.ne.s32.totalorder %s43, %s45
    %p52 = scmp.eq.s32.totalorder %s14, 1
    %p53 = por %p51, %p52
    %p54 = scmp.ne.s32.totalorder %s45, %s46
    %p55 = scmp.eq.s32.totalorder %s14, 0
    %p56 = por %p54, %p55
    %p57 = scmp.ne.s32.totalorder %s45, %s46
    %p58 = scmp.eq.s32.totalorder %s15, 1
    %p59 = por %p57, %p58
    %p61 = scmp.ne.s32.totalorder %s46, %s60
    %p62 = scmp.eq.s32.totalorder %s15, 0
    %p63 = por %p61, %p62
    %s65 = sadd.s32 %s64, 1
    %p68 = scmp.eq.s32.totalorder %s9, 1
    %p69 = scmp.ne.s32.totalorder %s64, %s66
    %p70 = scmp.eq.s32.totalorder %s9, 0
    %p71 = por %p69, %p70
    %p72 = scmp.ne.s32.totalorder %s64, %s66
    %p73 = scmp.eq.s32.totalorder %s14, 1
    %p74 = por %p72, %p73
    %p75 = scmp.ne.s32.totalorder %s66, %s67
    %p76 = scmp.eq.s32.totalorder %s14, 0
    %p77 = por %p75, %p76
    %p78 = scmp.ne.s32.totalorder %s66, %s67
    %p79 = scmp.eq.s32.totalorder %s15, 1
    %p80 = por %p78, %p79
    %p82 = scmp.ne.s32.totalorder %s67, %s81
    %p83 = scmp.eq.s32.totalorder %s15, 0
    %p84 = por %p82, %p83
    %s85 = ssub.s32 %s9, %s16
    %p86 = scmp.eq.s32.totalorder %s85, 0
    %s88 = sadd.s32 %s87, 1
    %s89 = scalar_select %p86, %s87, %s88
    %p92 = pneg %p86
    %p93 = scmp.eq.s32.totalorder %s9, 1
    %p94 = por %p92, %p93
    %p95 = scmp.ne.s32.totalorder %s87, %s90
    %p96 = scmp.eq.s32.totalorder %s9, 0
    %p97 = por %p95, %p96
    %p98 = scmp.ne.s32.totalorder %s87, %s90
    %p99 = scmp.eq.s32.totalorder %s14, 1
    %p100 = por %p98, %p99
    %p101 = scmp.ne.s32.totalorder %s90, %s91
    %p102 = scmp.eq.s32.totalorder %s14, 0
    %p103 = por %p101, %p102
    %p104 = scmp.ne.s32.totalorder %s90, %s91
    %p105 = scmp.eq.s32.totalorder %s15, 1
    %p106 = por %p104, %p105
    %p108 = scmp.ne.s32.totalorder %s91, %s107
    %p109 = scmp.eq.s32.totalorder %s15, 0
    %p110 = por %p108, %p109
    %p111 = scmp.le.s32.totalorder 1, %s9
    %p112 = scmp.lt.s32.totalorder %s9, 3
    %p113 = pnand %p111, %p112
    %p114 = pneg %p113
    // Predicated region
    $region9: #{decoder_forward.5} parent=5 // pred_check
      _
    $region10: #{decoder_forward.5} parent=5 // pred_check_branch
      %116 = sbr.rel (%p113) target = $region12
    $region11: #{decoder_forward.5} parent=5 // pred_region
      %s117 = ssub.s32 %s9, 1
      // Predicated region
      $region13: #{decoder_forward.5} parent=11 // pred_check
        %p118 = pneg %p56
      $region14: #{decoder_forward.5} parent=11 // pred_check_branch
        %120 = sbr.rel (%p118) target = $region16
      $region15: #{decoder_forward.5} parent=11 // pred_region
        _
      $region16: #{decoder_forward.5} parent=11 // pred_fallthru
        _
      // Predicated region
      $region17: #{decoder_forward.5} parent=11 // pred_check
        %p121 = pneg %p77
      $region18: #{decoder_forward.5} parent=11 // pred_check_branch
        %123 = sbr.rel (%p121) target = $region20
      $region19: #{decoder_forward.5} parent=11 // pred_region
        _
      $region20: #{decoder_forward.5} parent=11 // pred_fallthru
        _
    $region12: #{decoder_forward.5} parent=5 // pred_fallthru
      _
    %p124 = scmp.lt.s32.totalorder %s9, 2
    // Predicated region
    $region21: #{decoder_forward.5} parent=5 // pred_check
      %p125 = pneg %p124
    $region22: #{decoder_forward.5} parent=5 // pred_check_branch
      %127 = sbr.rel (%p125) target = $region24
    $region23: #{decoder_forward.5} parent=5 // pred_region
      // Predicated region
      $region25: #{decoder_forward.5} parent=23 // pred_check
        %p128 = pneg %p29
      $region26: #{decoder_forward.5} parent=23 // pred_check_branch
        %130 = sbr.rel (%p128) target = $region28
      $region27: #{decoder_forward.5} parent=23 // pred_region
        %p131 = scmp.lt.s32.totalorder %s9, 1
        %s132 = scalar_select %p131, %s9, 1
        %s133 = smul.addr %s132, 64
        %s134 = smul.addr %s133, 4
        %s135 = scalar_lea.vmem %s0, %s134
      $region28: #{decoder_forward.5} parent=23 // pred_fallthru
        _
    $region24: #{decoder_forward.5} parent=5 // pred_fallthru
      _
    %p136 = scmp.le.s32.totalorder 1, %s9
    %p137 = scmp.lt.s32.totalorder %s9, 3
    %p138 = pnand %p136, %p137
    %p139 = pneg %p138
    // Predicated region
    $region29: #{decoder_forward.5} parent=5 // pred_check
      _
    $region30: #{decoder_forward.5} parent=5 // pred_check_branch
      %141 = sbr.rel (%p138) target = $region32
    $region31: #{decoder_forward.5} parent=5 // pred_region
      %s142 = ssub.s32 %s9, 1
      %p143 = scmp.lt.s32.totalorder %s14, 1
      %s144 = scalar_select %p143, %s14, 1
      %s145 = smul.addr %s144, 64
      %s146 = smul.addr %s145, 4
      %s147 = scalar_lea.vmem %s0, %s146
      %p148 = pneg %p35
      %p149 = pneg %p32
      %p150 = pneg %p56
      %p151 = pneg %p53
      %p152 = pneg %p77
      %p153 = pneg %p74
      %p154 = pneg %p103
      %p155 = pneg %p100
      %p156 = scmp.lt.s32.totalorder %s14, 1
      %s157 = scalar_select %p156, %s14, 1
      %s158 = smul.addr %s157, 64
      %s159 = smul.addr %s158, 8
      %s160 = scalar_lea.vmem %s3, %s159
      %p161 = scmp.lt.s32.totalorder %s14, 1
      %s162 = scalar_select %p161, %s14, 1
      %s163 = smul.addr %s162, 64
      %s164 = smul.addr %s163, 4
      %s165 = scalar_lea.vmem %s0, %s164
      %p166 = scmp.lt.s32.totalorder %s14, 1
      %s167 = scalar_select %p166, %s14, 1
      %s168 = smul.addr %s167, 64
      %s169 = smul.addr %s168, 8
      %s170 = scalar_lea.vmem %s3, %s169
      %v171 = vld [vmem:[%s165] sm:$0xff]
      %v172 = vld [vmem:[%s165 + $0x8] sm:$0xff]
      %v173 = vld [vmem:[%s165 + $0x10] sm:$0xff]
      %v174 = vld [vmem:[%s165 + $0x18] sm:$0xff]
      %v175 = vld [vmem:[%s165 + $0x20] sm:$0xff]
      %v176 = vld [vmem:[%s165 + $0x28] sm:$0xff]
      %v177 = vld [vmem:[%s165 + $0x30] sm:$0xff]
      %v178 = vld [vmem:[%s165 + $0x38] sm:$0xff]
      %v179 = vld [vmem:[%s165 + $0x40] sm:$0xff]
      %v180 = vld [vmem:[%s165 + $0x48] sm:$0xff]
      %v181 = vld [vmem:[%s165 + $0x50] sm:$0xff]
      %v182 = vld [vmem:[%s165 + $0x58] sm:$0xff]
      %v183 = vld [vmem:[%s165 + $0x60] sm:$0xff]
      %v184 = vld [vmem:[%s165 + $0x68] sm:$0xff]
      %v185 = vld [vmem:[%s165 + $0x70] sm:$0xff]
      %v186 = vld [vmem:[%s165 + $0x78] sm:$0xff]
      %v187 = vld [vmem:[%s165 + $0x80] sm:$0xff]
      %v188 = vld [vmem:[%s165 + $0x88] sm:$0xff]
      %v189 = vld [vmem:[%s165 + $0x90] sm:$0xff]
      %v190 = vld [vmem:[%s165 + $0x98] sm:$0xff]
      %v191 = vld [vmem:[%s165 + $0xa0] sm:$0xff]
      %v192 = vld [vmem:[%s165 + $0xa8] sm:$0xff]
      %v193 = vld [vmem:[%s165 + $0xb0] sm:$0xff]
      %v194 = vld [vmem:[%s165 + $0xb8] sm:$0xff]
      %v195 = vld [vmem:[%s165 + $0xc0] sm:$0xff]
      %v196 = vld [vmem:[%s165 + $0xc8] sm:$0xff]
      %v197 = vld [vmem:[%s165 + $0xd0] sm:$0xff]
      %v198 = vld [vmem:[%s165 + $0xd8] sm:$0xff]
      %v199 = vld [vmem:[%s165 + $0xe0] sm:$0xff]
      %v200 = vld [vmem:[%s165 + $0xe8] sm:$0xff]
      %v201 = vld [vmem:[%s165 + $0xf0] sm:$0xff]
      %v202 = vld [vmem:[%s165 + $0xf8] sm:$0xff]
      %v203 = vunpack.c.l.bf16 %v171
      %v204 = vunpack.c.h.bf16 %v171
      %v205 = vunpack.c.l.bf16 %v172
      %v206 = vunpack.c.h.bf16 %v172
      %v207 = vunpack.c.l.bf16 %v173
      %v208 = vunpack.c.h.bf16 %v173
      %v209 = vunpack.c.l.bf16 %v174
      %v210 = vunpack.c.h.bf16 %v174
      %v211 = vunpack.c.l.bf16 %v175
      %v212 = vunpack.c.h.bf16 %v175
      %v213 = vunpack.c.l.bf16 %v176
      %v214 = vunpack.c.h.bf16 %v176
      %v215 = vunpack.c.l.bf16 %v177
      %v216 = vunpack.c.h.bf16 %v177
      %v217 = vunpack.c.l.bf16 %v178
      %v218 = vunpack.c.h.bf16 %v178
      %v219 = vunpack.c.l.bf16 %v179
      %v220 = vunpack.c.h.bf16 %v179
      %v221 = vunpack.c.l.bf16 %v180
      %v222 = vunpack.c.h.bf16 %v180
      %v223 = vunpack.c.l.bf16 %v181
      %v224 = vunpack.c.h.bf16 %v181
      %v225 = vunpack.c.l.bf16 %v182
      %v226 = vunpack.c.h.bf16 %v182
      %v227 = vunpack.c.l.bf16 %v183
      %v228 = vunpack.c.h.bf16 %v183
      %v229 = vunpack.c.l.bf16 %v184
      %v230 = vunpack.c.h.bf16 %v184
      %v231 = vunpack.c.l.bf16 %v185
      %v232 = vunpack.c.h.bf16 %v185
      %v233 = vunpack.c.l.bf16 %v186
      %v234 = vunpack.c.h.bf16 %v186
      %v235 = vunpack.c.l.bf16 %v187
      %v236 = vunpack.c.h.bf16 %v187
      %v237 = vunpack.c.l.bf16 %v188
      %v238 = vunpack.c.h.bf16 %v188
      %v239 = vunpack.c.l.bf16 %v189
      %v240 = vunpack.c.h.bf16 %v189
      %v241 = vunpack.c.l.bf16 %v190
      %v242 = vunpack.c.h.bf16 %v190
      %v243 = vunpack.c.l.bf16 %v191
      %v244 = vunpack.c.h.bf16 %v191
      %v245 = vunpack.c.l.bf16 %v192
      %v246 = vunpack.c.h.bf16 %v192
      %v247 = vunpack.c.l.bf16 %v193
      %v248 = vunpack.c.h.bf16 %v193
      %v249 = vunpack.c.l.bf16 %v194
      %v250 = vunpack.c.h.bf16 %v194
      %v251 = vunpack.c.l.bf16 %v195
      %v252 = vunpack.c.h.bf16 %v195
      %v253 = vunpack.c.l.bf16 %v196
      %v254 = vunpack.c.h.bf16 %v196
      %v255 = vunpack.c.l.bf16 %v197
      %v256 = vunpack.c.h.bf16 %v197
      %v257 = vunpack.c.l.bf16 %v198
      %v258 = vunpack.c.h.bf16 %v198
      %v259 = vunpack.c.l.bf16 %v199
      %v260 = vunpack.c.h.bf16 %v199
      %v261 = vunpack.c.l.bf16 %v200
      %v262 = vunpack.c.h.bf16 %v200
      %v263 = vunpack.c.l.bf16 %v201
      %v264 = vunpack.c.h.bf16 %v201
      %v265 = vunpack.c.l.bf16 %v202
      %v266 = vunpack.c.h.bf16 %v202
      %v267 = vld [vmem:[%s1] sm:$0xff]
      %v268 = vld [vmem:[%s1 + $0x8] sm:$0xff]
      %v269 = vld [vmem:[%s1 + $0x10] sm:$0xff]
      %v270 = vld [vmem:[%s1 + $0x18] sm:$0xff]
      %v271 = vld [vmem:[%s1 + $0x20] sm:$0xff]
      %v272 = vld [vmem:[%s1 + $0x28] sm:$0xff]
      %v273 = vld [vmem:[%s1 + $0x30] sm:$0xff]
      %v274 = vld [vmem:[%s1 + $0x38] sm:$0xff]
      %v275 = vld [vmem:[%s1 + $0x40] sm:$0xff]
      %v276 = vld [vmem:[%s1 + $0x48] sm:$0xff]
      %v277 = vld [vmem:[%s1 + $0x50] sm:$0xff]
      %v278 = vld [vmem:[%s1 + $0x58] sm:$0xff]
      %v279 = vld [vmem:[%s1 + $0x60] sm:$0xff]
      %v280 = vld [vmem:[%s1 + $0x68] sm:$0xff]
      %v281 = vld [vmem:[%s1 + $0x70] sm:$0xff]
      %v282 = vld [vmem:[%s1 + $0x78] sm:$0xff]
      %284 = vset.pattern.permute.xlu0 0
      %285 = vperm.xlu0 %284, %v267
      %v286 = vpop.permute.xlu0 %285
      %289 = vset.pattern.permute.xlu0 0
      %290 = vperm.xlu0 %289, %v268
      %v291 = vpop.permute.xlu0 %290
      %294 = vset.pattern.permute.xlu0 0
      %295 = vperm.xlu0 %294, %v269
      %v296 = vpop.permute.xlu0 %295
      %299 = vset.pattern.permute.xlu0 0
      %300 = vperm.xlu0 %299, %v270
      %v301 = vpop.permute.xlu0 %300
      %304 = vset.pattern.permute.xlu0 0
      %305 = vperm.xlu0 %304, %v271
      %v306 = vpop.permute.xlu0 %305
      %309 = vset.pattern.permute.xlu0 0
      %310 = vperm.xlu0 %309, %v272
      %v311 = vpop.permute.xlu0 %310
      %314 = vset.pattern.permute.xlu0 0
      %315 = vperm.xlu0 %314, %v273
      %v316 = vpop.permute.xlu0 %315
      %319 = vset.pattern.permute.xlu0 0
      %320 = vperm.xlu0 %319, %v274
      %v321 = vpop.permute.xlu0 %320
      %324 = vset.pattern.permute.xlu0 0
      %325 = vperm.xlu0 %324, %v275
      %v326 = vpop.permute.xlu0 %325
      %329 = vset.pattern.permute.xlu0 0
      %330 = vperm.xlu0 %329, %v276
      %v331 = vpop.permute.xlu0 %330
      %334 = vset.pattern.permute.xlu0 0
      %335 = vperm.xlu0 %334, %v277
      %v336 = vpop.permute.xlu0 %335
      %339 = vset.pattern.permute.xlu0 0
      %340 = vperm.xlu0 %339, %v278
      %v341 = vpop.permute.xlu0 %340
      %344 = vset.pattern.permute.xlu0 0
      %345 = vperm.xlu0 %344, %v279
      %v346 = vpop.permute.xlu0 %345
      %349 = vset.pattern.permute.xlu0 0
      %350 = vperm.xlu0 %349, %v280
      %v351 = vpop.permute.xlu0 %350
      %354 = vset.pattern.permute.xlu0 0
      %355 = vperm.xlu0 %354, %v281
      %v356 = vpop.permute.xlu0 %355
      %359 = vset.pattern.permute.xlu0 0
      %360 = vperm.xlu0 %359, %v282
      %v361 = vpop.permute.xlu0 %360
      %v363 = vmul.f32 %v203, %v286
      %v364 = vmul.f32 %v204, %v286
      %v365 = vmul.f32 %v205, %v286
      %v366 = vmul.f32 %v206, %v286
      %v367 = vmul.f32 %v207, %v291
      %v368 = vmul.f32 %v208, %v291
      %v369 = vmul.f32 %v209, %v291
      %v370 = vmul.f32 %v210, %v291
      %v371 = vmul.f32 %v211, %v296
      %v372 = vmul.f32 %v212, %v296
      %v373 = vmul.f32 %v213, %v296
      %v374 = vmul.f32 %v214, %v296
      %v375 = vmul.f32 %v215, %v301
      %v376 = vmul.f32 %v216, %v301
      %v377 = vmul.f32 %v217, %v301
      %v378 = vmul.f32 %v218, %v301
      %v379 = vmul.f32 %v219, %v306
      %v380 = vmul.f32 %v220, %v306
      %v381 = vmul.f32 %v221, %v306
      %v382 = vmul.f32 %v222, %v306
      %v383 = vmul.f32 %v223, %v311
      %v384 = vmul.f32 %v224, %v311
      %v385 = vmul.f32 %v225, %v311
      %v386 = vmul.f32 %v226, %v311
      %v387 = vmul.f32 %v227, %v316
      %v388 = vmul.f32 %v228, %v316
      %v389 = vmul.f32 %v229, %v316
      %v390 = vmul.f32 %v230, %v316
      %v391 = vmul.f32 %v231, %v321
      %v392 = vmul.f32 %v232, %v321
      %v393 = vmul.f32 %v233, %v321
      %v394 = vmul.f32 %v234, %v321
      %v395 = vmul.f32 %v235, %v326
      %v396 = vmul.f32 %v236, %v326
      %v397 = vmul.f32 %v237, %v326
      %v398 = vmul.f32 %v238, %v326
      %v399 = vmul.f32 %v239, %v331
      %v400 = vmul.f32 %v240, %v331
      %v401 = vmul.f32 %v241, %v331
      %v402 = vmul.f32 %v242, %v331
      %v403 = vmul.f32 %v243, %v336
      %v404 = vmul.f32 %v244, %v336
      %v405 = vmul.f32 %v245, %v336
      %v406 = vmul.f32 %v246, %v336
      %v407 = vmul.f32 %v247, %v341
      %v408 = vmul.f32 %v248, %v341
      %v409 = vmul.f32 %v249, %v341
      %v410 = vmul.f32 %v250, %v341
      %v411 = vmul.f32 %v251, %v346
      %v412 = vmul.f32 %v252, %v346
      %v413 = vmul.f32 %v253, %v346
      %v414 = vmul.f32 %v254, %v346
      %v415 = vmul.f32 %v255, %v351
      %v416 = vmul.f32 %v256, %v351
      %v417 = vmul.f32 %v257, %v351
      %v418 = vmul.f32 %v258, %v351
      %v419 = vmul.f32 %v259, %v356
      %v420 = vmul.f32 %v260, %v356
      %v421 = vmul.f32 %v261, %v356
      %v422 = vmul.f32 %v262, %v356
      %v423 = vmul.f32 %v263, %v361
      %v424 = vmul.f32 %v264, %v361
      %v425 = vmul.f32 %v265, %v361
      %v426 = vmul.f32 %v266, %v361
      %v427 = vld [vmem:[%s2] sm:$0xff]
      %v428 = vld [vmem:[%s2 + $0x8] sm:$0xff]
      %v429 = vld [vmem:[%s2 + $0x10] sm:$0xff]
      %v430 = vld [vmem:[%s2 + $0x18] sm:$0xff]
      %v431 = vld [vmem:[%s2 + $0x20] sm:$0xff]
      %v432 = vld [vmem:[%s2 + $0x28] sm:$0xff]
      %v433 = vld [vmem:[%s2 + $0x30] sm:$0xff]
      %v434 = vld [vmem:[%s2 + $0x38] sm:$0xff]
      %v435 = vld [vmem:[%s2 + $0x40] sm:$0xff]
      %v436 = vld [vmem:[%s2 + $0x48] sm:$0xff]
      %v437 = vld [vmem:[%s2 + $0x50] sm:$0xff]
      %v438 = vld [vmem:[%s2 + $0x58] sm:$0xff]
      %v439 = vld [vmem:[%s2 + $0x60] sm:$0xff]
      %v440 = vld [vmem:[%s2 + $0x68] sm:$0xff]
      %v441 = vld [vmem:[%s2 + $0x70] sm:$0xff]
      %v442 = vld [vmem:[%s2 + $0x78] sm:$0xff]
      %444 = vset.pattern.permute.xlu0 0
      %445 = vperm.xlu0 %444, %v427
      %v446 = vpop.permute.xlu0 %445
      %449 = vset.pattern.permute.xlu0 0
      %450 = vperm.xlu0 %449, %v428
      %v451 = vpop.permute.xlu0 %450
      %454 = vset.pattern.permute.xlu0 0
      %455 = vperm.xlu0 %454, %v429
      %v456 = vpop.permute.xlu0 %455
      %459 = vset.pattern.permute.xlu0 0
      %460 = vperm.xlu0 %459, %v430
      %v461 = vpop.permute.xlu0 %460
      %464 = vset.pattern.permute.xlu0 0
      %465 = vperm.xlu0 %464, %v431
      %v466 = vpop.permute.xlu0 %465
      %469 = vset.pattern.permute.xlu0 0
      %470 = vperm.xlu0 %469, %v432
      %v471 = vpop.permute.xlu0 %470
      %474 = vset.pattern.permute.xlu0 0
      %475 = vperm.xlu0 %474, %v433
      %v476 = vpop.permute.xlu0 %475
      %479 = vset.pattern.permute.xlu0 0
      %480 = vperm.xlu0 %479, %v434
      %v481 = vpop.permute.xlu0 %480
      %484 = vset.pattern.permute.xlu0 0
      %485 = vperm.xlu0 %484, %v435
      %v486 = vpop.permute.xlu0 %485
      %489 = vset.pattern.permute.xlu0 0
      %490 = vperm.xlu0 %489, %v436
      %v491 = vpop.permute.xlu0 %490
      %494 = vset.pattern.permute.xlu0 0
      %495 = vperm.xlu0 %494, %v437
      %v496 = vpop.permute.xlu0 %495
      %499 = vset.pattern.permute.xlu0 0
      %500 = vperm.xlu0 %499, %v438
      %v501 = vpop.permute.xlu0 %500
      %504 = vset.pattern.permute.xlu0 0
      %505 = vperm.xlu0 %504, %v439
      %v506 = vpop.permute.xlu0 %505
      %509 = vset.pattern.permute.xlu0 0
      %510 = vperm.xlu0 %509, %v440
      %v511 = vpop.permute.xlu0 %510
      %514 = vset.pattern.permute.xlu0 0
      %515 = vperm.xlu0 %514, %v441
      %v516 = vpop.permute.xlu0 %515
      %519 = vset.pattern.permute.xlu0 0
      %520 = vperm.xlu0 %519, %v442
      %v521 = vpop.permute.xlu0 %520
      %v523 = vadd.f32 %v363, %v446
      %v524 = vadd.f32 %v364, %v446
      %v525 = vadd.f32 %v365, %v446
      %v526 = vadd.f32 %v366, %v446
      %v527 = vadd.f32 %v367, %v451
      %v528 = vadd.f32 %v368, %v451
      %v529 = vadd.f32 %v369, %v451
      %v530 = vadd.f32 %v370, %v451
      %v531 = vadd.f32 %v371, %v456
      %v532 = vadd.f32 %v372, %v456
      %v533 = vadd.f32 %v373, %v456
      %v534 = vadd.f32 %v374, %v456
      %v535 = vadd.f32 %v375, %v461
      %v536 = vadd.f32 %v376, %v461
      %v537 = vadd.f32 %v377, %v461
      %v538 = vadd.f32 %v378, %v461
      %v539 = vadd.f32 %v379, %v466
      %v540 = vadd.f32 %v380, %v466
      %v541 = vadd.f32 %v381, %v466
      %v542 = vadd.f32 %v382, %v466
      %v543 = vadd.f32 %v383, %v471
      %v544 = vadd.f32 %v384, %v471
      %v545 = vadd.f32 %v385, %v471
      %v546 = vadd.f32 %v386, %v471
      %v547 = vadd.f32 %v387, %v476
      %v548 = vadd.f32 %v388, %v476
      %v549 = vadd.f32 %v389, %v476
      %v550 = vadd.f32 %v390, %v476
      %v551 = vadd.f32 %v391, %v481
      %v552 = vadd.f32 %v392, %v481
      %v553 = vadd.f32 %v393, %v481
      %v554 = vadd.f32 %v394, %v481
      %v555 = vadd.f32 %v395, %v486
      %v556 = vadd.f32 %v396, %v486
      %v557 = vadd.f32 %v397, %v486
      %v558 = vadd.f32 %v398, %v486
      %v559 = vadd.f32 %v399, %v491
      %v560 = vadd.f32 %v400, %v491
      %v561 = vadd.f32 %v401, %v491
      %v562 = vadd.f32 %v402, %v491
      %v563 = vadd.f32 %v403, %v496
      %v564 = vadd.f32 %v404, %v496
      %v565 = vadd.f32 %v405, %v496
      %v566 = vadd.f32 %v406, %v496
      %v567 = vadd.f32 %v407, %v501
      %v568 = vadd.f32 %v408, %v501
      %v569 = vadd.f32 %v409, %v501
      %v570 = vadd.f32 %v410, %v501
      %v571 = vadd.f32 %v411, %v506
      %v572 = vadd.f32 %v412, %v506
      %v573 = vadd.f32 %v413, %v506
      %v574 = vadd.f32 %v414, %v506
      %v575 = vadd.f32 %v415, %v511
      %v576 = vadd.f32 %v416, %v511
      %v577 = vadd.f32 %v417, %v511
      %v578 = vadd.f32 %v418, %v511
      %v579 = vadd.f32 %v419, %v516
      %v580 = vadd.f32 %v420, %v516
      %v581 = vadd.f32 %v421, %v516
      %v582 = vadd.f32 %v422, %v516
      %v583 = vadd.f32 %v423, %v521
      %v584 = vadd.f32 %v424, %v521
      %v585 = vadd.f32 %v425, %v521
      %v586 = vadd.f32 %v426, %v521
      %v587 = vrot.slane %v523, 4
      %v588 = vmax.f32 %v523, %v587
      %v589 = vrot.slane %v588, 2
      %v590 = vmax.f32 %v588, %v589
      %v591 = vrot.slane %v590, 1
      %v592 = vmax.f32 %v590, %v591
      %v593 = vrot.slane %v524, 4
      %v594 = vmax.f32 %v524, %v593
      %v595 = vrot.slane %v594, 2
      %v596 = vmax.f32 %v594, %v595
      %v597 = vrot.slane %v596, 1
      %v598 = vmax.f32 %v596, %v597
      %v599 = vrot.slane %v525, 4
      %v600 = vmax.f32 %v525, %v599
      %v601 = vrot.slane %v600, 2
      %v602 = vmax.f32 %v600, %v601
      %v603 = vrot.slane %v602, 1
      %v604 = vmax.f32 %v602, %v603
      %v605 = vrot.slane %v526, 4
      %v606 = vmax.f32 %v526, %v605
      %v607 = vrot.slane %v606, 2
      %v608 = vmax.f32 %v606, %v607
      %v609 = vrot.slane %v608, 1
      %v610 = vmax.f32 %v608, %v609
      %v611 = vrot.slane %v527, 4
      %v612 = vmax.f32 %v527, %v611
      %v613 = vrot.slane %v612, 2
      %v614 = vmax.f32 %v612, %v613
      %v615 = vrot.slane %v614, 1
      %v616 = vmax.f32 %v614, %v615
      %v617 = vrot.slane %v528, 4
      %v618 = vmax.f32 %v528, %v617
      %v619 = vrot.slane %v618, 2
      %v620 = vmax.f32 %v618, %v619
      %v621 = vrot.slane %v620, 1
      %v622 = vmax.f32 %v620, %v621
      %v623 = vrot.slane %v529, 4
      %v624 = vmax.f32 %v529, %v623
      %v625 = vrot.slane %v624, 2
      %v626 = vmax.f32 %v624, %v625
      %v627 = vrot.slane %v626, 1
      %v628 = vmax.f32 %v626, %v627
      %v629 = vrot.slane %v530, 4
      %v630 = vmax.f32 %v530, %v629
      %v631 = vrot.slane %v630, 2
      %v632 = vmax.f32 %v630, %v631
      %v633 = vrot.slane %v632, 1
      %v634 = vmax.f32 %v632, %v633
      %v635 = vrot.slane %v531, 4
      %v636 = vmax.f32 %v531, %v635
      %v637 = vrot.slane %v636, 2
      %v638 = vmax.f32 %v636, %v637
      %v639 = vrot.slane %v638, 1
      %v640 = vmax.f32 %v638, %v639
      %v641 = vrot.slane %v532, 4
      %v642 = vmax.f32 %v532, %v641
      %v643 = vrot.slane %v642, 2
      %v644 = vmax.f32 %v642, %v643
      %v645 = vrot.slane %v644, 1
      %v646 = vmax.f32 %v644, %v645
      %v647 = vrot.slane %v533, 4
      %v648 = vmax.f32 %v533, %v647
      %v649 = vrot.slane %v648, 2
      %v650 = vmax.f32 %v648, %v649
      %v651 = vrot.slane %v650, 1
      %v652 = vmax.f32 %v650, %v651
      %v653 = vrot.slane %v534, 4
      %v654 = vmax.f32 %v534, %v653
      %v655 = vrot.slane %v654, 2
      %v656 = vmax.f32 %v654, %v655
      %v657 = vrot.slane %v656, 1
      %v658 = vmax.f32 %v656, %v657
      %v659 = vrot.slane %v535, 4
      %v660 = vmax.f32 %v535, %v659
      %v661 = vrot.slane %v660, 2
      %v662 = vmax.f32 %v660, %v661
      %v663 = vrot.slane %v662, 1
      %v664 = vmax.f32 %v662, %v663
      %v665 = vrot.slane %v536, 4
      %v666 = vmax.f32 %v536, %v665
      %v667 = vrot.slane %v666, 2
      %v668 = vmax.f32 %v666, %v667
      %v669 = vrot.slane %v668, 1
      %v670 = vmax.f32 %v668, %v669
      %v671 = vrot.slane %v537, 4
      %v672 = vmax.f32 %v537, %v671
      %v673 = vrot.slane %v672, 2
      %v674 = vmax.f32 %v672, %v673
      %v675 = vrot.slane %v674, 1
      %v676 = vmax.f32 %v674, %v675
      %v677 = vrot.slane %v538, 4
      %v678 = vmax.f32 %v538, %v677
      %v679 = vrot.slane %v678, 2
      %v680 = vmax.f32 %v678, %v679
      %v681 = vrot.slane %v680, 1
      %v682 = vmax.f32 %v680, %v681
      %v683 = vrot.slane %v539, 4
      %v684 = vmax.f32 %v539, %v683
      %v685 = vrot.slane %v684, 2
      %v686 = vmax.f32 %v684, %v685
      %v687 = vrot.slane %v686, 1
      %v688 = vmax.f32 %v686, %v687
      %v689 = vrot.slane %v540, 4
      %v690 = vmax.f32 %v540, %v689
      %v691 = vrot.slane %v690, 2
      %v692 = vmax.f32 %v690, %v691
      %v693 = vrot.slane %v692, 1
      %v694 = vmax.f32 %v692, %v693
      %v695 = vrot.slane %v541, 4
      %v696 = vmax.f32 %v541, %v695
      %v697 = vrot.slane %v696, 2
      %v698 = vmax.f32 %v696, %v697
      %v699 = vrot.slane %v698, 1
      %v700 = vmax.f32 %v698, %v699
      %v701 = vrot.slane %v542, 4
      %v702 = vmax.f32 %v542, %v701
      %v703 = vrot.slane %v702, 2
      %v704 = vmax.f32 %v702, %v703
      %v705 = vrot.slane %v704, 1
      %v706 = vmax.f32 %v704, %v705
      %v707 = vrot.slane %v543, 4
      %v708 = vmax.f32 %v543, %v707
      %v709 = vrot.slane %v708, 2
      %v710 = vmax.f32 %v708, %v709
      %v711 = vrot.slane %v710, 1
      %v712 = vmax.f32 %v710, %v711
      %v713 = vrot.slane %v544, 4
      %v714 = vmax.f32 %v544, %v713
      %v715 = vrot.slane %v714, 2
      %v716 = vmax.f32 %v714, %v715
      %v717 = vrot.slane %v716, 1
      %v718 = vmax.f32 %v716, %v717
      %v719 = vrot.slane %v545, 4
      %v720 = vmax.f32 %v545, %v719
      %v721 = vrot.slane %v720, 2
      %v722 = vmax.f32 %v720, %v721
      %v723 = vrot.slane %v722, 1
      %v724 = vmax.f32 %v722, %v723
      %v725 = vrot.slane %v546, 4
      %v726 = vmax.f32 %v546, %v725
      %v727 = vrot.slane %v726, 2
      %v728 = vmax.f32 %v726, %v727
      %v729 = vrot.slane %v728, 1
      %v730 = vmax.f32 %v728, %v729
      %v731 = vrot.slane %v547, 4
      %v732 = vmax.f32 %v547, %v731
      %v733 = vrot.slane %v732, 2
      %v734 = vmax.f32 %v732, %v733
      %v735 = vrot.slane %v734, 1
      %v736 = vmax.f32 %v734, %v735
      %v737 = vrot.slane %v548, 4
      %v738 = vmax.f32 %v548, %v737
      %v739 = vrot.slane %v738, 2
      %v740 = vmax.f32 %v738, %v739
      %v741 = vrot.slane %v740, 1
      %v742 = vmax.f32 %v740, %v741
      %v743 = vrot.slane %v549, 4
      %v744 = vmax.f32 %v549, %v743
      %v745 = vrot.slane %v744, 2
      %v746 = vmax.f32 %v744, %v745
      %v747 = vrot.slane %v746, 1
      %v748 = vmax.f32 %v746, %v747
      %v749 = vrot.slane %v550, 4
      %v750 = vmax.f32 %v550, %v749
      %v751 = vrot.slane %v750, 2
      %v752 = vmax.f32 %v750, %v751
      %v753 = vrot.slane %v752, 1
      %v754 = vmax.f32 %v752, %v753
      %v755 = vrot.slane %v551, 4
      %v756 = vmax.f32 %v551, %v755
      %v757 = vrot.slane %v756, 2
      %v758 = vmax.f32 %v756, %v757
      %v759 = vrot.slane %v758, 1
      %v760 = vmax.f32 %v758, %v759
      %v761 = vrot.slane %v552, 4
      %v762 = vmax.f32 %v552, %v761
      %v763 = vrot.slane %v762, 2
      %v764 = vmax.f32 %v762, %v763
      %v765 = vrot.slane %v764, 1
      %v766 = vmax.f32 %v764, %v765
      %v767 = vrot.slane %v553, 4
      %v768 = vmax.f32 %v553, %v767
      %v769 = vrot.slane %v768, 2
      %v770 = vmax.f32 %v768, %v769
      %v771 = vrot.slane %v770, 1
      %v772 = vmax.f32 %v770, %v771
      %v773 = vrot.slane %v554, 4
      %v774 = vmax.f32 %v554, %v773
      %v775 = vrot.slane %v774, 2
      %v776 = vmax.f32 %v774, %v775
      %v777 = vrot.slane %v776, 1
      %v778 = vmax.f32 %v776, %v777
      %v779 = vrot.slane %v555, 4
      %v780 = vmax.f32 %v555, %v779
      %v781 = vrot.slane %v780, 2
      %v782 = vmax.f32 %v780, %v781
      %v783 = vrot.slane %v782, 1
      %v784 = vmax.f32 %v782, %v783
      %v785 = vrot.slane %v556, 4
      %v786 = vmax.f32 %v556, %v785
      %v787 = vrot.slane %v786, 2
      %v788 = vmax.f32 %v786, %v787
      %v789 = vrot.slane %v788, 1
      %v790 = vmax.f32 %v788, %v789
      %v791 = vrot.slane %v557, 4
      %v792 = vmax.f32 %v557, %v791
      %v793 = vrot.slane %v792, 2
      %v794 = vmax.f32 %v792, %v793
      %v795 = vrot.slane %v794, 1
      %v796 = vmax.f32 %v794, %v795
      %v797 = vrot.slane %v558, 4
      %v798 = vmax.f32 %v558, %v797
      %v799 = vrot.slane %v798, 2
      %v800 = vmax.f32 %v798, %v799
      %v801 = vrot.slane %v800, 1
      %v802 = vmax.f32 %v800, %v801
      %v803 = vrot.slane %v559, 4
      %v804 = vmax.f32 %v559, %v803
      %v805 = vrot.slane %v804, 2
      %v806 = vmax.f32 %v804, %v805
      %v807 = vrot.slane %v806, 1
      %v808 = vmax.f32 %v806, %v807
      %v809 = vrot.slane %v560, 4
      %v810 = vmax.f32 %v560, %v809
      %v811 = vrot.slane %v810, 2
      %v812 = vmax.f32 %v810, %v811
      %v813 = vrot.slane %v812, 1
      %v814 = vmax.f32 %v812, %v813
      %v815 = vrot.slane %v561, 4
      %v816 = vmax.f32 %v561, %v815
      %v817 = vrot.slane %v816, 2
      %v818 = vmax.f32 %v816, %v817
      %v819 = vrot.slane %v818, 1
      %v820 = vmax.f32 %v818, %v819
      %v821 = vrot.slane %v562, 4
      %v822 = vmax.f32 %v562, %v821
      %v823 = vrot.slane %v822, 2
      %v824 = vmax.f32 %v822, %v823
      %v825 = vrot.slane %v824, 1
      %v826 = vmax.f32 %v824, %v825
      %v827 = vrot.slane %v563, 4
      %v828 = vmax.f32 %v563, %v827
      %v829 = vrot.slane %v828, 2
      %v830 = vmax.f32 %v828, %v829
      %v831 = vrot.slane %v830, 1
      %v832 = vmax.f32 %v830, %v831
      %v833 = vrot.slane %v564, 4
      %v834 = vmax.f32 %v564, %v833
      %v835 = vrot.slane %v834, 2
      %v836 = vmax.f32 %v834, %v835
      %v837 = vrot.slane %v836, 1
      %v838 = vmax.f32 %v836, %v837
      %v839 = vrot.slane %v565, 4
      %v840 = vmax.f32 %v565, %v839
      %v841 = vrot.slane %v840, 2
      %v842 = vmax.f32 %v840, %v841
      %v843 = vrot.slane %v842, 1
      %v844 = vmax.f32 %v842, %v843
      %v845 = vrot.slane %v566, 4
      %v846 = vmax.f32 %v566, %v845
      %v847 = vrot.slane %v846, 2
      %v848 = vmax.f32 %v846, %v847
      %v849 = vrot.slane %v848, 1
      %v850 = vmax.f32 %v848, %v849
      %v851 = vrot.slane %v567, 4
      %v852 = vmax.f32 %v567, %v851
      %v853 = vrot.slane %v852, 2
      %v854 = vmax.f32 %v852, %v853
      %v855 = vrot.slane %v854, 1
      %v856 = vmax.f32 %v854, %v855
      %v857 = vrot.slane %v568, 4
      %v858 = vmax.f32 %v568, %v857
      %v859 = vrot.slane %v858, 2
      %v860 = vmax.f32 %v858, %v859
      %v861 = vrot.slane %v860, 1
      %v862 = vmax.f32 %v860, %v861
      %v863 = vrot.slane %v569, 4
      %v864 = vmax.f32 %v569, %v863
      %v865 = vrot.slane %v864, 2
      %v866 = vmax.f32 %v864, %v865
      %v867 = vrot.slane %v866, 1
      %v868 = vmax.f32 %v866, %v867
      %v869 = vrot.slane %v570, 4
      %v870 = vmax.f32 %v570, %v869
      %v871 = vrot.slane %v870, 2
      %v872 = vmax.f32 %v870, %v871
      %v873 = vrot.slane %v872, 1
      %v874 = vmax.f32 %v872, %v873
      %v875 = vrot.slane %v571, 4
      %v876 = vmax.f32 %v571, %v875
      %v877 = vrot.slane %v876, 2
      %v878 = vmax.f32 %v876, %v877
      %v879 = vrot.slane %v878, 1
      %v880 = vmax.f32 %v878, %v879
      %v881 = vrot.slane %v572, 4
      %v882 = vmax.f32 %v572, %v881
      %v883 = vrot.slane %v882, 2
      %v884 = vmax.f32 %v882, %v883
      %v885 = vrot.slane %v884, 1
      %v886 = vmax.f32 %v884, %v885
      %v887 = vrot.slane %v573, 4
      %v888 = vmax.f32 %v573, %v887
      %v889 = vrot.slane %v888, 2
      %v890 = vmax.f32 %v888, %v889
      %v891 = vrot.slane %v890, 1
      %v892 = vmax.f32 %v890, %v891
      %v893 = vrot.slane %v574, 4
      %v894 = vmax.f32 %v574, %v893
      %v895 = vrot.slane %v894, 2
      %v896 = vmax.f32 %v894, %v895
      %v897 = vrot.slane %v896, 1
      %v898 = vmax.f32 %v896, %v897
      %v899 = vrot.slane %v575, 4
      %v900 = vmax.f32 %v575, %v899
      %v901 = vrot.slane %v900, 2
      %v902 = vmax.f32 %v900, %v901
      %v903 = vrot.slane %v902, 1
      %v904 = vmax.f32 %v902, %v903
      %v905 = vrot.slane %v576, 4
      %v906 = vmax.f32 %v576, %v905
      %v907 = vrot.slane %v906, 2
      %v908 = vmax.f32 %v906, %v907
      %v909 = vrot.slane %v908, 1
      %v910 = vmax.f32 %v908, %v909
      %v911 = vrot.slane %v577, 4
      %v912 = vmax.f32 %v577, %v911
      %v913 = vrot.slane %v912, 2
      %v914 = vmax.f32 %v912, %v913
      %v915 = vrot.slane %v914, 1
      %v916 = vmax.f32 %v914, %v915
      %v917 = vrot.slane %v578, 4
      %v918 = vmax.f32 %v578, %v917
      %v919 = vrot.slane %v918, 2
      %v920 = vmax.f32 %v918, %v919
      %v921 = vrot.slane %v920, 1
      %v922 = vmax.f32 %v920, %v921
      %v923 = vrot.slane %v579, 4
      %v924 = vmax.f32 %v579, %v923
      %v925 = vrot.slane %v924, 2
      %v926 = vmax.f32 %v924, %v925
      %v927 = vrot.slane %v926, 1
      %v928 = vmax.f32 %v926, %v927
      %v929 = vrot.slane %v580, 4
      %v930 = vmax.f32 %v580, %v929
      %v931 = vrot.slane %v930, 2
      %v932 = vmax.f32 %v930, %v931
      %v933 = vrot.slane %v932, 1
      %v934 = vmax.f32 %v932, %v933
      %v935 = vrot.slane %v581, 4
      %v936 = vmax.f32 %v581, %v935
      %v937 = vrot.slane %v936, 2
      %v938 = vmax.f32 %v936, %v937
      %v939 = vrot.slane %v938, 1
      %v940 = vmax.f32 %v938, %v939
      %v941 = vrot.slane %v582, 4
      %v942 = vmax.f32 %v582, %v941
      %v943 = vrot.slane %v942, 2
      %v944 = vmax.f32 %v942, %v943
      %v945 = vrot.slane %v944, 1
      %v946 = vmax.f32 %v944, %v945
      %v947 = vrot.slane %v583, 4
      %v948 = vmax.f32 %v583, %v947
      %v949 = vrot.slane %v948, 2
      %v950 = vmax.f32 %v948, %v949
      %v951 = vrot.slane %v950, 1
      %v952 = vmax.f32 %v950, %v951
      %v953 = vrot.slane %v584, 4
      %v954 = vmax.f32 %v584, %v953
      %v955 = vrot.slane %v954, 2
      %v956 = vmax.f32 %v954, %v955
      %v957 = vrot.slane %v956, 1
      %v958 = vmax.f32 %v956, %v957
      %v959 = vrot.slane %v585, 4
      %v960 = vmax.f32 %v585, %v959
      %v961 = vrot.slane %v960, 2
      %v962 = vmax.f32 %v960, %v961
      %v963 = vrot.slane %v962, 1
      %v964 = vmax.f32 %v962, %v963
      %v965 = vrot.slane %v586, 4
      %v966 = vmax.f32 %v586, %v965
      %v967 = vrot.slane %v966, 2
      %v968 = vmax.f32 %v966, %v967
      %v969 = vrot.slane %v968, 1
      %v970 = vmax.f32 %v968, %v969
      %v971 = vsub.f32 %v523, %v592
      %v972 = vsub.f32 %v524, %v598
      %v973 = vsub.f32 %v525, %v604
      %v974 = vsub.f32 %v526, %v610
      %v975 = vsub.f32 %v527, %v616
      %v976 = vsub.f32 %v528, %v622
      %v977 = vsub.f32 %v529, %v628
      %v978 = vsub.f32 %v530, %v634
      %v979 = vsub.f32 %v531, %v640
      %v980 = vsub.f32 %v532, %v646
      %v981 = vsub.f32 %v533, %v652
      %v982 = vsub.f32 %v534, %v658
      %v983 = vsub.f32 %v535, %v664
      %v984 = vsub.f32 %v536, %v670
      %v985 = vsub.f32 %v537, %v676
      %v986 = vsub.f32 %v538, %v682
      %v987 = vsub.f32 %v539, %v688
      %v988 = vsub.f32 %v540, %v694
      %v989 = vsub.f32 %v541, %v700
      %v990 = vsub.f32 %v542, %v706
      %v991 = vsub.f32 %v543, %v712
      %v992 = vsub.f32 %v544, %v718
      %v993 = vsub.f32 %v545, %v724
      %v994 = vsub.f32 %v546, %v730
      %v995 = vsub.f32 %v547, %v736
      %v996 = vsub.f32 %v548, %v742
      %v997 = vsub.f32 %v549, %v748
      %v998 = vsub.f32 %v550, %v754
      %v999 = vsub.f32 %v551, %v760
      %v1000 = vsub.f32 %v552, %v766
      %v1001 = vsub.f32 %v553, %v772
      %v1002 = vsub.f32 %v554, %v778
      %v1003 = vsub.f32 %v555, %v784
      %v1004 = vsub.f32 %v556, %v790
      %v1005 = vsub.f32 %v557, %v796
      %v1006 = vsub.f32 %v558, %v802
      %v1007 = vsub.f32 %v559, %v808
      %v1008 = vsub.f32 %v560, %v814
      %v1009 = vsub.f32 %v561, %v820
      %v1010 = vsub.f32 %v562, %v826
      %v1011 = vsub.f32 %v563, %v832
      %v1012 = vsub.f32 %v564, %v838
      %v1013 = vsub.f32 %v565, %v844
      %v1014 = vsub.f32 %v566, %v850
      %v1015 = vsub.f32 %v567, %v856
      %v1016 = vsub.f32 %v568, %v862
      %v1017 = vsub.f32 %v569, %v868
      %v1018 = vsub.f32 %v570, %v874
      %v1019 = vsub.f32 %v571, %v880
      %v1020 = vsub.f32 %v572, %v886
      %v1021 = vsub.f32 %v573, %v892
      %v1022 = vsub.f32 %v574, %v898
      %v1023 = vsub.f32 %v575, %v904
      %v1024 = vsub.f32 %v576, %v910
      %v1025 = vsub.f32 %v577, %v916
      %v1026 = vsub.f32 %v578, %v922
      %v1027 = vsub.f32 %v579, %v928
      %v1028 = vsub.f32 %v580, %v934
      %v1029 = vsub.f32 %v581, %v940
      %v1030 = vsub.f32 %v582, %v946
      %v1031 = vsub.f32 %v583, %v952
      %v1032 = vsub.f32 %v584, %v958
      %v1033 = vsub.f32 %v585, %v964
      %v1034 = vsub.f32 %v586, %v970
      %v1035 = vmul.f32 %v971, 1.442695
      %v1036 = vpow.pop %v1035
      %v1037 = vmul.f32 %v972, 1.442695
      %v1038 = vpow.pop %v1037
      %v1039 = vmul.f32 %v973, 1.442695
      %v1040 = vpow.pop %v1039
      %v1041 = vmul.f32 %v974, 1.442695
      %v1042 = vpow.pop %v1041
      %v1043 = vmul.f32 %v975, 1.442695
      %v1044 = vpow.pop %v1043
      %v1045 = vmul.f32 %v976, 1.442695
      %v1046 = vpow.pop %v1045
      %v1047 = vmul.f32 %v977, 1.442695
      %v1048 = vpow.pop %v1047
      %v1049 = vmul.f32 %v978, 1.442695
      %v1050 = vpow.pop %v1049
      %v1051 = vmul.f32 %v979, 1.442695
      %v1052 = vpow.pop %v1051
      %v1053 = vmul.f32 %v980, 1.442695
      %v1054 = vpow.pop %v1053
      %v1055 = vmul.f32 %v981, 1.442695
      %v1056 = vpow.pop %v1055
      %v1057 = vmul.f32 %v982, 1.442695
      %v1058 = vpow.pop %v1057
      %v1059 = vmul.f32 %v983, 1.442695
      %v1060 = vpow.pop %v1059
      %v1061 = vmul.f32 %v984, 1.442695
      %v1062 = vpow.pop %v1061
      %v1063 = vmul.f32 %v985, 1.442695
      %v1064 = vpow.pop %v1063
      %v1065 = vmul.f32 %v986, 1.442695
      %v1066 = vpow.pop %v1065
      %v1067 = vmul.f32 %v987, 1.442695
      %v1068 = vpow.pop %v1067
      %v1069 = vmul.f32 %v988, 1.442695
      %v1070 = vpow.pop %v1069
      %v1071 = vmul.f32 %v989, 1.442695
      %v1072 = vpow.pop %v1071
      %v1073 = vmul.f32 %v990, 1.442695
      %v1074 = vpow.pop %v1073
      %v1075 = vmul.f32 %v991, 1.442695
      %v1076 = vpow.pop %v1075
      %v1077 = vmul.f32 %v992, 1.442695
      %v1078 = vpow.pop %v1077
      %v1079 = vmul.f32 %v993, 1.442695
      %v1080 = vpow.pop %v1079
      %v1081 = vmul.f32 %v994, 1.442695
      %v1082 = vpow.pop %v1081
      %v1083 = vmul.f32 %v995, 1.442695
      %v1084 = vpow.pop %v1083
      %v1085 = vmul.f32 %v996, 1.442695
      %v1086 = vpow.pop %v1085
      %v1087 = vmul.f32 %v997, 1.442695
      %v1088 = vpow.pop %v1087
      %v1089 = vmul.f32 %v998, 1.442695
      %v1090 = vpow.pop %v1089
      %v1091 = vmul.f32 %v999, 1.442695
      %v1092 = vpow.pop %v1091
      %v1093 = vmul.f32 %v1000, 1.442695
      %v1094 = vpow.pop %v1093
      %v1095 = vmul.f32 %v1001, 1.442695
      %v1096 = vpow.pop %v1095
      %v1097 = vmul.f32 %v1002, 1.442695
      %v1098 = vpow.pop %v1097
      %v1099 = vmul.f32 %v1003, 1.442695
      %v1100 = vpow.pop %v1099
      %v1101 = vmul.f32 %v1004, 1.442695
      %v1102 = vpow.pop %v1101
      %v1103 = vmul.f32 %v1005, 1.442695
      %v1104 = vpow.pop %v1103
      %v1105 = vmul.f32 %v1006, 1.442695
      %v1106 = vpow.pop %v1105
      %v1107 = vmul.f32 %v1007, 1.442695
      %v1108 = vpow.pop %v1107
      %v1109 = vmul.f32 %v1008, 1.442695
      %v1110 = vpow.pop %v1109
      %v1111 = vmul.f32 %v1009, 1.442695
      %v1112 = vpow.pop %v1111
      %v1113 = vmul.f32 %v1010, 1.442695
      %v1114 = vpow.pop %v1113
      %v1115 = vmul.f32 %v1011, 1.442695
      %v1116 = vpow.pop %v1115
      %v1117 = vmul.f32 %v1012, 1.442695
      %v1118 = vpow.pop %v1117
      %v1119 = vmul.f32 %v1013, 1.442695
      %v1120 = vpow.pop %v1119
      %v1121 = vmul.f32 %v1014, 1.442695
      %v1122 = vpow.pop %v1121
      %v1123 = vmul.f32 %v1015, 1.442695
      %v1124 = vpow.pop %v1123
      %v1125 = vmul.f32 %v1016, 1.442695
      %v1126 = vpow.pop %v1125
      %v1127 = vmul.f32 %v1017, 1.442695
      %v1128 = vpow.pop %v1127
      %v1129 = vmul.f32 %v1018, 1.442695
      %v1130 = vpow.pop %v1129
      %v1131 = vmul.f32 %v1019, 1.442695
      %v1132 = vpow.pop %v1131
      %v1133 = vmul.f32 %v1020, 1.442695
      %v1134 = vpow.pop %v1133
      %v1135 = vmul.f32 %v1021, 1.442695
      %v1136 = vpow.pop %v1135
      %v1137 = vmul.f32 %v1022, 1.442695
      %v1138 = vpow.pop %v1137
      %v1139 = vmul.f32 %v1023, 1.442695
      %v1140 = vpow.pop %v1139
      %v1141 = vmul.f32 %v1024, 1.442695
      %v1142 = vpow.pop %v1141
      %v1143 = vmul.f32 %v1025, 1.442695
      %v1144 = vpow.pop %v1143
      %v1145 = vmul.f32 %v1026, 1.442695
      %v1146 = vpow.pop %v1145
      %v1147 = vmul.f32 %v1027, 1.442695
      %v1148 = vpow.pop %v1147
      %v1149 = vmul.f32 %v1028, 1.442695
      %v1150 = vpow.pop %v1149
      %v1151 = vmul.f32 %v1029, 1.442695
      %v1152 = vpow.pop %v1151
      %v1153 = vmul.f32 %v1030, 1.442695
      %v1154 = vpow.pop %v1153
      %v1155 = vmul.f32 %v1031, 1.442695
      %v1156 = vpow.pop %v1155
      %v1157 = vmul.f32 %v1032, 1.442695
      %v1158 = vpow.pop %v1157
      %v1159 = vmul.f32 %v1033, 1.442695
      %v1160 = vpow.pop %v1159
      %v1161 = vmul.f32 %v1034, 1.442695
      %v1162 = vpow.pop %v1161
      %v1163 = vrot.slane %v1036, 4
      %v1164 = vadd.f32 %v1036, %v1163
      %v1165 = vrot.slane %v1164, 2
      %v1166 = vadd.f32 %v1164, %v1165
      %v1167 = vrot.slane %v1166, 1
      %v1168 = vadd.f32 %v1166, %v1167
      %v1169 = vrot.slane %v1038, 4
      %v1170 = vadd.f32 %v1038, %v1169
      %v1171 = vrot.slane %v1170, 2
      %v1172 = vadd.f32 %v1170, %v1171
      %v1173 = vrot.slane %v1172, 1
      %v1174 = vadd.f32 %v1172, %v1173
      %v1175 = vrot.slane %v1040, 4
      %v1176 = vadd.f32 %v1040, %v1175
      %v1177 = vrot.slane %v1176, 2
      %v1178 = vadd.f32 %v1176, %v1177
      %v1179 = vrot.slane %v1178, 1
      %v1180 = vadd.f32 %v1178, %v1179
      %v1181 = vrot.slane %v1042, 4
      %v1182 = vadd.f32 %v1042, %v1181
      %v1183 = vrot.slane %v1182, 2
      %v1184 = vadd.f32 %v1182, %v1183
      %v1185 = vrot.slane %v1184, 1
      %v1186 = vadd.f32 %v1184, %v1185
      %v1187 = vrot.slane %v1044, 4
      %v1188 = vadd.f32 %v1044, %v1187
      %v1189 = vrot.slane %v1188, 2
      %v1190 = vadd.f32 %v1188, %v1189
      %v1191 = vrot.slane %v1190, 1
      %v1192 = vadd.f32 %v1190, %v1191
      %v1193 = vrot.slane %v1046, 4
      %v1194 = vadd.f32 %v1046, %v1193
      %v1195 = vrot.slane %v1194, 2
      %v1196 = vadd.f32 %v1194, %v1195
      %v1197 = vrot.slane %v1196, 1
      %v1198 = vadd.f32 %v1196, %v1197
      %v1199 = vrot.slane %v1048, 4
      %v1200 = vadd.f32 %v1048, %v1199
      %v1201 = vrot.slane %v1200, 2
      %v1202 = vadd.f32 %v1200, %v1201
      %v1203 = vrot.slane %v1202, 1
      %v1204 = vadd.f32 %v1202, %v1203
      %v1205 = vrot.slane %v1050, 4
      %v1206 = vadd.f32 %v1050, %v1205
      %v1207 = vrot.slane %v1206, 2
      %v1208 = vadd.f32 %v1206, %v1207
      %v1209 = vrot.slane %v1208, 1
      %v1210 = vadd.f32 %v1208, %v1209
      %v1211 = vrot.slane %v1052, 4
      %v1212 = vadd.f32 %v1052, %v1211
      %v1213 = vrot.slane %v1212, 2
      %v1214 = vadd.f32 %v1212, %v1213
      %v1215 = vrot.slane %v1214, 1
      %v1216 = vadd.f32 %v1214, %v1215
      %v1217 = vrot.slane %v1054, 4
      %v1218 = vadd.f32 %v1054, %v1217
      %v1219 = vrot.slane %v1218, 2
      %v1220 = vadd.f32 %v1218, %v1219
      %v1221 = vrot.slane %v1220, 1
      %v1222 = vadd.f32 %v1220, %v1221
      %v1223 = vrot.slane %v1056, 4
      %v1224 = vadd.f32 %v1056, %v1223
      %v1225 = vrot.slane %v1224, 2
      %v1226 = vadd.f32 %v1224, %v1225
      %v1227 = vrot.slane %v1226, 1
      %v1228 = vadd.f32 %v1226, %v1227
      %v1229 = vrot.slane %v1058, 4
      %v1230 = vadd.f32 %v1058, %v1229
      %v1231 = vrot.slane %v1230, 2
      %v1232 = vadd.f32 %v1230, %v1231
      %v1233 = vrot.slane %v1232, 1
      %v1234 = vadd.f32 %v1232, %v1233
      %v1235 = vrot.slane %v1060, 4
      %v1236 = vadd.f32 %v1060, %v1235
      %v1237 = vrot.slane %v1236, 2
      %v1238 = vadd.f32 %v1236, %v1237
      %v1239 = vrot.slane %v1238, 1
      %v1240 = vadd.f32 %v1238, %v1239
      %v1241 = vrot.slane %v1062, 4
      %v1242 = vadd.f32 %v1062, %v1241
      %v1243 = vrot.slane %v1242, 2
      %v1244 = vadd.f32 %v1242, %v1243
      %v1245 = vrot.slane %v1244, 1
      %v1246 = vadd.f32 %v1244, %v1245
      %v1247 = vrot.slane %v1064, 4
      %v1248 = vadd.f32 %v1064, %v1247
      %v1249 = vrot.slane %v1248, 2
      %v1250 = vadd.f32 %v1248, %v1249
      %v1251 = vrot.slane %v1250, 1
      %v1252 = vadd.f32 %v1250, %v1251
      %v1253 = vrot.slane %v1066, 4
      %v1254 = vadd.f32 %v1066, %v1253
      %v1255 = vrot.slane %v1254, 2
      %v1256 = vadd.f32 %v1254, %v1255
      %v1257 = vrot.slane %v1256, 1
      %v1258 = vadd.f32 %v1256, %v1257
      %v1259 = vrot.slane %v1068, 4
      %v1260 = vadd.f32 %v1068, %v1259
      %v1261 = vrot.slane %v1260, 2
      %v1262 = vadd.f32 %v1260, %v1261
      %v1263 = vrot.slane %v1262, 1
      %v1264 = vadd.f32 %v1262, %v1263
      %v1265 = vrot.slane %v1070, 4
      %v1266 = vadd.f32 %v1070, %v1265
      %v1267 = vrot.slane %v1266, 2
      %v1268 = vadd.f32 %v1266, %v1267
      %v1269 = vrot.slane %v1268, 1
      %v1270 = vadd.f32 %v1268, %v1269
      %v1271 = vrot.slane %v1072, 4
      %v1272 = vadd.f32 %v1072, %v1271
      %v1273 = vrot.slane %v1272, 2
      %v1274 = vadd.f32 %v1272, %v1273
      %v1275 = vrot.slane %v1274, 1
      %v1276 = vadd.f32 %v1274, %v1275
      %v1277 = vrot.slane %v1074, 4
      %v1278 = vadd.f32 %v1074, %v1277
      %v1279 = vrot.slane %v1278, 2
      %v1280 = vadd.f32 %v1278, %v1279
      %v1281 = vrot.slane %v1280, 1
      %v1282 = vadd.f32 %v1280, %v1281
      %v1283 = vrot.slane %v1076, 4
      %v1284 = vadd.f32 %v1076, %v1283
      %v1285 = vrot.slane %v1284, 2
      %v1286 = vadd.f32 %v1284, %v1285
      %v1287 = vrot.slane %v1286, 1
      %v1288 = vadd.f32 %v1286, %v1287
      %v1289 = vrot.slane %v1078, 4
      %v1290 = vadd.f32 %v1078, %v1289
      %v1291 = vrot.slane %v1290, 2
      %v1292 = vadd.f32 %v1290, %v1291
      %v1293 = vrot.slane %v1292, 1
      %v1294 = vadd.f32 %v1292, %v1293
      %v1295 = vrot.slane %v1080, 4
      %v1296 = vadd.f32 %v1080, %v1295
      %v1297 = vrot.slane %v1296, 2
      %v1298 = vadd.f32 %v1296, %v1297
      %v1299 = vrot.slane %v1298, 1
      %v1300 = vadd.f32 %v1298, %v1299
      %v1301 = vrot.slane %v1082, 4
      %v1302 = vadd.f32 %v1082, %v1301
      %v1303 = vrot.slane %v1302, 2
      %v1304 = vadd.f32 %v1302, %v1303
      %v1305 = vrot.slane %v1304, 1
      %v1306 = vadd.f32 %v1304, %v1305
      %v1307 = vrot.slane %v1084, 4
      %v1308 = vadd.f32 %v1084, %v1307
      %v1309 = vrot.slane %v1308, 2
      %v1310 = vadd.f32 %v1308, %v1309
      %v1311 = vrot.slane %v1310, 1
      %v1312 = vadd.f32 %v1310, %v1311
      %v1313 = vrot.slane %v1086, 4
      %v1314 = vadd.f32 %v1086, %v1313
      %v1315 = vrot.slane %v1314, 2
      %v1316 = vadd.f32 %v1314, %v1315
      %v1317 = vrot.slane %v1316, 1
      %v1318 = vadd.f32 %v1316, %v1317
      %v1319 = vrot.slane %v1088, 4
      %v1320 = vadd.f32 %v1088, %v1319
      %v1321 = vrot.slane %v1320, 2
      %v1322 = vadd.f32 %v1320, %v1321
      %v1323 = vrot.slane %v1322, 1
      %v1324 = vadd.f32 %v1322, %v1323
      %v1325 = vrot.slane %v1090, 4
      %v1326 = vadd.f32 %v1090, %v1325
      %v1327 = vrot.slane %v1326, 2
      %v1328 = vadd.f32 %v1326, %v1327
      %v1329 = vrot.slane %v1328, 1
      %v1330 = vadd.f32 %v1328, %v1329
      %v1331 = vrot.slane %v1092, 4
      %v1332 = vadd.f32 %v1092, %v1331
      %v1333 = vrot.slane %v1332, 2
      %v1334 = vadd.f32 %v1332, %v1333
      %v1335 = vrot.slane %v1334, 1
      %v1336 = vadd.f32 %v1334, %v1335
      %v1337 = vrot.slane %v1094, 4
      %v1338 = vadd.f32 %v1094, %v1337
      %v1339 = vrot.slane %v1338, 2
      %v1340 = vadd.f32 %v1338, %v1339
      %v1341 = vrot.slane %v1340, 1
      %v1342 = vadd.f32 %v1340, %v1341
      %v1343 = vrot.slane %v1096, 4
      %v1344 = vadd.f32 %v1096, %v1343
      %v1345 = vrot.slane %v1344, 2
      %v1346 = vadd.f32 %v1344, %v1345
      %v1347 = vrot.slane %v1346, 1
      %v1348 = vadd.f32 %v1346, %v1347
      %v1349 = vrot.slane %v1098, 4
      %v1350 = vadd.f32 %v1098, %v1349
      %v1351 = vrot.slane %v1350, 2
      %v1352 = vadd.f32 %v1350, %v1351
      %v1353 = vrot.slane %v1352, 1
      %v1354 = vadd.f32 %v1352, %v1353
      %v1355 = vrot.slane %v1100, 4
      %v1356 = vadd.f32 %v1100, %v1355
      %v1357 = vrot.slane %v1356, 2
      %v1358 = vadd.f32 %v1356, %v1357
      %v1359 = vrot.slane %v1358, 1
      %v1360 = vadd.f32 %v1358, %v1359
      %v1361 = vrot.slane %v1102, 4
      %v1362 = vadd.f32 %v1102, %v1361
      %v1363 = vrot.slane %v1362, 2
      %v1364 = vadd.f32 %v1362, %v1363
      %v1365 = vrot.slane %v1364, 1
      %v1366 = vadd.f32 %v1364, %v1365
      %v1367 = vrot.slane %v1104, 4
      %v1368 = vadd.f32 %v1104, %v1367
      %v1369 = vrot.slane %v1368, 2
      %v1370 = vadd.f32 %v1368, %v1369
      %v1371 = vrot.slane %v1370, 1
      %v1372 = vadd.f32 %v1370, %v1371
      %v1373 = vrot.slane %v1106, 4
      %v1374 = vadd.f32 %v1106, %v1373
      %v1375 = vrot.slane %v1374, 2
      %v1376 = vadd.f32 %v1374, %v1375
      %v1377 = vrot.slane %v1376, 1
      %v1378 = vadd.f32 %v1376, %v1377
      %v1379 = vrot.slane %v1108, 4
      %v1380 = vadd.f32 %v1108, %v1379
      %v1381 = vrot.slane %v1380, 2
      %v1382 = vadd.f32 %v1380, %v1381
      %v1383 = vrot.slane %v1382, 1
      %v1384 = vadd.f32 %v1382, %v1383
      %v1385 = vrot.slane %v1110, 4
      %v1386 = vadd.f32 %v1110, %v1385
      %v1387 = vrot.slane %v1386, 2
      %v1388 = vadd.f32 %v1386, %v1387
      %v1389 = vrot.slane %v1388, 1
      %v1390 = vadd.f32 %v1388, %v1389
      %v1391 = vrot.slane %v1112, 4
      %v1392 = vadd.f32 %v1112, %v1391
      %v1393 = vrot.slane %v1392, 2
      %v1394 = vadd.f32 %v1392, %v1393
      %v1395 = vrot.slane %v1394, 1
      %v1396 = vadd.f32 %v1394, %v1395
      %v1397 = vrot.slane %v1114, 4
      %v1398 = vadd.f32 %v1114, %v1397
      %v1399 = vrot.slane %v1398, 2
      %v1400 = vadd.f32 %v1398, %v1399
      %v1401 = vrot.slane %v1400, 1
      %v1402 = vadd.f32 %v1400, %v1401
      %v1403 = vrot.slane %v1116, 4
      %v1404 = vadd.f32 %v1116, %v1403
      %v1405 = vrot.slane %v1404, 2
      %v1406 = vadd.f32 %v1404, %v1405
      %v1407 = vrot.slane %v1406, 1
      %v1408 = vadd.f32 %v1406, %v1407
      %v1409 = vrot.slane %v1118, 4
      %v1410 = vadd.f32 %v1118, %v1409
      %v1411 = vrot.slane %v1410, 2
      %v1412 = vadd.f32 %v1410, %v1411
      %v1413 = vrot.slane %v1412, 1
      %v1414 = vadd.f32 %v1412, %v1413
      %v1415 = vrot.slane %v1120, 4
      %v1416 = vadd.f32 %v1120, %v1415
      %v1417 = vrot.slane %v1416, 2
      %v1418 = vadd.f32 %v1416, %v1417
      %v1419 = vrot.slane %v1418, 1
      %v1420 = vadd.f32 %v1418, %v1419
      %v1421 = vrot.slane %v1122, 4
      %v1422 = vadd.f32 %v1122, %v1421
      %v1423 = vrot.slane %v1422, 2
      %v1424 = vadd.f32 %v1422, %v1423
      %v1425 = vrot.slane %v1424, 1
      %v1426 = vadd.f32 %v1424, %v1425
      %v1427 = vrot.slane %v1124, 4
      %v1428 = vadd.f32 %v1124, %v1427
      %v1429 = vrot.slane %v1428, 2
      %v1430 = vadd.f32 %v1428, %v1429
      %v1431 = vrot.slane %v1430, 1
      %v1432 = vadd.f32 %v1430, %v1431
      %v1433 = vrot.slane %v1126, 4
      %v1434 = vadd.f32 %v1126, %v1433
      %v1435 = vrot.slane %v1434, 2
      %v1436 = vadd.f32 %v1434, %v1435
      %v1437 = vrot.slane %v1436, 1
      %v1438 = vadd.f32 %v1436, %v1437
      %v1439 = vrot.slane %v1128, 4
      %v1440 = vadd.f32 %v1128, %v1439
      %v1441 = vrot.slane %v1440, 2
      %v1442 = vadd.f32 %v1440, %v1441
      %v1443 = vrot.slane %v1442, 1
      %v1444 = vadd.f32 %v1442, %v1443
      %v1445 = vrot.slane %v1130, 4
      %v1446 = vadd.f32 %v1130, %v1445
      %v1447 = vrot.slane %v1446, 2
      %v1448 = vadd.f32 %v1446, %v1447
      %v1449 = vrot.slane %v1448, 1
      %v1450 = vadd.f32 %v1448, %v1449
      %v1451 = vrot.slane %v1132, 4
      %v1452 = vadd.f32 %v1132, %v1451
      %v1453 = vrot.slane %v1452, 2
      %v1454 = vadd.f32 %v1452, %v1453
      %v1455 = vrot.slane %v1454, 1
      %v1456 = vadd.f32 %v1454, %v1455
      %v1457 = vrot.slane %v1134, 4
      %v1458 = vadd.f32 %v1134, %v1457
      %v1459 = vrot.slane %v1458, 2
      %v1460 = vadd.f32 %v1458, %v1459
      %v1461 = vrot.slane %v1460, 1
      %v1462 = vadd.f32 %v1460, %v1461
      %v1463 = vrot.slane %v1136, 4
      %v1464 = vadd.f32 %v1136, %v1463
      %v1465 = vrot.slane %v1464, 2
      %v1466 = vadd.f32 %v1464, %v1465
      %v1467 = vrot.slane %v1466, 1
      %v1468 = vadd.f32 %v1466, %v1467
      %v1469 = vrot.slane %v1138, 4
      %v1470 = vadd.f32 %v1138, %v1469
      %v1471 = vrot.slane %v1470, 2
      %v1472 = vadd.f32 %v1470, %v1471
      %v1473 = vrot.slane %v1472, 1
      %v1474 = vadd.f32 %v1472, %v1473
      %v1475 = vrot.slane %v1140, 4
      %v1476 = vadd.f32 %v1140, %v1475
      %v1477 = vrot.slane %v1476, 2
      %v1478 = vadd.f32 %v1476, %v1477
      %v1479 = vrot.slane %v1478, 1
      %v1480 = vadd.f32 %v1478, %v1479
      %v1481 = vrot.slane %v1142, 4
      %v1482 = vadd.f32 %v1142, %v1481
      %v1483 = vrot.slane %v1482, 2
      %v1484 = vadd.f32 %v1482, %v1483
      %v1485 = vrot.slane %v1484, 1
      %v1486 = vadd.f32 %v1484, %v1485
      %v1487 = vrot.slane %v1144, 4
      %v1488 = vadd.f32 %v1144, %v1487
      %v1489 = vrot.slane %v1488, 2
      %v1490 = vadd.f32 %v1488, %v1489
      %v1491 = vrot.slane %v1490, 1
      %v1492 = vadd.f32 %v1490, %v1491
      %v1493 = vrot.slane %v1146, 4
      %v1494 = vadd.f32 %v1146, %v1493
      %v1495 = vrot.slane %v1494, 2
      %v1496 = vadd.f32 %v1494, %v1495
      %v1497 = vrot.slane %v1496, 1
      %v1498 = vadd.f32 %v1496, %v1497
      %v1499 = vrot.slane %v1148, 4
      %v1500 = vadd.f32 %v1148, %v1499
      %v1501 = vrot.slane %v1500, 2
      %v1502 = vadd.f32 %v1500, %v1501
      %v1503 = vrot.slane %v1502, 1
      %v1504 = vadd.f32 %v1502, %v1503
      %v1505 = vrot.slane %v1150, 4
      %v1506 = vadd.f32 %v1150, %v1505
      %v1507 = vrot.slane %v1506, 2
      %v1508 = vadd.f32 %v1506, %v1507
      %v1509 = vrot.slane %v1508, 1
      %v1510 = vadd.f32 %v1508, %v1509
      %v1511 = vrot.slane %v1152, 4
      %v1512 = vadd.f32 %v1152, %v1511
      %v1513 = vrot.slane %v1512, 2
      %v1514 = vadd.f32 %v1512, %v1513
      %v1515 = vrot.slane %v1514, 1
      %v1516 = vadd.f32 %v1514, %v1515
      %v1517 = vrot.slane %v1154, 4
      %v1518 = vadd.f32 %v1154, %v1517
      %v1519 = vrot.slane %v1518, 2
      %v1520 = vadd.f32 %v1518, %v1519
      %v1521 = vrot.slane %v1520, 1
      %v1522 = vadd.f32 %v1520, %v1521
      %v1523 = vrot.slane %v1156, 4
      %v1524 = vadd.f32 %v1156, %v1523
      %v1525 = vrot.slane %v1524, 2
      %v1526 = vadd.f32 %v1524, %v1525
      %v1527 = vrot.slane %v1526, 1
      %v1528 = vadd.f32 %v1526, %v1527
      %v1529 = vrot.slane %v1158, 4
      %v1530 = vadd.f32 %v1158, %v1529
      %v1531 = vrot.slane %v1530, 2
      %v1532 = vadd.f32 %v1530, %v1531
      %v1533 = vrot.slane %v1532, 1
      %v1534 = vadd.f32 %v1532, %v1533
      %v1535 = vrot.slane %v1160, 4
      %v1536 = vadd.f32 %v1160, %v1535
      %v1537 = vrot.slane %v1536, 2
      %v1538 = vadd.f32 %v1536, %v1537
      %v1539 = vrot.slane %v1538, 1
      %v1540 = vadd.f32 %v1538, %v1539
      %v1541 = vrot.slane %v1162, 4
      %v1542 = vadd.f32 %v1162, %v1541
      %v1543 = vrot.slane %v1542, 2
      %v1544 = vadd.f32 %v1542, %v1543
      %v1545 = vrot.slane %v1544, 1
      %v1546 = vadd.f32 %v1544, %v1545
      %v1547 = vrcp.pop %v1168
      %v1548 = vmul.f32 %v1036, %v1547
      %v1549 = vrcp.pop %v1174
      %v1550 = vmul.f32 %v1038, %v1549
      %v1551 = vrcp.pop %v1180
      %v1552 = vmul.f32 %v1040, %v1551
      %v1553 = vrcp.pop %v1186
      %v1554 = vmul.f32 %v1042, %v1553
      %v1555 = vrcp.pop %v1192
      %v1556 = vmul.f32 %v1044, %v1555
      %v1557 = vrcp.pop %v1198
      %v1558 = vmul.f32 %v1046, %v1557
      %v1559 = vrcp.pop %v1204
      %v1560 = vmul.f32 %v1048, %v1559
      %v1561 = vrcp.pop %v1210
      %v1562 = vmul.f32 %v1050, %v1561
      %v1563 = vrcp.pop %v1216
      %v1564 = vmul.f32 %v1052, %v1563
      %v1565 = vrcp.pop %v1222
      %v1566 = vmul.f32 %v1054, %v1565
      %v1567 = vrcp.pop %v1228
      %v1568 = vmul.f32 %v1056, %v1567
      %v1569 = vrcp.pop %v1234
      %v1570 = vmul.f32 %v1058, %v1569
      %v1571 = vrcp.pop %v1240
      %v1572 = vmul.f32 %v1060, %v1571
      %v1573 = vrcp.pop %v1246
      %v1574 = vmul.f32 %v1062, %v1573
      %v1575 = vrcp.pop %v1252
      %v1576 = vmul.f32 %v1064, %v1575
      %v1577 = vrcp.pop %v1258
      %v1578 = vmul.f32 %v1066, %v1577
      %v1579 = vrcp.pop %v1264
      %v1580 = vmul.f32 %v1068, %v1579
      %v1581 = vrcp.pop %v1270
      %v1582 = vmul.f32 %v1070, %v1581
      %v1583 = vrcp.pop %v1276
      %v1584 = vmul.f32 %v1072, %v1583
      %v1585 = vrcp.pop %v1282
      %v1586 = vmul.f32 %v1074, %v1585
      %v1587 = vrcp.pop %v1288
      %v1588 = vmul.f32 %v1076, %v1587
      %v1589 = vrcp.pop %v1294
      %v1590 = vmul.f32 %v1078, %v1589
      %v1591 = vrcp.pop %v1300
      %v1592 = vmul.f32 %v1080, %v1591
      %v1593 = vrcp.pop %v1306
      %v1594 = vmul.f32 %v1082, %v1593
      %v1595 = vrcp.pop %v1312
      %v1596 = vmul.f32 %v1084, %v1595
      %v1597 = vrcp.pop %v1318
      %v1598 = vmul.f32 %v1086, %v1597
      %v1599 = vrcp.pop %v1324
      %v1600 = vmul.f32 %v1088, %v1599
      %v1601 = vrcp.pop %v1330
      %v1602 = vmul.f32 %v1090, %v1601
      %v1603 = vrcp.pop %v1336
      %v1604 = vmul.f32 %v1092, %v1603
      %v1605 = vrcp.pop %v1342
      %v1606 = vmul.f32 %v1094, %v1605
      %v1607 = vrcp.pop %v1348
      %v1608 = vmul.f32 %v1096, %v1607
      %v1609 = vrcp.pop %v1354
      %v1610 = vmul.f32 %v1098, %v1609
      %v1611 = vrcp.pop %v1360
      %v1612 = vmul.f32 %v1100, %v1611
      %v1613 = vrcp.pop %v1366
      %v1614 = vmul.f32 %v1102, %v1613
      %v1615 = vrcp.pop %v1372
      %v1616 = vmul.f32 %v1104, %v1615
      %v1617 = vrcp.pop %v1378
      %v1618 = vmul.f32 %v1106, %v1617
      %v1619 = vrcp.pop %v1384
      %v1620 = vmul.f32 %v1108, %v1619
      %v1621 = vrcp.pop %v1390
      %v1622 = vmul.f32 %v1110, %v1621
      %v1623 = vrcp.pop %v1396
      %v1624 = vmul.f32 %v1112, %v1623
      %v1625 = vrcp.pop %v1402
      %v1626 = vmul.f32 %v1114, %v1625
      %v1627 = vrcp.pop %v1408
      %v1628 = vmul.f32 %v1116, %v1627
      %v1629 = vrcp.pop %v1414
      %v1630 = vmul.f32 %v1118, %v1629
      %v1631 = vrcp.pop %v1420
      %v1632 = vmul.f32 %v1120, %v1631
      %v1633 = vrcp.pop %v1426
      %v1634 = vmul.f32 %v1122, %v1633
      %v1635 = vrcp.pop %v1432
      %v1636 = vmul.f32 %v1124, %v1635
      %v1637 = vrcp.pop %v1438
      %v1638 = vmul.f32 %v1126, %v1637
      %v1639 = vrcp.pop %v1444
      %v1640 = vmul.f32 %v1128, %v1639
      %v1641 = vrcp.pop %v1450
      %v1642 = vmul.f32 %v1130, %v1641
      %v1643 = vrcp.pop %v1456
      %v1644 = vmul.f32 %v1132, %v1643
      %v1645 = vrcp.pop %v1462
      %v1646 = vmul.f32 %v1134, %v1645
      %v1647 = vrcp.pop %v1468
      %v1648 = vmul.f32 %v1136, %v1647
      %v1649 = vrcp.pop %v1474
      %v1650 = vmul.f32 %v1138, %v1649
      %v1651 = vrcp.pop %v1480
      %v1652 = vmul.f32 %v1140, %v1651
      %v1653 = vrcp.pop %v1486
      %v1654 = vmul.f32 %v1142, %v1653
      %v1655 = vrcp.pop %v1492
      %v1656 = vmul.f32 %v1144, %v1655
      %v1657 = vrcp.pop %v1498
      %v1658 = vmul.f32 %v1146, %v1657
      %v1659 = vrcp.pop %v1504
      %v1660 = vmul.f32 %v1148, %v1659
      %v1661 = vrcp.pop %v1510
      %v1662 = vmul.f32 %v1150, %v1661
      %v1663 = vrcp.pop %v1516
      %v1664 = vmul.f32 %v1152, %v1663
      %v1665 = vrcp.pop %v1522
      %v1666 = vmul.f32 %v1154, %v1665
      %v1667 = vrcp.pop %v1528
      %v1668 = vmul.f32 %v1156, %v1667
      %v1669 = vrcp.pop %v1534
      %v1670 = vmul.f32 %v1158, %v1669
      %v1671 = vrcp.pop %v1540
      %v1672 = vmul.f32 %v1160, %v1671
      %v1673 = vrcp.pop %v1546
      %v1674 = vmul.f32 %v1162, %v1673
      %1675 = vst [vmem:[%s170] sm:$0xff] %v1548
      %1676 = vst [vmem:[%s170 + $0x8] sm:$0xff] %v1550
      %1677 = vst [vmem:[%s170 + $0x10] sm:$0xff] %v1552
      %1678 = vst [vmem:[%s170 + $0x18] sm:$0xff] %v1554
      %1679 = vst [vmem:[%s170 + $0x20] sm:$0xff] %v1556
      %1680 = vst [vmem:[%s170 + $0x28] sm:$0xff] %v1558
      %1681 = vst [vmem:[%s170 + $0x30] sm:$0xff] %v1560
      %1682 = vst [vmem:[%s170 + $0x38] sm:$0xff] %v1562
      %1683 = vst [vmem:[%s170 + $0x40] sm:$0xff] %v1564
      %1684 = vst [vmem:[%s170 + $0x48] sm:$0xff] %v1566
      %1685 = vst [vmem:[%s170 + $0x50] sm:$0xff] %v1568
      %1686 = vst [vmem:[%s170 + $0x58] sm:$0xff] %v1570
      %1687 = vst [vmem:[%s170 + $0x60] sm:$0xff] %v1572
      %1688 = vst [vmem:[%s170 + $0x68] sm:$0xff] %v1574
      %1689 = vst [vmem:[%s170 + $0x70] sm:$0xff] %v1576
      %1690 = vst [vmem:[%s170 + $0x78] sm:$0xff] %v1578
      %1691 = vst [vmem:[%s170 + $0x80] sm:$0xff] %v1580
      %1692 = vst [vmem:[%s170 + $0x88] sm:$0xff] %v1582
      %1693 = vst [vmem:[%s170 + $0x90] sm:$0xff] %v1584
      %1694 = vst [vmem:[%s170 + $0x98] sm:$0xff] %v1586
      %1695 = vst [vmem:[%s170 + $0xa0] sm:$0xff] %v1588
      %1696 = vst [vmem:[%s170 + $0xa8] sm:$0xff] %v1590
      %1697 = vst [vmem:[%s170 + $0xb0] sm:$0xff] %v1592
      %1698 = vst [vmem:[%s170 + $0xb8] sm:$0xff] %v1594
      %1699 = vst [vmem:[%s170 + $0xc0] sm:$0xff] %v1596
      %1700 = vst [vmem:[%s170 + $0xc8] sm:$0xff] %v1598
      %1701 = vst [vmem:[%s170 + $0xd0] sm:$0xff] %v1600
      %1702 = vst [vmem:[%s170 + $0xd8] sm:$0xff] %v1602
      %1703 = vst [vmem:[%s170 + $0xe0] sm:$0xff] %v1604
      %1704 = vst [vmem:[%s170 + $0xe8] sm:$0xff] %v1606
      %1705 = vst [vmem:[%s170 + $0xf0] sm:$0xff] %v1608
      %1706 = vst [vmem:[%s170 + $0xf8] sm:$0xff] %v1610
      %1707 = vst [vmem:[%s170 + $0x100] sm:$0xff] %v1612
      %1708 = vst [vmem:[%s170 + $0x108] sm:$0xff] %v1614
      %1709 = vst [vmem:[%s170 + $0x110] sm:$0xff] %v1616
      %1710 = vst [vmem:[%s170 + $0x118] sm:$0xff] %v1618
      %1711 = vst [vmem:[%s170 + $0x120] sm:$0xff] %v1620
      %1712 = vst [vmem:[%s170 + $0x128] sm:$0xff] %v1622
      %1713 = vst [vmem:[%s170 + $0x130] sm:$0xff] %v1624
      %1714 = vst [vmem:[%s170 + $0x138] sm:$0xff] %v1626
      %1715 = vst [vmem:[%s170 + $0x140] sm:$0xff] %v1628
      %1716 = vst [vmem:[%s170 + $0x148] sm:$0xff] %v1630
      %1717 = vst [vmem:[%s170 + $0x150] sm:$0xff] %v1632
      %1718 = vst [vmem:[%s170 + $0x158] sm:$0xff] %v1634
      %1719 = vst [vmem:[%s170 + $0x160] sm:$0xff] %v1636
      %1720 = vst [vmem:[%s170 + $0x168] sm:$0xff] %v1638
      %1721 = vst [vmem:[%s170 + $0x170] sm:$0xff] %v1640
      %1722 = vst [vmem:[%s170 + $0x178] sm:$0xff] %v1642
      %1723 = vst [vmem:[%s170 + $0x180] sm:$0xff] %v1644
      %1724 = vst [vmem:[%s170 + $0x188] sm:$0xff] %v1646
      %1725 = vst [vmem:[%s170 + $0x190] sm:$0xff] %v1648
      %1726 = vst [vmem:[%s170 + $0x198] sm:$0xff] %v1650
      %1727 = vst [vmem:[%s170 + $0x1a0] sm:$0xff] %v1652
      %1728 = vst [vmem:[%s170 + $0x1a8] sm:$0xff] %v1654
      %1729 = vst [vmem:[%s170 + $0x1b0] sm:$0xff] %v1656
      %1730 = vst [vmem:[%s170 + $0x1b8] sm:$0xff] %v1658
      %1731 = vst [vmem:[%s170 + $0x1c0] sm:$0xff] %v1660
      %1732 = vst [vmem:[%s170 + $0x1c8] sm:$0xff] %v1662
      %1733 = vst [vmem:[%s170 + $0x1d0] sm:$0xff] %v1664
      %1734 = vst [vmem:[%s170 + $0x1d8] sm:$0xff] %v1666
      %1735 = vst [vmem:[%s170 + $0x1e0] sm:$0xff] %v1668
      %1736 = vst [vmem:[%s170 + $0x1e8] sm:$0xff] %v1670
      %1737 = vst [vmem:[%s170 + $0x1f0] sm:$0xff] %v1672
      %1738 = vst [vmem:[%s170 + $0x1f8] sm:$0xff] %v1674
      %p1739 = scmp.lt.s32.totalorder %s14, 1
      %s1740 = scalar_select %p1739, %s14, 1
      %s1741 = smul.addr %s1740, 64
      %s1742 = smul.addr %s1741, 8
      %s1743 = scalar_lea.vmem %s3, %s1742
      // Predicated region
      $region33: #{decoder_forward.5} parent=31 // pred_check
        %p1744 = pneg %p100
      $region34: #{decoder_forward.5} parent=31 // pred_check_branch
        %1746 = sbr.rel (%p1744) target = $region36
      $region35: #{decoder_forward.5} parent=31 // pred_region
        _
      $region36: #{decoder_forward.5} parent=31 // pred_fallthru
        _
    $region32: #{decoder_forward.5} parent=5 // pred_fallthru
      _
    %p1747 = scmp.le.s32.totalorder 2, %s9
    // Predicated region
    $region37: #{decoder_forward.5} parent=5 // pred_check
      %p1748 = pneg %p1747
    $region38: #{decoder_forward.5} parent=5 // pred_check_branch
      %1750 = sbr.rel (%p1748) target = $region40
    $region39: #{decoder_forward.5} parent=5 // pred_region
      %s1751 = ssub.s32 %s9, 2
      // Predicated region
      $region41: #{decoder_forward.5} parent=39 // pred_check
        %p1752 = pneg %p106
      $region42: #{decoder_forward.5} parent=39 // pred_check_branch
        %1754 = sbr.rel (%p1752) target = $region44
      $region43: #{decoder_forward.5} parent=39 // pred_region
        %p1755 = scmp.lt.s32.totalorder %s15, 1
        %s1756 = scalar_select %p1755, %s15, 1
        %s1757 = smul.addr %s1756, 64
        %s1758 = smul.addr %s1757, 8
        %s1759 = scalar_lea.vmem %s3, %s1758
      $region44: #{decoder_forward.5} parent=39 // pred_fallthru
        _
    $region40: #{decoder_forward.5} parent=5 // pred_fallthru
      _
  $region6: #{decoder_forward.5} parent=0 // loop_footer
    %s13 = sadd.s32 1, %s9
  $region7: #{decoder_forward.5} parent=0 // loop_footer_branch
    %8 = sbr.rel target = $region3
  $region8: #{decoder_forward.5} parent=0 // loop_exit
    _

</llo_original>
